<compile_context>
chip_gen: v7x
topology: tpu7x:2x2x1
jax: 0.10.0
libtpu: 0.0.40
codegen_flags: <defaults>
</compile_context>

<pallas_src>
import jax
import jax.numpy as jnp
from jax.experimental import pallas as pl
from jax.experimental.pallas import tpu as pltpu

F_IN = 784           # 1 * 28 * 28
F_PAD = 896          # 784 padded up to a multiple of 128 (clean MXU K)
H1, H2, H3 = 512, 256, 128
OUT_ROWS = 8         # final layer padded from 1 -> 8 output rows (sublane granule)


def _round_up(x, m):
    return (x + m - 1) // m * m


def _choose_tile_b(batch):
    """128-aligned batch tile, capped at 512, with >=2 grid steps whenever batch allows it."""
    b_ceil = _round_up(max(batch, 1), 128)
    if b_ceil <= 128:
        return 128
    # At least 2 steps so the parallel axis can be split across v7x's two TensorCores,
    # tile capped at 512 to amortize per-step pipeline overhead (~0.35 us) per the guide.
    n_steps = max(2, -(-b_ceil // 512))
    return min(512, max(128, _round_up(-(-b_ceil // n_steps), 128)))


def _disc_kernel(x_ref,
                 w1_ref, b1_ref,
                 w2_ref, b2_ref,
                 w3_ref, b3_ref,
                 w4_ref, b4_ref,
                 out_ref):
    """One batch tile, feature-major: 4 bf16 MXU matmuls (f32 acc) + ReLU x3 + sigmoid row."""
    x = x_ref[...]                                                      # (F_PAD, tile_b) bf16

    h1 = jnp.dot(w1_ref[...], x, preferred_element_type=jnp.float32) + b1_ref[...]
    h1 = jnp.maximum(h1, 0.0).astype(jnp.bfloat16)                      # (H1, tile_b)

    h2 = jnp.dot(w2_ref[...], h1, preferred_element_type=jnp.float32) + b2_ref[...]
    h2 = jnp.maximum(h2, 0.0).astype(jnp.bfloat16)                      # (H2, tile_b)

    h3 = jnp.dot(w3_ref[...], h2, preferred_element_type=jnp.float32) + b3_ref[...]
    h3 = jnp.maximum(h3, 0.0).astype(jnp.bfloat16)                      # (H3, tile_b)

    # Final layer padded to 8 output rows; only row 0 carries real weights.
    logits = jnp.dot(w4_ref[...], h3, preferred_element_type=jnp.float32)   # (8, tile_b)
    row = logits[:1, :] + b4_ref[...]                                       # (1, tile_b)
    # sigmoid = 1 / (1 + exp(-x)); exp and approx reciprocal both land on the EUP slot.
    out_ref[...] = pl.reciprocal(1.0 + jnp.exp(-row), approx=True).astype(out_ref.dtype)


@jax.jit
def discriminator_forward(img, kparams):
    """img: (B, 784) f32.  kparams: prepared (bf16, transposed/padded) params."""
    batch, feat = img.shape
    tile_b = _choose_tile_b(batch)
    b_pad = _round_up(batch, tile_b)

    # Pad rows/features, cast to bf16 and transpose to feature-major (F_PAD, b_pad):
    # one fused XLA pass, half the write bytes of the previous f32 pad pass.
    x_t = jnp.pad(img, ((0, b_pad - batch), (0, F_PAD - feat))).astype(jnp.bfloat16).T

    grid = (b_pad // tile_b,)

    def const(shape):
        # Constant block index -> fetched once, stays VMEM-resident across grid steps.
        return pl.BlockSpec(shape, lambda i: (0, 0))

    in_specs = [
        pl.BlockSpec((F_PAD, tile_b), lambda i: (0, i)),   # activations tile (lane = batch)
        const((H1, F_PAD)),    const((H1, 1)),
        const((H2, H1)),       const((H2, 1)),
        const((H3, H2)),       const((H3, 1)),
        const((OUT_ROWS, H3)), const((1, 1)),
    ]
    out_spec = pl.BlockSpec((1, tile_b), lambda i: (0, i))

    w_bytes = sum(int(v.size) * v.dtype.itemsize for v in kparams.values())
    cost = pl.CostEstimate(
        flops=2 * b_pad * (F_PAD * H1 + H1 * H2 + H2 * H3 + H3 * OUT_ROWS),
        transcendentals=b_pad,
        bytes_accessed=w_bytes + b_pad * F_PAD * 2 + b_pad * 4,
    )

    out = pl.pallas_call(
        _disc_kernel,
        out_shape=jax.ShapeDtypeStruct((1, b_pad), jnp.float32),
        grid=grid,
        in_specs=in_specs,
        out_specs=out_spec,
        compiler_params=pltpu.CompilerParams(dimension_semantics=("parallel",)),
        cost_estimate=cost,
    )(x_t,
      kparams["w1"], kparams["b1"],
      kparams["w2"], kparams["b2"],
      kparams["w3"], kparams["b3"],
      kparams["w4"], kparams["b4"])

    # (1, b_pad) -> (batch, 1); only 4 B/row ever leaves / re-enters HBM for the output.
    return out[0, :batch][:, None]


def init_params(key):
    """PyTorch nn.Linear-style init; weights in natural (out, in) layout, f32."""
    sizes = [(F_IN, H1), (H1, H2), (H2, H3), (H3, 1)]
    params = {}
    for i, (fan_in, fan_out) in enumerate(sizes, start=1):
        key, kw, kb = jax.random.split(key, 3)
        bound = 1.0 / jnp.sqrt(fan_in)
        params[f"w{i}"] = jax.random.uniform(
            kw, (fan_out, fan_in), jnp.float32, -bound, bound)
        params[f"b{i}"] = jax.random.uniform(
            kb, (fan_out,), jnp.float32, -bound, bound)
    return params


def prepare_params(params):
    """Host-side, once: pad layer-1 in-dim / layer-4 out-rows, bf16 weights, (H,1) biases."""
    w1 = jnp.pad(params["w1"], ((0, 0), (0, F_PAD - F_IN))).astype(jnp.bfloat16)   # (512, 896)
    w4 = jnp.pad(params["w4"], ((0, OUT_ROWS - 1), (0, 0))).astype(jnp.bfloat16)   # (8, 128)
    return {
        "w1": w1,                               "b1": params["b1"].reshape(H1, 1),
        "w2": params["w2"].astype(jnp.bfloat16), "b2": params["b2"].reshape(H2, 1),
        "w3": params["w3"].astype(jnp.bfloat16), "b3": params["b3"].reshape(H3, 1),
        "w4": w4,                               "b4": params["b4"].reshape(1, 1),
    }


def reference_forward(img, p):
    """Pure-JAX f32 reference matching the PyTorch module semantics."""
    h = jnp.maximum(img @ p["w1"].T + p["b1"], 0.0)
    h = jnp.maximum(h @ p["w2"].T + p["b2"], 0.0)
    h = jnp.maximum(h @ p["w3"].T + p["b3"], 0.0)
    return jax.nn.sigmoid(h @ p["w4"].T + p["b4"])


if __name__ == "__main__":
    key = jax.random.PRNGKey(0)
    key, k_img = jax.random.split(key)

    batch = 2
    img = jax.random.normal(k_img, (batch, F_IN), jnp.float32)
    params = init_params(key)
    kparams = prepare_params(params)

    out = jax.block_until_ready(discriminator_forward(img, kparams))
    ref = reference_forward(img, params)

    assert out.shape == (batch, 1)
    # bf16 weights/activations + approx reciprocal -> slightly looser tolerance than f32.
    assert jnp.allclose(out, ref, atol=2e-2, rtol=2e-2), (out, ref)

    print("KERNEL_OK")
</pallas_src>

<mosaic_0001>
module attributes {stable_mosaic.version = 11 : i64} {
  func.func @_disc_kernel(%arg0: i32, %arg1: memref<896x128xbf16, #tpu.memory_space<vmem>>, %arg2: memref<512x896xbf16, #tpu.memory_space<vmem>>, %arg3: memref<512x1xf32, #tpu.memory_space<vmem>>, %arg4: memref<256x512xbf16, #tpu.memory_space<vmem>>, %arg5: memref<256x1xf32, #tpu.memory_space<vmem>>, %arg6: memref<128x256xbf16, #tpu.memory_space<vmem>>, %arg7: memref<128x1xf32, #tpu.memory_space<vmem>>, %arg8: memref<8x128xbf16, #tpu.memory_space<vmem>>, %arg9: memref<1x1xf32, #tpu.memory_space<vmem>>, %arg10: memref<1x128xf32, #tpu.memory_space<vmem>>) attributes {dimension_semantics = [#tpu.dimension_semantics<parallel>], iteration_bounds = array<i64: 1>, scalar_prefetch = 0 : i64, scratch_operands = 0 : i64, tpu.core_type = #tpu.core_type<tc>, window_params = [{transform_indices = @transform_0, window_bounds = array<i64: 896, 128>}, {pipeline_mode = #tpu.pipeline_mode<synchronous>, transform_indices = @transform_1, window_bounds = array<i64: 512, 896>}, {pipeline_mode = #tpu.pipeline_mode<synchronous>, transform_indices = @transform_2, window_bounds = array<i64: 512, 1>}, {pipeline_mode = #tpu.pipeline_mode<synchronous>, transform_indices = @transform_3, window_bounds = array<i64: 256, 512>}, {pipeline_mode = #tpu.pipeline_mode<synchronous>, transform_indices = @transform_4, window_bounds = array<i64: 256, 1>}, {pipeline_mode = #tpu.pipeline_mode<synchronous>, transform_indices = @transform_5, window_bounds = array<i64: 128, 256>}, {pipeline_mode = #tpu.pipeline_mode<synchronous>, transform_indices = @transform_6, window_bounds = array<i64: 128, 1>}, {pipeline_mode = #tpu.pipeline_mode<synchronous>, transform_indices = @transform_7, window_bounds = array<i64: 8, 128>}, {pipeline_mode = #tpu.pipeline_mode<synchronous>, transform_indices = @transform_8, window_bounds = array<i64: 1, 1>}, {transform_indices = @transform_9, window_bounds = array<i64: 1, 128>}]} {
    %c0 = arith.constant 0 : index
    %c0_0 = arith.constant 0 : index
    %0 = vector.load %arg1[%c0, %c0_0] : memref<896x128xbf16, #tpu.memory_space<vmem>>, vector<896x128xbf16>
    %c0_1 = arith.constant 0 : index
    %c0_2 = arith.constant 0 : index
    %1 = vector.load %arg2[%c0_1, %c0_2] : memref<512x896xbf16, #tpu.memory_space<vmem>>, vector<512x896xbf16>
    %cst = arith.constant dense<0.000000e+00> : vector<512x128xf32>
    %2 = tpu.matmul %1, %0, %cst {dimension_numbers = #tpu.dot_dimension_numbers<[1], [0], [0], [1], [0, 0, 1, 1], [], []>} : vector<512x896xbf16>, vector<896x128xbf16>, vector<512x128xf32> -> vector<512x128xf32>
    %c0_3 = arith.constant 0 : index
    %c0_4 = arith.constant 0 : index
    %3 = vector.load %arg3[%c0_3, %c0_4] : memref<512x1xf32, #tpu.memory_space<vmem>>, vector<512x1xf32>
    %4 = vector.broadcast %3 : vector<512x1xf32> to vector<512x128xf32>
    %5 = arith.addf %2, %4 : vector<512x128xf32>
    %cst_5 = arith.constant 0.000000e+00 : f32
    %6 = vector.broadcast %cst_5 : f32 to vector<512x128xf32>
    %7 = arith.maximumf %5, %6 : vector<512x128xf32>
    %8 = arith.truncf %7 : vector<512x128xf32> to vector<512x128xbf16>
    %c0_6 = arith.constant 0 : index
    %c0_7 = arith.constant 0 : index
    %9 = vector.load %arg4[%c0_6, %c0_7] : memref<256x512xbf16, #tpu.memory_space<vmem>>, vector<256x512xbf16>
    %cst_8 = arith.constant dense<0.000000e+00> : vector<256x128xf32>
    %10 = tpu.matmul %9, %8, %cst_8 {dimension_numbers = #tpu.dot_dimension_numbers<[1], [0], [0], [1], [0, 0, 1, 1], [], []>} : vector<256x512xbf16>, vector<512x128xbf16>, vector<256x128xf32> -> vector<256x128xf32>
    %c0_9 = arith.constant 0 : index
    %c0_10 = arith.constant 0 : index
    %11 = vector.load %arg5[%c0_9, %c0_10] : memref<256x1xf32, #tpu.memory_space<vmem>>, vector<256x1xf32>
    %12 = vector.broadcast %11 : vector<256x1xf32> to vector<256x128xf32>
    %13 = arith.addf %10, %12 : vector<256x128xf32>
    %cst_11 = arith.constant 0.000000e+00 : f32
    %14 = vector.broadcast %cst_11 : f32 to vector<256x128xf32>
    %15 = arith.maximumf %13, %14 : vector<256x128xf32>
    %16 = arith.truncf %15 : vector<256x128xf32> to vector<256x128xbf16>
    %c0_12 = arith.constant 0 : index
    %c0_13 = arith.constant 0 : index
    %17 = vector.load %arg6[%c0_12, %c0_13] : memref<128x256xbf16, #tpu.memory_space<vmem>>, vector<128x256xbf16>
    %cst_14 = arith.constant dense<0.000000e+00> : vector<128x128xf32>
    %18 = tpu.matmul %17, %16, %cst_14 {dimension_numbers = #tpu.dot_dimension_numbers<[1], [0], [0], [1], [0, 0, 1, 1], [], []>} : vector<128x256xbf16>, vector<256x128xbf16>, vector<128x128xf32> -> vector<128x128xf32>
    %c0_15 = arith.constant 0 : index
    %c0_16 = arith.constant 0 : index
    %19 = vector.load %arg7[%c0_15, %c0_16] : memref<128x1xf32, #tpu.memory_space<vmem>>, vector<128x1xf32>
    %20 = vector.broadcast %19 : vector<128x1xf32> to vector<128x128xf32>
    %21 = arith.addf %18, %20 : vector<128x128xf32>
    %cst_17 = arith.constant 0.000000e+00 : f32
    %22 = vector.broadcast %cst_17 : f32 to vector<128x128xf32>
    %23 = arith.maximumf %21, %22 : vector<128x128xf32>
    %24 = arith.truncf %23 : vector<128x128xf32> to vector<128x128xbf16>
    %c0_18 = arith.constant 0 : index
    %c0_19 = arith.constant 0 : index
    %25 = vector.load %arg8[%c0_18, %c0_19] : memref<8x128xbf16, #tpu.memory_space<vmem>>, vector<8x128xbf16>
    %cst_20 = arith.constant dense<0.000000e+00> : vector<8x128xf32>
    %26 = tpu.matmul %25, %24, %cst_20 {dimension_numbers = #tpu.dot_dimension_numbers<[1], [0], [0], [1], [0, 0, 1, 1], [], []>} : vector<8x128xbf16>, vector<128x128xbf16>, vector<8x128xf32> -> vector<8x128xf32>
    %27 = vector.extract_strided_slice %26 {offsets = [0, 0], sizes = [1, 128], strides = [1, 1]} : vector<8x128xf32> to vector<1x128xf32>
    %c0_21 = arith.constant 0 : index
    %c0_22 = arith.constant 0 : index
    %28 = vector.load %arg9[%c0_21, %c0_22] : memref<1x1xf32, #tpu.memory_space<vmem>>, vector<1x1xf32>
    %29 = vector.broadcast %28 : vector<1x1xf32> to vector<1x128xf32>
    %30 = arith.addf %27, %29 : vector<1x128xf32>
    %cst_23 = arith.constant 0.000000e+00 : f32
    %31 = vector.broadcast %cst_23 : f32 to vector<1x128xf32>
    %32 = arith.subf %31, %30 : vector<1x128xf32>
    %33 = math.exp %32 : vector<1x128xf32>
    %cst_24 = arith.constant 1.000000e+00 : f32
    %34 = vector.broadcast %cst_24 : f32 to vector<1x128xf32>
    %35 = arith.addf %34, %33 : vector<1x128xf32>
    %36 = tpu.reciprocal %35 {approx = true} : vector<1x128xf32> -> vector<1x128xf32>
    %c0_25 = arith.constant 0 : index
    %c0_26 = arith.constant 0 : index
    %37 = vector.load %arg10[%c0_25, %c0_26] : memref<1x128xf32, #tpu.memory_space<vmem>>, vector<1x128xf32>
    tpu.vector_store %arg10[%c0_25, %c0_26], %36 {strides = array<i32>} : memref<1x128xf32, #tpu.memory_space<vmem>>, vector<1x128xf32>,
    return
  }
  func.func @transform_0(%arg0: i32) -> (i32, i32) {
    %c0_i32 = arith.constant 0 : i32
    %c0_i32_0 = arith.constant 0 : i32
    return %c0_i32, %arg0 : i32, i32
  }
  func.func @transform_1(%arg0: i32) -> (i32, i32) {
    %c0_i32 = arith.constant 0 : i32
    %c0_i32_0 = arith.constant 0 : i32
    %c0_i32_1 = arith.constant 0 : i32
    return %c0_i32, %c0_i32_0 : i32, i32
  }
  func.func @transform_2(%arg0: i32) -> (i32, i32) {
    %c0_i32 = arith.constant 0 : i32
    %c0_i32_0 = arith.constant 0 : i32
    %c0_i32_1 = arith.constant 0 : i32
    return %c0_i32, %c0_i32_0 : i32, i32
  }
  func.func @transform_3(%arg0: i32) -> (i32, i32) {
    %c0_i32 = arith.constant 0 : i32
    %c0_i32_0 = arith.constant 0 : i32
    %c0_i32_1 = arith.constant 0 : i32
    return %c0_i32, %c0_i32_0 : i32, i32
  }
  func.func @transform_4(%arg0: i32) -> (i32, i32) {
    %c0_i32 = arith.constant 0 : i32
    %c0_i32_0 = arith.constant 0 : i32
    %c0_i32_1 = arith.constant 0 : i32
    return %c0_i32, %c0_i32_0 : i32, i32
  }
  func.func @transform_5(%arg0: i32) -> (i32, i32) {
    %c0_i32 = arith.constant 0 : i32
    %c0_i32_0 = arith.constant 0 : i32
    %c0_i32_1 = arith.constant 0 : i32
    return %c0_i32, %c0_i32_0 : i32, i32
  }
  func.func @transform_6(%arg0: i32) -> (i32, i32) {
    %c0_i32 = arith.constant 0 : i32
    %c0_i32_0 = arith.constant 0 : i32
    %c0_i32_1 = arith.constant 0 : i32
    return %c0_i32, %c0_i32_0 : i32, i32
  }
  func.func @transform_7(%arg0: i32) -> (i32, i32) {
    %c0_i32 = arith.constant 0 : i32
    %c0_i32_0 = arith.constant 0 : i32
    %c0_i32_1 = arith.constant 0 : i32
    return %c0_i32, %c0_i32_0 : i32, i32
  }
  func.func @transform_8(%arg0: i32) -> (i32, i32) {
    %c0_i32 = arith.constant 0 : i32
    %c0_i32_0 = arith.constant 0 : i32
    %c0_i32_1 = arith.constant 0 : i32
    return %c0_i32, %c0_i32_0 : i32, i32
  }
  func.func @transform_9(%arg0: i32) -> (i32, i32) {
    %c0_i32 = arith.constant 0 : i32
    %c0_i32_0 = arith.constant 0 : i32
    return %c0_i32, %arg0 : i32, i32
  }
}

</mosaic_0001>

<llo_original>
// kernel: discriminator_forward.1
$region0: #{discriminator_forward.1}
  #allocation0 [shape = 'u32[]', space=smem, size = 0x4, offset = 0x4, fixed_abs, tag = 'smem constant byte address 0x4 - core index']
  #allocation1 [shape = 'u32[144,128]{1,0:T(1,128)}', space=vmem, size = 0x12000, scoped, tag = 'internal scratch']
  #allocation2 [shape = 'f32[1,1]{1,0:T(1,128)S(1)}', space=vmem, size = 0x200, scoped, tag = 'scoped memory for discriminator_forward.1']
  %s0 = inlined_call_operand.vmem [shape: bf16[896,128], index: 0, kind: input, shape index: {}]
  %s1 = inlined_call_operand.vmem [shape: bf16[512,896], index: 1, kind: input, shape index: {}]
  %s2 = inlined_call_operand.vmem [shape: f32[512,1], index: 2, kind: input, shape index: {}]
  %s3 = inlined_call_operand.hbm [shape: bf16[256,512], index: 3, kind: input, shape index: {}]
  %s4 = inlined_call_operand.vmem [shape: f32[256,1], index: 4, kind: input, shape index: {}]
  %s5 = inlined_call_operand.vmem [shape: bf16[128,256], index: 5, kind: input, shape index: {}]
  %s6 = inlined_call_operand.vmem [shape: f32[128,1], index: 6, kind: input, shape index: {}]
  %s7 = inlined_call_operand.vmem [shape: bf16[8,128], index: 7, kind: input, shape index: {}]
  %s8 = inlined_call_operand.<no memory space> [shape: f32[1,1], index: 8, kind: input, shape index: {}]
  %s9 = inlined_call_operand.vmem [shape: f32[1,128], index: 9, kind: output, shape index: {}]
  %s10 = sld [smem:[#allocation0]]
  $region50: #{discriminator_forward.1} parent=0
    _
  %s12 = ssub.s32 1, %s10
  %s13 = scalar_select 0, %s12, %s10
  %v14 = vstv %s8
  %15 = vst [vmem:[#allocation2] sm:$0x1] %v14
  $region1: #{discriminator_forward.1} parent=0
    #allocation3 [shape = 'u8[262144]{0}', space=vmem, size = 0x40000, scoped, tag = 'input window, operand 3, single buffered']
    #allocation4 [shape = 's32[1]{0}', space=sflag, size = 0x4, scoped, tag = 'scoped memory for discriminator_forward.1']
    %16 = vsyncpa [#allocation4], 0
    // Predicated region
    $region2: #{discriminator_forward.1} parent=1 // pred_check
      _
    $region3: #{discriminator_forward.1} parent=1 // pred_check_branch
      %18 = sbr.rel (0) target = $region5
    $region4: #{discriminator_forward.1} parent=1 // pred_region
      _
    $region5: #{discriminator_forward.1} parent=1 // pred_fallthru
      _
    // Predicated region
    $region6: #{discriminator_forward.1} parent=1 // pred_check
      _
    $region7: #{discriminator_forward.1} parent=1 // pred_check_branch
      %20 = sbr.rel (0) target = $region9
    $region8: #{discriminator_forward.1} parent=1 // pred_region
      _
    $region9: #{discriminator_forward.1} parent=1 // pred_fallthru
      _
    // Predicated region
    $region10: #{discriminator_forward.1} parent=1 // pred_check
      _
    $region11: #{discriminator_forward.1} parent=1 // pred_check_branch
      %22 = sbr.rel (0) target = $region13
    $region12: #{discriminator_forward.1} parent=1 // pred_region
      _
    $region13: #{discriminator_forward.1} parent=1 // pred_fallthru
      _
    // Predicated region
    $region14: #{discriminator_forward.1} parent=1 // pred_check
      _
    $region15: #{discriminator_forward.1} parent=1 // pred_check_branch
      %24 = sbr.rel (0) target = $region17
    $region16: #{discriminator_forward.1} parent=1 // pred_region
      %s26 = ssub.s32 8192, 8192
      %27 = vsyncadd [#allocation4], %s26
      %s28 = sshll.u32 [#allocation3], 4
      %s29 = int_to_ptr.vmem [resolvable:$true] %s28
      %34 = dma.hbm_to_vmem [thread:$0]  %s3, 8192, %s29, [#allocation4], 256, 256, 16
    $region17: #{discriminator_forward.1} parent=1 // pred_fallthru
      _
    // Predicated region
    $region18: #{discriminator_forward.1} parent=1 // pred_check
      _
    $region19: #{discriminator_forward.1} parent=1 // pred_check_branch
      %36 = sbr.rel (0) target = $region21
    $region20: #{discriminator_forward.1} parent=1 // pred_region
      _
    $region21: #{discriminator_forward.1} parent=1 // pred_fallthru
      _
    // Predicated region
    $region22: #{discriminator_forward.1} parent=1 // pred_check
      _
    $region23: #{discriminator_forward.1} parent=1 // pred_check_branch
      %38 = sbr.rel (0) target = $region25
    $region24: #{discriminator_forward.1} parent=1 // pred_region
      _
    $region25: #{discriminator_forward.1} parent=1 // pred_fallthru
      _
    // Predicated region
    $region26: #{discriminator_forward.1} parent=1 // pred_check
      _
    $region27: #{discriminator_forward.1} parent=1 // pred_check_branch
      %40 = sbr.rel (0) target = $region29
    $region28: #{discriminator_forward.1} parent=1 // pred_region
      _
    $region29: #{discriminator_forward.1} parent=1 // pred_fallthru
      _
    // Predicated region
    $region30: #{discriminator_forward.1} parent=1 // pred_check
      _
    $region31: #{discriminator_forward.1} parent=1 // pred_check_branch
      %42 = sbr.rel (0) target = $region33
    $region32: #{discriminator_forward.1} parent=1 // pred_region
      _
    $region33: #{discriminator_forward.1} parent=1 // pred_fallthru
      _
    // Predicated region
    $region34: #{discriminator_forward.1} parent=1 // pred_check
      _
    $region35: #{discriminator_forward.1} parent=1 // pred_check_branch
      %44 = sbr.rel (0) target = $region37
    $region36: #{discriminator_forward.1} parent=1 // pred_region
      _
    $region37: #{discriminator_forward.1} parent=1 // pred_fallthru
      _
    // Predicated region
    $region38: #{discriminator_forward.1} parent=1 // pred_check
      _
    $region39: #{discriminator_forward.1} parent=1 // pred_check_branch
      %46 = sbr.rel (0) target = $region41
    $region40: #{discriminator_forward.1} parent=1 // pred_region
      %47 = dma.done [#allocation4], 8192
    $region41: #{discriminator_forward.1} parent=1 // pred_fallthru
      _
    %v49 = vld [vmem:[%s0] sm:$0xf]
    %v50 = vld [vmem:[%s0 + $0x4] sm:$0xf]
    %v51 = vld [vmem:[%s0 + $0x8] sm:$0xf]
    %v52 = vld [vmem:[%s0 + $0xc] sm:$0xf]
    %v53 = vld [vmem:[%s0 + $0x10] sm:$0xf]
    %v54 = vld [vmem:[%s0 + $0x14] sm:$0xf]
    %v55 = vld [vmem:[%s0 + $0x18] sm:$0xf]
    %v56 = vld [vmem:[%s0 + $0x1c] sm:$0xf]
    %v57 = vld [vmem:[%s0 + $0x20] sm:$0xf]
    %v58 = vld [vmem:[%s0 + $0x24] sm:$0xf]
    %v59 = vld [vmem:[%s0 + $0x28] sm:$0xf]
    %v60 = vld [vmem:[%s0 + $0x2c] sm:$0xf]
    %v61 = vld [vmem:[%s0 + $0x30] sm:$0xf]
    %v62 = vld [vmem:[%s0 + $0x34] sm:$0xf]
    %v63 = vld [vmem:[%s0 + $0x38] sm:$0xf]
    %v64 = vld [vmem:[%s0 + $0x3c] sm:$0xf]
    %v65 = vld [vmem:[%s0 + $0x40] sm:$0xf]
    %v66 = vld [vmem:[%s0 + $0x44] sm:$0xf]
    %v67 = vld [vmem:[%s0 + $0x48] sm:$0xf]
    %v68 = vld [vmem:[%s0 + $0x4c] sm:$0xf]
    %v69 = vld [vmem:[%s0 + $0x50] sm:$0xf]
    %v70 = vld [vmem:[%s0 + $0x54] sm:$0xf]
    %v71 = vld [vmem:[%s0 + $0x58] sm:$0xf]
    %v72 = vld [vmem:[%s0 + $0x5c] sm:$0xf]
    %v73 = vld [vmem:[%s0 + $0x60] sm:$0xf]
    %v74 = vld [vmem:[%s0 + $0x64] sm:$0xf]
    %v75 = vld [vmem:[%s0 + $0x68] sm:$0xf]
    %v76 = vld [vmem:[%s0 + $0x6c] sm:$0xf]
    %v77 = vld [vmem:[%s0 + $0x70] sm:$0xf]
    %v78 = vld [vmem:[%s0 + $0x74] sm:$0xf]
    %v79 = vld [vmem:[%s0 + $0x78] sm:$0xf]
    %v80 = vld [vmem:[%s0 + $0x7c] sm:$0xf]
    %v81 = vld [vmem:[%s0 + $0x80] sm:$0xf]
    %v82 = vld [vmem:[%s0 + $0x84] sm:$0xf]
    %v83 = vld [vmem:[%s0 + $0x88] sm:$0xf]
    %v84 = vld [vmem:[%s0 + $0x8c] sm:$0xf]
    %v85 = vld [vmem:[%s0 + $0x90] sm:$0xf]
    %v86 = vld [vmem:[%s0 + $0x94] sm:$0xf]
    %v87 = vld [vmem:[%s0 + $0x98] sm:$0xf]
    %v88 = vld [vmem:[%s0 + $0x9c] sm:$0xf]
    %v89 = vld [vmem:[%s0 + $0xa0] sm:$0xf]
    %v90 = vld [vmem:[%s0 + $0xa4] sm:$0xf]
    %v91 = vld [vmem:[%s0 + $0xa8] sm:$0xf]
    %v92 = vld [vmem:[%s0 + $0xac] sm:$0xf]
    %v93 = vld [vmem:[%s0 + $0xb0] sm:$0xf]
    %v94 = vld [vmem:[%s0 + $0xb4] sm:$0xf]
    %v95 = vld [vmem:[%s0 + $0xb8] sm:$0xf]
    %v96 = vld [vmem:[%s0 + $0xbc] sm:$0xf]
    %v97 = vld [vmem:[%s0 + $0xc0] sm:$0xf]
    %v98 = vld [vmem:[%s0 + $0xc4] sm:$0xf]
    %v99 = vld [vmem:[%s0 + $0xc8] sm:$0xf]
    %v100 = vld [vmem:[%s0 + $0xcc] sm:$0xf]
    %v101 = vld [vmem:[%s0 + $0xd0] sm:$0xf]
    %v102 = vld [vmem:[%s0 + $0xd4] sm:$0xf]
    %v103 = vld [vmem:[%s0 + $0xd8] sm:$0xf]
    %v104 = vld [vmem:[%s0 + $0xdc] sm:$0xf]
    %v105 = vld [vmem:[%s0 + $0xe0] sm:$0xf]
    %v106 = vld [vmem:[%s0 + $0xe4] sm:$0xf]
    %v107 = vld [vmem:[%s0 + $0xe8] sm:$0xf]
    %v108 = vld [vmem:[%s0 + $0xec] sm:$0xf]
    %v109 = vld [vmem:[%s0 + $0xf0] sm:$0xf]
    %v110 = vld [vmem:[%s0 + $0xf4] sm:$0xf]
    %v111 = vld [vmem:[%s0 + $0xf8] sm:$0xf]
    %v112 = vld [vmem:[%s0 + $0xfc] sm:$0xf]
    %v113 = vld [vmem:[%s0 + $0x100] sm:$0xf]
    %v114 = vld [vmem:[%s0 + $0x104] sm:$0xf]
    %v115 = vld [vmem:[%s0 + $0x108] sm:$0xf]
    %v116 = vld [vmem:[%s0 + $0x10c] sm:$0xf]
    %v117 = vld [vmem:[%s0 + $0x110] sm:$0xf]
    %v118 = vld [vmem:[%s0 + $0x114] sm:$0xf]
    %v119 = vld [vmem:[%s0 + $0x118] sm:$0xf]
    %v120 = vld [vmem:[%s0 + $0x11c] sm:$0xf]
    %v121 = vld [vmem:[%s0 + $0x120] sm:$0xf]
    %v122 = vld [vmem:[%s0 + $0x124] sm:$0xf]
    %v123 = vld [vmem:[%s0 + $0x128] sm:$0xf]
    %v124 = vld [vmem:[%s0 + $0x12c] sm:$0xf]
    %v125 = vld [vmem:[%s0 + $0x130] sm:$0xf]
    %v126 = vld [vmem:[%s0 + $0x134] sm:$0xf]
    %v127 = vld [vmem:[%s0 + $0x138] sm:$0xf]
    %v128 = vld [vmem:[%s0 + $0x13c] sm:$0xf]
    %v129 = vld [vmem:[%s0 + $0x140] sm:$0xf]
    %v130 = vld [vmem:[%s0 + $0x144] sm:$0xf]
    %v131 = vld [vmem:[%s0 + $0x148] sm:$0xf]
    %v132 = vld [vmem:[%s0 + $0x14c] sm:$0xf]
    %v133 = vld [vmem:[%s0 + $0x150] sm:$0xf]
    %v134 = vld [vmem:[%s0 + $0x154] sm:$0xf]
    %v135 = vld [vmem:[%s0 + $0x158] sm:$0xf]
    %v136 = vld [vmem:[%s0 + $0x15c] sm:$0xf]
    %v137 = vld [vmem:[%s0 + $0x160] sm:$0xf]
    %v138 = vld [vmem:[%s0 + $0x164] sm:$0xf]
    %v139 = vld [vmem:[%s0 + $0x168] sm:$0xf]
    %v140 = vld [vmem:[%s0 + $0x16c] sm:$0xf]
    %v141 = vld [vmem:[%s0 + $0x170] sm:$0xf]
    %v142 = vld [vmem:[%s0 + $0x174] sm:$0xf]
    %v143 = vld [vmem:[%s0 + $0x178] sm:$0xf]
    %v144 = vld [vmem:[%s0 + $0x17c] sm:$0xf]
    %v145 = vld [vmem:[%s0 + $0x180] sm:$0xf]
    %v146 = vld [vmem:[%s0 + $0x184] sm:$0xf]
    %v147 = vld [vmem:[%s0 + $0x188] sm:$0xf]
    %v148 = vld [vmem:[%s0 + $0x18c] sm:$0xf]
    %v149 = vld [vmem:[%s0 + $0x190] sm:$0xf]
    %v150 = vld [vmem:[%s0 + $0x194] sm:$0xf]
    %v151 = vld [vmem:[%s0 + $0x198] sm:$0xf]
    %v152 = vld [vmem:[%s0 + $0x19c] sm:$0xf]
    %v153 = vld [vmem:[%s0 + $0x1a0] sm:$0xf]
    %v154 = vld [vmem:[%s0 + $0x1a4] sm:$0xf]
    %v155 = vld [vmem:[%s0 + $0x1a8] sm:$0xf]
    %v156 = vld [vmem:[%s0 + $0x1ac] sm:$0xf]
    %v157 = vld [vmem:[%s0 + $0x1b0] sm:$0xf]
    %v158 = vld [vmem:[%s0 + $0x1b4] sm:$0xf]
    %v159 = vld [vmem:[%s0 + $0x1b8] sm:$0xf]
    %v160 = vld [vmem:[%s0 + $0x1bc] sm:$0xf]
    %v161 = vld [vmem:[%s1] sm:$0xff]
    %v162 = vld [vmem:[%s1 + $0x8] sm:$0xff]
    %v163 = vld [vmem:[%s1 + $0x10] sm:$0xff]
    %v164 = vld [vmem:[%s1 + $0x18] sm:$0xf]
    %v165 = vld [vmem:[%s1 + $0x1c] sm:$0xff]
    %v166 = vld [vmem:[%s1 + $0x24] sm:$0xff]
    %v167 = vld [vmem:[%s1 + $0x2c] sm:$0xff]
    %v168 = vld [vmem:[%s1 + $0x34] sm:$0xf]
    %v169 = vld [vmem:[%s1 + $0x38] sm:$0xff]
    %v170 = vld [vmem:[%s1 + $0x40] sm:$0xff]
    %v171 = vld [vmem:[%s1 + $0x48] sm:$0xff]
    %v172 = vld [vmem:[%s1 + $0x50] sm:$0xf]
    %v173 = vld [vmem:[%s1 + $0x54] sm:$0xff]
    %v174 = vld [vmem:[%s1 + $0x5c] sm:$0xff]
    %v175 = vld [vmem:[%s1 + $0x64] sm:$0xff]
    %v176 = vld [vmem:[%s1 + $0x6c] sm:$0xf]
    %v177 = vld [vmem:[%s1 + $0x70] sm:$0xff]
    %v178 = vld [vmem:[%s1 + $0x78] sm:$0xff]
    %v179 = vld [vmem:[%s1 + $0x80] sm:$0xff]
    %v180 = vld [vmem:[%s1 + $0x88] sm:$0xf]
    %v181 = vld [vmem:[%s1 + $0x8c] sm:$0xff]
    %v182 = vld [vmem:[%s1 + $0x94] sm:$0xff]
    %v183 = vld [vmem:[%s1 + $0x9c] sm:$0xff]
    %v184 = vld [vmem:[%s1 + $0xa4] sm:$0xf]
    %v185 = vld [vmem:[%s1 + $0xa8] sm:$0xff]
    %v186 = vld [vmem:[%s1 + $0xb0] sm:$0xff]
    %v187 = vld [vmem:[%s1 + $0xb8] sm:$0xff]
    %v188 = vld [vmem:[%s1 + $0xc0] sm:$0xf]
    %v189 = vld [vmem:[%s1 + $0xc4] sm:$0xff]
    %v190 = vld [vmem:[%s1 + $0xcc] sm:$0xff]
    %v191 = vld [vmem:[%s1 + $0xd4] sm:$0xff]
    %v192 = vld [vmem:[%s1 + $0xdc] sm:$0xf]
    %v193 = vld [vmem:[%s1 + $0xe0] sm:$0xff]
    %v194 = vld [vmem:[%s1 + $0xe8] sm:$0xff]
    %v195 = vld [vmem:[%s1 + $0xf0] sm:$0xff]
    %v196 = vld [vmem:[%s1 + $0xf8] sm:$0xf]
    %v197 = vld [vmem:[%s1 + $0xfc] sm:$0xff]
    %v198 = vld [vmem:[%s1 + $0x104] sm:$0xff]
    %v199 = vld [vmem:[%s1 + $0x10c] sm:$0xff]
    %v200 = vld [vmem:[%s1 + $0x114] sm:$0xf]
    %v201 = vld [vmem:[%s1 + $0x118] sm:$0xff]
    %v202 = vld [vmem:[%s1 + $0x120] sm:$0xff]
    %v203 = vld [vmem:[%s1 + $0x128] sm:$0xff]
    %v204 = vld [vmem:[%s1 + $0x130] sm:$0xf]
    %v205 = vld [vmem:[%s1 + $0x134] sm:$0xff]
    %v206 = vld [vmem:[%s1 + $0x13c] sm:$0xff]
    %v207 = vld [vmem:[%s1 + $0x144] sm:$0xff]
    %v208 = vld [vmem:[%s1 + $0x14c] sm:$0xf]
    %v209 = vld [vmem:[%s1 + $0x150] sm:$0xff]
    %v210 = vld [vmem:[%s1 + $0x158] sm:$0xff]
    %v211 = vld [vmem:[%s1 + $0x160] sm:$0xff]
    %v212 = vld [vmem:[%s1 + $0x168] sm:$0xf]
    %v213 = vld [vmem:[%s1 + $0x16c] sm:$0xff]
    %v214 = vld [vmem:[%s1 + $0x174] sm:$0xff]
    %v215 = vld [vmem:[%s1 + $0x17c] sm:$0xff]
    %v216 = vld [vmem:[%s1 + $0x184] sm:$0xf]
    %v217 = vld [vmem:[%s1 + $0x188] sm:$0xff]
    %v218 = vld [vmem:[%s1 + $0x190] sm:$0xff]
    %v219 = vld [vmem:[%s1 + $0x198] sm:$0xff]
    %v220 = vld [vmem:[%s1 + $0x1a0] sm:$0xf]
    %v221 = vld [vmem:[%s1 + $0x1a4] sm:$0xff]
    %v222 = vld [vmem:[%s1 + $0x1ac] sm:$0xff]
    %v223 = vld [vmem:[%s1 + $0x1b4] sm:$0xff]
    %v224 = vld [vmem:[%s1 + $0x1bc] sm:$0xf]
    %v225 = vld [vmem:[%s1 + $0x1c0] sm:$0xff]
    %v226 = vld [vmem:[%s1 + $0x1c8] sm:$0xff]
    %v227 = vld [vmem:[%s1 + $0x1d0] sm:$0xff]
    %v228 = vld [vmem:[%s1 + $0x1d8] sm:$0xf]
    %v229 = vld [vmem:[%s1 + $0x1dc] sm:$0xff]
    %v230 = vld [vmem:[%s1 + $0x1e4] sm:$0xff]
    %v231 = vld [vmem:[%s1 + $0x1ec] sm:$0xff]
    %v232 = vld [vmem:[%s1 + $0x1f4] sm:$0xf]
    %v233 = vld [vmem:[%s1 + $0x1f8] sm:$0xff]
    %v234 = vld [vmem:[%s1 + $0x200] sm:$0xff]
    %v235 = vld [vmem:[%s1 + $0x208] sm:$0xff]
    %v236 = vld [vmem:[%s1 + $0x210] sm:$0xf]
    %v237 = vld [vmem:[%s1 + $0x214] sm:$0xff]
    %v238 = vld [vmem:[%s1 + $0x21c] sm:$0xff]
    %v239 = vld [vmem:[%s1 + $0x224] sm:$0xff]
    %v240 = vld [vmem:[%s1 + $0x22c] sm:$0xf]
    %v241 = vld [vmem:[%s1 + $0x230] sm:$0xff]
    %v242 = vld [vmem:[%s1 + $0x238] sm:$0xff]
    %v243 = vld [vmem:[%s1 + $0x240] sm:$0xff]
    %v244 = vld [vmem:[%s1 + $0x248] sm:$0xf]
    %v245 = vld [vmem:[%s1 + $0x24c] sm:$0xff]
    %v246 = vld [vmem:[%s1 + $0x254] sm:$0xff]
    %v247 = vld [vmem:[%s1 + $0x25c] sm:$0xff]
    %v248 = vld [vmem:[%s1 + $0x264] sm:$0xf]
    %v249 = vld [vmem:[%s1 + $0x268] sm:$0xff]
    %v250 = vld [vmem:[%s1 + $0x270] sm:$0xff]
    %v251 = vld [vmem:[%s1 + $0x278] sm:$0xff]
    %v252 = vld [vmem:[%s1 + $0x280] sm:$0xf]
    %v253 = vld [vmem:[%s1 + $0x284] sm:$0xff]
    %v254 = vld [vmem:[%s1 + $0x28c] sm:$0xff]
    %v255 = vld [vmem:[%s1 + $0x294] sm:$0xff]
    %v256 = vld [vmem:[%s1 + $0x29c] sm:$0xf]
    %v257 = vld [vmem:[%s1 + $0x2a0] sm:$0xff]
    %v258 = vld [vmem:[%s1 + $0x2a8] sm:$0xff]
    %v259 = vld [vmem:[%s1 + $0x2b0] sm:$0xff]
    %v260 = vld [vmem:[%s1 + $0x2b8] sm:$0xf]
    %v261 = vld [vmem:[%s1 + $0x2bc] sm:$0xff]
    %v262 = vld [vmem:[%s1 + $0x2c4] sm:$0xff]
    %v263 = vld [vmem:[%s1 + $0x2cc] sm:$0xff]
    %v264 = vld [vmem:[%s1 + $0x2d4] sm:$0xf]
    %v265 = vld [vmem:[%s1 + $0x2d8] sm:$0xff]
    %v266 = vld [vmem:[%s1 + $0x2e0] sm:$0xff]
    %v267 = vld [vmem:[%s1 + $0x2e8] sm:$0xff]
    %v268 = vld [vmem:[%s1 + $0x2f0] sm:$0xf]
    %v269 = vld [vmem:[%s1 + $0x2f4] sm:$0xff]
    %v270 = vld [vmem:[%s1 + $0x2fc] sm:$0xff]
    %v271 = vld [vmem:[%s1 + $0x304] sm:$0xff]
    %v272 = vld [vmem:[%s1 + $0x30c] sm:$0xf]
    %v273 = vld [vmem:[%s1 + $0x310] sm:$0xff]
    %v274 = vld [vmem:[%s1 + $0x318] sm:$0xff]
    %v275 = vld [vmem:[%s1 + $0x320] sm:$0xff]
    %v276 = vld [vmem:[%s1 + $0x328] sm:$0xf]
    %v277 = vld [vmem:[%s1 + $0x32c] sm:$0xff]
    %v278 = vld [vmem:[%s1 + $0x334] sm:$0xff]
    %v279 = vld [vmem:[%s1 + $0x33c] sm:$0xff]
    %v280 = vld [vmem:[%s1 + $0x344] sm:$0xf]
    %v281 = vld [vmem:[%s1 + $0x348] sm:$0xff]
    %v282 = vld [vmem:[%s1 + $0x350] sm:$0xff]
    %v283 = vld [vmem:[%s1 + $0x358] sm:$0xff]
    %v284 = vld [vmem:[%s1 + $0x360] sm:$0xf]
    %v285 = vld [vmem:[%s1 + $0x364] sm:$0xff]
    %v286 = vld [vmem:[%s1 + $0x36c] sm:$0xff]
    %v287 = vld [vmem:[%s1 + $0x374] sm:$0xff]
    %v288 = vld [vmem:[%s1 + $0x37c] sm:$0xf]
    %v289 = vld [vmem:[%s1 + $0x380] sm:$0xff]
    %v290 = vld [vmem:[%s1 + $0x388] sm:$0xff]
    %v291 = vld [vmem:[%s1 + $0x390] sm:$0xff]
    %v292 = vld [vmem:[%s1 + $0x398] sm:$0xf]
    %v293 = vld [vmem:[%s1 + $0x39c] sm:$0xff]
    %v294 = vld [vmem:[%s1 + $0x3a4] sm:$0xff]
    %v295 = vld [vmem:[%s1 + $0x3ac] sm:$0xff]
    %v296 = vld [vmem:[%s1 + $0x3b4] sm:$0xf]
    %v297 = vld [vmem:[%s1 + $0x3b8] sm:$0xff]
    %v298 = vld [vmem:[%s1 + $0x3c0] sm:$0xff]
    %v299 = vld [vmem:[%s1 + $0x3c8] sm:$0xff]
    %v300 = vld [vmem:[%s1 + $0x3d0] sm:$0xf]
    %v301 = vld [vmem:[%s1 + $0x3d4] sm:$0xff]
    %v302 = vld [vmem:[%s1 + $0x3dc] sm:$0xff]
    %v303 = vld [vmem:[%s1 + $0x3e4] sm:$0xff]
    %v304 = vld [vmem:[%s1 + $0x3ec] sm:$0xf]
    %v305 = vld [vmem:[%s1 + $0x3f0] sm:$0xff]
    %v306 = vld [vmem:[%s1 + $0x3f8] sm:$0xff]
    %v307 = vld [vmem:[%s1 + $0x400] sm:$0xff]
    %v308 = vld [vmem:[%s1 + $0x408] sm:$0xf]
    %v309 = vld [vmem:[%s1 + $0x40c] sm:$0xff]
    %v310 = vld [vmem:[%s1 + $0x414] sm:$0xff]
    %v311 = vld [vmem:[%s1 + $0x41c] sm:$0xff]
    %v312 = vld [vmem:[%s1 + $0x424] sm:$0xf]
    %v313 = vld [vmem:[%s1 + $0x428] sm:$0xff]
    %v314 = vld [vmem:[%s1 + $0x430] sm:$0xff]
    %v315 = vld [vmem:[%s1 + $0x438] sm:$0xff]
    %v316 = vld [vmem:[%s1 + $0x440] sm:$0xf]
    %v317 = vld [vmem:[%s1 + $0x444] sm:$0xff]
    %v318 = vld [vmem:[%s1 + $0x44c] sm:$0xff]
    %v319 = vld [vmem:[%s1 + $0x454] sm:$0xff]
    %v320 = vld [vmem:[%s1 + $0x45c] sm:$0xf]
    %v321 = vld [vmem:[%s1 + $0x460] sm:$0xff]
    %v322 = vld [vmem:[%s1 + $0x468] sm:$0xff]
    %v323 = vld [vmem:[%s1 + $0x470] sm:$0xff]
    %v324 = vld [vmem:[%s1 + $0x478] sm:$0xf]
    %v325 = vld [vmem:[%s1 + $0x47c] sm:$0xff]
    %v326 = vld [vmem:[%s1 + $0x484] sm:$0xff]
    %v327 = vld [vmem:[%s1 + $0x48c] sm:$0xff]
    %v328 = vld [vmem:[%s1 + $0x494] sm:$0xf]
    %v329 = vld [vmem:[%s1 + $0x498] sm:$0xff]
    %v330 = vld [vmem:[%s1 + $0x4a0] sm:$0xff]
    %v331 = vld [vmem:[%s1 + $0x4a8] sm:$0xff]
    %v332 = vld [vmem:[%s1 + $0x4b0] sm:$0xf]
    %v333 = vld [vmem:[%s1 + $0x4b4] sm:$0xff]
    %v334 = vld [vmem:[%s1 + $0x4bc] sm:$0xff]
    %v335 = vld [vmem:[%s1 + $0x4c4] sm:$0xff]
    %v336 = vld [vmem:[%s1 + $0x4cc] sm:$0xf]
    %v337 = vld [vmem:[%s1 + $0x4d0] sm:$0xff]
    %v338 = vld [vmem:[%s1 + $0x4d8] sm:$0xff]
    %v339 = vld [vmem:[%s1 + $0x4e0] sm:$0xff]
    %v340 = vld [vmem:[%s1 + $0x4e8] sm:$0xf]
    %v341 = vld [vmem:[%s1 + $0x4ec] sm:$0xff]
    %v342 = vld [vmem:[%s1 + $0x4f4] sm:$0xff]
    %v343 = vld [vmem:[%s1 + $0x4fc] sm:$0xff]
    %v344 = vld [vmem:[%s1 + $0x504] sm:$0xf]
    %v345 = vld [vmem:[%s1 + $0x508] sm:$0xff]
    %v346 = vld [vmem:[%s1 + $0x510] sm:$0xff]
    %v347 = vld [vmem:[%s1 + $0x518] sm:$0xff]
    %v348 = vld [vmem:[%s1 + $0x520] sm:$0xf]
    %v349 = vld [vmem:[%s1 + $0x524] sm:$0xff]
    %v350 = vld [vmem:[%s1 + $0x52c] sm:$0xff]
    %v351 = vld [vmem:[%s1 + $0x534] sm:$0xff]
    %v352 = vld [vmem:[%s1 + $0x53c] sm:$0xf]
    %v353 = vld [vmem:[%s1 + $0x540] sm:$0xff]
    %v354 = vld [vmem:[%s1 + $0x548] sm:$0xff]
    %v355 = vld [vmem:[%s1 + $0x550] sm:$0xff]
    %v356 = vld [vmem:[%s1 + $0x558] sm:$0xf]
    %v357 = vld [vmem:[%s1 + $0x55c] sm:$0xff]
    %v358 = vld [vmem:[%s1 + $0x564] sm:$0xff]
    %v359 = vld [vmem:[%s1 + $0x56c] sm:$0xff]
    %v360 = vld [vmem:[%s1 + $0x574] sm:$0xf]
    %v361 = vld [vmem:[%s1 + $0x578] sm:$0xff]
    %v362 = vld [vmem:[%s1 + $0x580] sm:$0xff]
    %v363 = vld [vmem:[%s1 + $0x588] sm:$0xff]
    %v364 = vld [vmem:[%s1 + $0x590] sm:$0xf]
    %v365 = vld [vmem:[%s1 + $0x594] sm:$0xff]
    %v366 = vld [vmem:[%s1 + $0x59c] sm:$0xff]
    %v367 = vld [vmem:[%s1 + $0x5a4] sm:$0xff]
    %v368 = vld [vmem:[%s1 + $0x5ac] sm:$0xf]
    %v369 = vld [vmem:[%s1 + $0x5b0] sm:$0xff]
    %v370 = vld [vmem:[%s1 + $0x5b8] sm:$0xff]
    %v371 = vld [vmem:[%s1 + $0x5c0] sm:$0xff]
    %v372 = vld [vmem:[%s1 + $0x5c8] sm:$0xf]
    %v373 = vld [vmem:[%s1 + $0x5cc] sm:$0xff]
    %v374 = vld [vmem:[%s1 + $0x5d4] sm:$0xff]
    %v375 = vld [vmem:[%s1 + $0x5dc] sm:$0xff]
    %v376 = vld [vmem:[%s1 + $0x5e4] sm:$0xf]
    %v377 = vld [vmem:[%s1 + $0x5e8] sm:$0xff]
    %v378 = vld [vmem:[%s1 + $0x5f0] sm:$0xff]
    %v379 = vld [vmem:[%s1 + $0x5f8] sm:$0xff]
    %v380 = vld [vmem:[%s1 + $0x600] sm:$0xf]
    %v381 = vld [vmem:[%s1 + $0x604] sm:$0xff]
    %v382 = vld [vmem:[%s1 + $0x60c] sm:$0xff]
    %v383 = vld [vmem:[%s1 + $0x614] sm:$0xff]
    %v384 = vld [vmem:[%s1 + $0x61c] sm:$0xf]
    %v385 = vld [vmem:[%s1 + $0x620] sm:$0xff]
    %v386 = vld [vmem:[%s1 + $0x628] sm:$0xff]
    %v387 = vld [vmem:[%s1 + $0x630] sm:$0xff]
    %v388 = vld [vmem:[%s1 + $0x638] sm:$0xf]
    %v389 = vld [vmem:[%s1 + $0x63c] sm:$0xff]
    %v390 = vld [vmem:[%s1 + $0x644] sm:$0xff]
    %v391 = vld [vmem:[%s1 + $0x64c] sm:$0xff]
    %v392 = vld [vmem:[%s1 + $0x654] sm:$0xf]
    %v393 = vld [vmem:[%s1 + $0x658] sm:$0xff]
    %v394 = vld [vmem:[%s1 + $0x660] sm:$0xff]
    %v395 = vld [vmem:[%s1 + $0x668] sm:$0xff]
    %v396 = vld [vmem:[%s1 + $0x670] sm:$0xf]
    %v397 = vld [vmem:[%s1 + $0x674] sm:$0xff]
    %v398 = vld [vmem:[%s1 + $0x67c] sm:$0xff]
    %v399 = vld [vmem:[%s1 + $0x684] sm:$0xff]
    %v400 = vld [vmem:[%s1 + $0x68c] sm:$0xf]
    %v401 = vld [vmem:[%s1 + $0x690] sm:$0xff]
    %v402 = vld [vmem:[%s1 + $0x698] sm:$0xff]
    %v403 = vld [vmem:[%s1 + $0x6a0] sm:$0xff]
    %v404 = vld [vmem:[%s1 + $0x6a8] sm:$0xf]
    %v405 = vld [vmem:[%s1 + $0x6ac] sm:$0xff]
    %v406 = vld [vmem:[%s1 + $0x6b4] sm:$0xff]
    %v407 = vld [vmem:[%s1 + $0x6bc] sm:$0xff]
    %v408 = vld [vmem:[%s1 + $0x6c4] sm:$0xf]
    %v409 = vld [vmem:[%s1 + $0x6c8] sm:$0xff]
    %v410 = vld [vmem:[%s1 + $0x6d0] sm:$0xff]
    %v411 = vld [vmem:[%s1 + $0x6d8] sm:$0xff]
    %v412 = vld [vmem:[%s1 + $0x6e0] sm:$0xf]
    %v413 = vld [vmem:[%s1 + $0x6e4] sm:$0xff]
    %v414 = vld [vmem:[%s1 + $0x6ec] sm:$0xff]
    %v415 = vld [vmem:[%s1 + $0x6f4] sm:$0xff]
    %v416 = vld [vmem:[%s1 + $0x6fc] sm:$0xf]
    %v417 = vld [vmem:[%s2] sm:$0xff]
    %v418 = vld [vmem:[%s2 + $0x8] sm:$0xff]
    %v419 = vld [vmem:[%s2 + $0x10] sm:$0xff]
    %v420 = vld [vmem:[%s2 + $0x18] sm:$0xff]
    %v421 = vld [vmem:[%s2 + $0x20] sm:$0xff]
    %v422 = vld [vmem:[%s2 + $0x28] sm:$0xff]
    %v423 = vld [vmem:[%s2 + $0x30] sm:$0xff]
    %v424 = vld [vmem:[%s2 + $0x38] sm:$0xff]
    %v425 = vld [vmem:[%s2 + $0x40] sm:$0xff]
    %v426 = vld [vmem:[%s2 + $0x48] sm:$0xff]
    %v427 = vld [vmem:[%s2 + $0x50] sm:$0xff]
    %v428 = vld [vmem:[%s2 + $0x58] sm:$0xff]
    %v429 = vld [vmem:[%s2 + $0x60] sm:$0xff]
    %v430 = vld [vmem:[%s2 + $0x68] sm:$0xff]
    %v431 = vld [vmem:[%s2 + $0x70] sm:$0xff]
    %v432 = vld [vmem:[%s2 + $0x78] sm:$0xff]
    %v433 = vld [vmem:[%s2 + $0x80] sm:$0xff]
    %v434 = vld [vmem:[%s2 + $0x88] sm:$0xff]
    %v435 = vld [vmem:[%s2 + $0x90] sm:$0xff]
    %v436 = vld [vmem:[%s2 + $0x98] sm:$0xff]
    %v437 = vld [vmem:[%s2 + $0xa0] sm:$0xff]
    %v438 = vld [vmem:[%s2 + $0xa8] sm:$0xff]
    %v439 = vld [vmem:[%s2 + $0xb0] sm:$0xff]
    %v440 = vld [vmem:[%s2 + $0xb8] sm:$0xff]
    %v441 = vld [vmem:[%s2 + $0xc0] sm:$0xff]
    %v442 = vld [vmem:[%s2 + $0xc8] sm:$0xff]
    %v443 = vld [vmem:[%s2 + $0xd0] sm:$0xff]
    %v444 = vld [vmem:[%s2 + $0xd8] sm:$0xff]
    %v445 = vld [vmem:[%s2 + $0xe0] sm:$0xff]
    %v446 = vld [vmem:[%s2 + $0xe8] sm:$0xff]
    %v447 = vld [vmem:[%s2 + $0xf0] sm:$0xff]
    %v448 = vld [vmem:[%s2 + $0xf8] sm:$0xff]
    %v449 = vld [vmem:[%s2 + $0x100] sm:$0xff]
    %v450 = vld [vmem:[%s2 + $0x108] sm:$0xff]
    %v451 = vld [vmem:[%s2 + $0x110] sm:$0xff]
    %v452 = vld [vmem:[%s2 + $0x118] sm:$0xff]
    %v453 = vld [vmem:[%s2 + $0x120] sm:$0xff]
    %v454 = vld [vmem:[%s2 + $0x128] sm:$0xff]
    %v455 = vld [vmem:[%s2 + $0x130] sm:$0xff]
    %v456 = vld [vmem:[%s2 + $0x138] sm:$0xff]
    %v457 = vld [vmem:[%s2 + $0x140] sm:$0xff]
    %v458 = vld [vmem:[%s2 + $0x148] sm:$0xff]
    %v459 = vld [vmem:[%s2 + $0x150] sm:$0xff]
    %v460 = vld [vmem:[%s2 + $0x158] sm:$0xff]
    %v461 = vld [vmem:[%s2 + $0x160] sm:$0xff]
    %v462 = vld [vmem:[%s2 + $0x168] sm:$0xff]
    %v463 = vld [vmem:[%s2 + $0x170] sm:$0xff]
    %v464 = vld [vmem:[%s2 + $0x178] sm:$0xff]
    %v465 = vld [vmem:[%s2 + $0x180] sm:$0xff]
    %v466 = vld [vmem:[%s2 + $0x188] sm:$0xff]
    %v467 = vld [vmem:[%s2 + $0x190] sm:$0xff]
    %v468 = vld [vmem:[%s2 + $0x198] sm:$0xff]
    %v469 = vld [vmem:[%s2 + $0x1a0] sm:$0xff]
    %v470 = vld [vmem:[%s2 + $0x1a8] sm:$0xff]
    %v471 = vld [vmem:[%s2 + $0x1b0] sm:$0xff]
    %v472 = vld [vmem:[%s2 + $0x1b8] sm:$0xff]
    %v473 = vld [vmem:[%s2 + $0x1c0] sm:$0xff]
    %v474 = vld [vmem:[%s2 + $0x1c8] sm:$0xff]
    %v475 = vld [vmem:[%s2 + $0x1d0] sm:$0xff]
    %v476 = vld [vmem:[%s2 + $0x1d8] sm:$0xff]
    %v477 = vld [vmem:[%s2 + $0x1e0] sm:$0xff]
    %v478 = vld [vmem:[%s2 + $0x1e8] sm:$0xff]
    %v479 = vld [vmem:[%s2 + $0x1f0] sm:$0xff]
    %v480 = vld [vmem:[%s2 + $0x1f8] sm:$0xff]
    %482 = vset.pattern.permute.xlu0 0
    %483 = vperm.xlu0 %482, %v417
    %v484 = vpop.permute.xlu0 %483
    %487 = vset.pattern.permute.xlu0 0
    %488 = vperm.xlu0 %487, %v418
    %v489 = vpop.permute.xlu0 %488
    %492 = vset.pattern.permute.xlu0 0
    %493 = vperm.xlu0 %492, %v419
    %v494 = vpop.permute.xlu0 %493
    %497 = vset.pattern.permute.xlu0 0
    %498 = vperm.xlu0 %497, %v420
    %v499 = vpop.permute.xlu0 %498
    %502 = vset.pattern.permute.xlu0 0
    %503 = vperm.xlu0 %502, %v421
    %v504 = vpop.permute.xlu0 %503
    %507 = vset.pattern.permute.xlu0 0
    %508 = vperm.xlu0 %507, %v422
    %v509 = vpop.permute.xlu0 %508
    %512 = vset.pattern.permute.xlu0 0
    %513 = vperm.xlu0 %512, %v423
    %v514 = vpop.permute.xlu0 %513
    %517 = vset.pattern.permute.xlu0 0
    %518 = vperm.xlu0 %517, %v424
    %v519 = vpop.permute.xlu0 %518
    %522 = vset.pattern.permute.xlu0 0
    %523 = vperm.xlu0 %522, %v425
    %v524 = vpop.permute.xlu0 %523
    %527 = vset.pattern.permute.xlu0 0
    %528 = vperm.xlu0 %527, %v426
    %v529 = vpop.permute.xlu0 %528
    %532 = vset.pattern.permute.xlu0 0
    %533 = vperm.xlu0 %532, %v427
    %v534 = vpop.permute.xlu0 %533
    %537 = vset.pattern.permute.xlu0 0
    %538 = vperm.xlu0 %537, %v428
    %v539 = vpop.permute.xlu0 %538
    %542 = vset.pattern.permute.xlu0 0
    %543 = vperm.xlu0 %542, %v429
    %v544 = vpop.permute.xlu0 %543
    %547 = vset.pattern.permute.xlu0 0
    %548 = vperm.xlu0 %547, %v430
    %v549 = vpop.permute.xlu0 %548
    %552 = vset.pattern.permute.xlu0 0
    %553 = vperm.xlu0 %552, %v431
    %v554 = vpop.permute.xlu0 %553
    %557 = vset.pattern.permute.xlu0 0
    %558 = vperm.xlu0 %557, %v432
    %v559 = vpop.permute.xlu0 %558
    %562 = vset.pattern.permute.xlu0 0
    %563 = vperm.xlu0 %562, %v433
    %v564 = vpop.permute.xlu0 %563
    %567 = vset.pattern.permute.xlu0 0
    %568 = vperm.xlu0 %567, %v434
    %v569 = vpop.permute.xlu0 %568
    %572 = vset.pattern.permute.xlu0 0
    %573 = vperm.xlu0 %572, %v435
    %v574 = vpop.permute.xlu0 %573
    %577 = vset.pattern.permute.xlu0 0
    %578 = vperm.xlu0 %577, %v436
    %v579 = vpop.permute.xlu0 %578
    %582 = vset.pattern.permute.xlu0 0
    %583 = vperm.xlu0 %582, %v437
    %v584 = vpop.permute.xlu0 %583
    %587 = vset.pattern.permute.xlu0 0
    %588 = vperm.xlu0 %587, %v438
    %v589 = vpop.permute.xlu0 %588
    %592 = vset.pattern.permute.xlu0 0
    %593 = vperm.xlu0 %592, %v439
    %v594 = vpop.permute.xlu0 %593
    %597 = vset.pattern.permute.xlu0 0
    %598 = vperm.xlu0 %597, %v440
    %v599 = vpop.permute.xlu0 %598
    %602 = vset.pattern.permute.xlu0 0
    %603 = vperm.xlu0 %602, %v441
    %v604 = vpop.permute.xlu0 %603
    %607 = vset.pattern.permute.xlu0 0
    %608 = vperm.xlu0 %607, %v442
    %v609 = vpop.permute.xlu0 %608
    %612 = vset.pattern.permute.xlu0 0
    %613 = vperm.xlu0 %612, %v443
    %v614 = vpop.permute.xlu0 %613
    %617 = vset.pattern.permute.xlu0 0
    %618 = vperm.xlu0 %617, %v444
    %v619 = vpop.permute.xlu0 %618
    %622 = vset.pattern.permute.xlu0 0
    %623 = vperm.xlu0 %622, %v445
    %v624 = vpop.permute.xlu0 %623
    %627 = vset.pattern.permute.xlu0 0
    %628 = vperm.xlu0 %627, %v446
    %v629 = vpop.permute.xlu0 %628
    %632 = vset.pattern.permute.xlu0 0
    %633 = vperm.xlu0 %632, %v447
    %v634 = vpop.permute.xlu0 %633
    %637 = vset.pattern.permute.xlu0 0
    %638 = vperm.xlu0 %637, %v448
    %v639 = vpop.permute.xlu0 %638
    %642 = vset.pattern.permute.xlu0 0
    %643 = vperm.xlu0 %642, %v449
    %v644 = vpop.permute.xlu0 %643
    %647 = vset.pattern.permute.xlu0 0
    %648 = vperm.xlu0 %647, %v450
    %v649 = vpop.permute.xlu0 %648
    %652 = vset.pattern.permute.xlu0 0
    %653 = vperm.xlu0 %652, %v451
    %v654 = vpop.permute.xlu0 %653
    %657 = vset.pattern.permute.xlu0 0
    %658 = vperm.xlu0 %657, %v452
    %v659 = vpop.permute.xlu0 %658
    %662 = vset.pattern.permute.xlu0 0
    %663 = vperm.xlu0 %662, %v453
    %v664 = vpop.permute.xlu0 %663
    %667 = vset.pattern.permute.xlu0 0
    %668 = vperm.xlu0 %667, %v454
    %v669 = vpop.permute.xlu0 %668
    %672 = vset.pattern.permute.xlu0 0
    %673 = vperm.xlu0 %672, %v455
    %v674 = vpop.permute.xlu0 %673
    %677 = vset.pattern.permute.xlu0 0
    %678 = vperm.xlu0 %677, %v456
    %v679 = vpop.permute.xlu0 %678
    %682 = vset.pattern.permute.xlu0 0
    %683 = vperm.xlu0 %682, %v457
    %v684 = vpop.permute.xlu0 %683
    %687 = vset.pattern.permute.xlu0 0
    %688 = vperm.xlu0 %687, %v458
    %v689 = vpop.permute.xlu0 %688
    %692 = vset.pattern.permute.xlu0 0
    %693 = vperm.xlu0 %692, %v459
    %v694 = vpop.permute.xlu0 %693
    %697 = vset.pattern.permute.xlu0 0
    %698 = vperm.xlu0 %697, %v460
    %v699 = vpop.permute.xlu0 %698
    %702 = vset.pattern.permute.xlu0 0
    %703 = vperm.xlu0 %702, %v461
    %v704 = vpop.permute.xlu0 %703
    %707 = vset.pattern.permute.xlu0 0
    %708 = vperm.xlu0 %707, %v462
    %v709 = vpop.permute.xlu0 %708
    %712 = vset.pattern.permute.xlu0 0
    %713 = vperm.xlu0 %712, %v463
    %v714 = vpop.permute.xlu0 %713
    %717 = vset.pattern.permute.xlu0 0
    %718 = vperm.xlu0 %717, %v464
    %v719 = vpop.permute.xlu0 %718
    %722 = vset.pattern.permute.xlu0 0
    %723 = vperm.xlu0 %722, %v465
    %v724 = vpop.permute.xlu0 %723
    %727 = vset.pattern.permute.xlu0 0
    %728 = vperm.xlu0 %727, %v466
    %v729 = vpop.permute.xlu0 %728
    %732 = vset.pattern.permute.xlu0 0
    %733 = vperm.xlu0 %732, %v467
    %v734 = vpop.permute.xlu0 %733
    %737 = vset.pattern.permute.xlu0 0
    %738 = vperm.xlu0 %737, %v468
    %v739 = vpop.permute.xlu0 %738
    %742 = vset.pattern.permute.xlu0 0
    %743 = vperm.xlu0 %742, %v469
    %v744 = vpop.permute.xlu0 %743
    %747 = vset.pattern.permute.xlu0 0
    %748 = vperm.xlu0 %747, %v470
    %v749 = vpop.permute.xlu0 %748
    %752 = vset.pattern.permute.xlu0 0
    %753 = vperm.xlu0 %752, %v471
    %v754 = vpop.permute.xlu0 %753
    %757 = vset.pattern.permute.xlu0 0
    %758 = vperm.xlu0 %757, %v472
    %v759 = vpop.permute.xlu0 %758
    %762 = vset.pattern.permute.xlu0 0
    %763 = vperm.xlu0 %762, %v473
    %v764 = vpop.permute.xlu0 %763
    %767 = vset.pattern.permute.xlu0 0
    %768 = vperm.xlu0 %767, %v474
    %v769 = vpop.permute.xlu0 %768
    %772 = vset.pattern.permute.xlu0 0
    %773 = vperm.xlu0 %772, %v475
    %v774 = vpop.permute.xlu0 %773
    %777 = vset.pattern.permute.xlu0 0
    %778 = vperm.xlu0 %777, %v476
    %v779 = vpop.permute.xlu0 %778
    %782 = vset.pattern.permute.xlu0 0
    %783 = vperm.xlu0 %782, %v477
    %v784 = vpop.permute.xlu0 %783
    %787 = vset.pattern.permute.xlu0 0
    %788 = vperm.xlu0 %787, %v478
    %v789 = vpop.permute.xlu0 %788
    %792 = vset.pattern.permute.xlu0 0
    %793 = vperm.xlu0 %792, %v479
    %v794 = vpop.permute.xlu0 %793
    %797 = vset.pattern.permute.xlu0 0
    %798 = vperm.xlu0 %797, %v480
    %v799 = vpop.permute.xlu0 %798
    %v1057 = vunpack.c.l.b16 %v161
    %v1058 = vunpack.c.h.b16 %v161
    %v1059 = vunpack.c.l.b16 %v162
    %v1060 = vunpack.c.h.b16 %v162
    %v1061 = vunpack.c.l.b16 %v163
    %v1062 = vunpack.c.h.b16 %v163
    %v1063 = vunpack.c.l.b16 %v164
    %v1064 = vunpack.c.l.b16 %v165
    %v1065 = vunpack.c.h.b16 %v165
    %v1066 = vunpack.c.l.b16 %v166
    %v1067 = vunpack.c.h.b16 %v166
    %v1068 = vunpack.c.l.b16 %v167
    %v1069 = vunpack.c.h.b16 %v167
    %v1070 = vunpack.c.l.b16 %v168
    %v1071 = vunpack.c.l.b16 %v169
    %v1072 = vunpack.c.h.b16 %v169
    %v1073 = vunpack.c.l.b16 %v170
    %v1074 = vunpack.c.h.b16 %v170
    %v1075 = vunpack.c.l.b16 %v171
    %v1076 = vunpack.c.h.b16 %v171
    %v1077 = vunpack.c.l.b16 %v172
    %v1078 = vunpack.c.l.b16 %v173
    %v1079 = vunpack.c.h.b16 %v173
    %v1080 = vunpack.c.l.b16 %v174
    %v1081 = vunpack.c.h.b16 %v174
    %v1082 = vunpack.c.l.b16 %v175
    %v1083 = vunpack.c.h.b16 %v175
    %v1084 = vunpack.c.l.b16 %v176
    %v1085 = vunpack.c.l.b16 %v177
    %v1086 = vunpack.c.h.b16 %v177
    %v1087 = vunpack.c.l.b16 %v178
    %v1088 = vunpack.c.h.b16 %v178
    %v1089 = vunpack.c.l.b16 %v179
    %v1090 = vunpack.c.h.b16 %v179
    %v1091 = vunpack.c.l.b16 %v180
    %v1092 = vunpack.c.l.b16 %v181
    %v1093 = vunpack.c.h.b16 %v181
    %v1094 = vunpack.c.l.b16 %v182
    %v1095 = vunpack.c.h.b16 %v182
    %v1096 = vunpack.c.l.b16 %v183
    %v1097 = vunpack.c.h.b16 %v183
    %v1098 = vunpack.c.l.b16 %v184
    %v1099 = vunpack.c.l.b16 %v185
    %v1100 = vunpack.c.h.b16 %v185
    %v1101 = vunpack.c.l.b16 %v186
    %v1102 = vunpack.c.h.b16 %v186
    %v1103 = vunpack.c.l.b16 %v187
    %v1104 = vunpack.c.h.b16 %v187
    %v1105 = vunpack.c.l.b16 %v188
    %v1106 = vunpack.c.l.b16 %v189
    %v1107 = vunpack.c.h.b16 %v189
    %v1108 = vunpack.c.l.b16 %v190
    %v1109 = vunpack.c.h.b16 %v190
    %v1110 = vunpack.c.l.b16 %v191
    %v1111 = vunpack.c.h.b16 %v191
    %v1112 = vunpack.c.l.b16 %v192
    %v1113 = vunpack.c.l.b16 %v193
    %v1114 = vunpack.c.h.b16 %v193
    %v1115 = vunpack.c.l.b16 %v194
    %v1116 = vunpack.c.h.b16 %v194
    %v1117 = vunpack.c.l.b16 %v195
    %v1118 = vunpack.c.h.b16 %v195
    %v1119 = vunpack.c.l.b16 %v196
    %v1120 = vunpack.c.l.b16 %v197
    %v1121 = vunpack.c.h.b16 %v197
    %v1122 = vunpack.c.l.b16 %v198
    %v1123 = vunpack.c.h.b16 %v198
    %v1124 = vunpack.c.l.b16 %v199
    %v1125 = vunpack.c.h.b16 %v199
    %v1126 = vunpack.c.l.b16 %v200
    %v1127 = vunpack.c.l.b16 %v201
    %v1128 = vunpack.c.h.b16 %v201
    %v1129 = vunpack.c.l.b16 %v202
    %v1130 = vunpack.c.h.b16 %v202
    %v1131 = vunpack.c.l.b16 %v203
    %v1132 = vunpack.c.h.b16 %v203
    %v1133 = vunpack.c.l.b16 %v204
    %v1134 = vunpack.c.l.b16 %v205
    %v1135 = vunpack.c.h.b16 %v205
    %v1136 = vunpack.c.l.b16 %v206
    %v1137 = vunpack.c.h.b16 %v206
    %v1138 = vunpack.c.l.b16 %v207
    %v1139 = vunpack.c.h.b16 %v207
    %v1140 = vunpack.c.l.b16 %v208
    %v1141 = vunpack.c.l.b16 %v209
    %v1142 = vunpack.c.h.b16 %v209
    %v1143 = vunpack.c.l.b16 %v210
    %v1144 = vunpack.c.h.b16 %v210
    %v1145 = vunpack.c.l.b16 %v211
    %v1146 = vunpack.c.h.b16 %v211
    %v1147 = vunpack.c.l.b16 %v212
    %v1148 = vunpack.c.l.b16 %v213
    %v1149 = vunpack.c.h.b16 %v213
    %v1150 = vunpack.c.l.b16 %v214
    %v1151 = vunpack.c.h.b16 %v214
    %v1152 = vunpack.c.l.b16 %v215
    %v1153 = vunpack.c.h.b16 %v215
    %v1154 = vunpack.c.l.b16 %v216
    %v1155 = vunpack.c.l.b16 %v217
    %v1156 = vunpack.c.h.b16 %v217
    %v1157 = vunpack.c.l.b16 %v218
    %v1158 = vunpack.c.h.b16 %v218
    %v1159 = vunpack.c.l.b16 %v219
    %v1160 = vunpack.c.h.b16 %v219
    %v1161 = vunpack.c.l.b16 %v220
    %v1162 = vunpack.c.l.b16 %v221
    %v1163 = vunpack.c.h.b16 %v221
    %v1164 = vunpack.c.l.b16 %v222
    %v1165 = vunpack.c.h.b16 %v222
    %v1166 = vunpack.c.l.b16 %v223
    %v1167 = vunpack.c.h.b16 %v223
    %v1168 = vunpack.c.l.b16 %v224
    %v1169 = vunpack.c.l.b16 %v225
    %v1170 = vunpack.c.h.b16 %v225
    %v1171 = vunpack.c.l.b16 %v226
    %v1172 = vunpack.c.h.b16 %v226
    %v1173 = vunpack.c.l.b16 %v227
    %v1174 = vunpack.c.h.b16 %v227
    %v1175 = vunpack.c.l.b16 %v228
    %v1176 = vunpack.c.l.b16 %v229
    %v1177 = vunpack.c.h.b16 %v229
    %v1178 = vunpack.c.l.b16 %v230
    %v1179 = vunpack.c.h.b16 %v230
    %v1180 = vunpack.c.l.b16 %v231
    %v1181 = vunpack.c.h.b16 %v231
    %v1182 = vunpack.c.l.b16 %v232
    %v1183 = vunpack.c.l.b16 %v233
    %v1184 = vunpack.c.h.b16 %v233
    %v1185 = vunpack.c.l.b16 %v234
    %v1186 = vunpack.c.h.b16 %v234
    %v1187 = vunpack.c.l.b16 %v235
    %v1188 = vunpack.c.h.b16 %v235
    %v1189 = vunpack.c.l.b16 %v236
    %v1190 = vunpack.c.l.b16 %v237
    %v1191 = vunpack.c.h.b16 %v237
    %v1192 = vunpack.c.l.b16 %v238
    %v1193 = vunpack.c.h.b16 %v238
    %v1194 = vunpack.c.l.b16 %v239
    %v1195 = vunpack.c.h.b16 %v239
    %v1196 = vunpack.c.l.b16 %v240
    %v1197 = vunpack.c.l.b16 %v241
    %v1198 = vunpack.c.h.b16 %v241
    %v1199 = vunpack.c.l.b16 %v242
    %v1200 = vunpack.c.h.b16 %v242
    %v1201 = vunpack.c.l.b16 %v243
    %v1202 = vunpack.c.h.b16 %v243
    %v1203 = vunpack.c.l.b16 %v244
    %v1204 = vunpack.c.l.b16 %v245
    %v1205 = vunpack.c.h.b16 %v245
    %v1206 = vunpack.c.l.b16 %v246
    %v1207 = vunpack.c.h.b16 %v246
    %v1208 = vunpack.c.l.b16 %v247
    %v1209 = vunpack.c.h.b16 %v247
    %v1210 = vunpack.c.l.b16 %v248
    %v1211 = vunpack.c.l.b16 %v249
    %v1212 = vunpack.c.h.b16 %v249
    %v1213 = vunpack.c.l.b16 %v250
    %v1214 = vunpack.c.h.b16 %v250
    %v1215 = vunpack.c.l.b16 %v251
    %v1216 = vunpack.c.h.b16 %v251
    %v1217 = vunpack.c.l.b16 %v252
    %v1218 = vunpack.c.l.b16 %v253
    %v1219 = vunpack.c.h.b16 %v253
    %v1220 = vunpack.c.l.b16 %v254
    %v1221 = vunpack.c.h.b16 %v254
    %v1222 = vunpack.c.l.b16 %v255
    %v1223 = vunpack.c.h.b16 %v255
    %v1224 = vunpack.c.l.b16 %v256
    %v1225 = vunpack.c.l.b16 %v257
    %v1226 = vunpack.c.h.b16 %v257
    %v1227 = vunpack.c.l.b16 %v258
    %v1228 = vunpack.c.h.b16 %v258
    %v1229 = vunpack.c.l.b16 %v259
    %v1230 = vunpack.c.h.b16 %v259
    %v1231 = vunpack.c.l.b16 %v260
    %v1232 = vunpack.c.l.b16 %v261
    %v1233 = vunpack.c.h.b16 %v261
    %v1234 = vunpack.c.l.b16 %v262
    %v1235 = vunpack.c.h.b16 %v262
    %v1236 = vunpack.c.l.b16 %v263
    %v1237 = vunpack.c.h.b16 %v263
    %v1238 = vunpack.c.l.b16 %v264
    %v1239 = vunpack.c.l.b16 %v265
    %v1240 = vunpack.c.h.b16 %v265
    %v1241 = vunpack.c.l.b16 %v266
    %v1242 = vunpack.c.h.b16 %v266
    %v1243 = vunpack.c.l.b16 %v267
    %v1244 = vunpack.c.h.b16 %v267
    %v1245 = vunpack.c.l.b16 %v268
    %v1246 = vunpack.c.l.b16 %v269
    %v1247 = vunpack.c.h.b16 %v269
    %v1248 = vunpack.c.l.b16 %v270
    %v1249 = vunpack.c.h.b16 %v270
    %v1250 = vunpack.c.l.b16 %v271
    %v1251 = vunpack.c.h.b16 %v271
    %v1252 = vunpack.c.l.b16 %v272
    %v1253 = vunpack.c.l.b16 %v273
    %v1254 = vunpack.c.h.b16 %v273
    %v1255 = vunpack.c.l.b16 %v274
    %v1256 = vunpack.c.h.b16 %v274
    %v1257 = vunpack.c.l.b16 %v275
    %v1258 = vunpack.c.h.b16 %v275
    %v1259 = vunpack.c.l.b16 %v276
    %v1260 = vunpack.c.l.b16 %v277
    %v1261 = vunpack.c.h.b16 %v277
    %v1262 = vunpack.c.l.b16 %v278
    %v1263 = vunpack.c.h.b16 %v278
    %v1264 = vunpack.c.l.b16 %v279
    %v1265 = vunpack.c.h.b16 %v279
    %v1266 = vunpack.c.l.b16 %v280
    %v1267 = vunpack.c.l.b16 %v281
    %v1268 = vunpack.c.h.b16 %v281
    %v1269 = vunpack.c.l.b16 %v282
    %v1270 = vunpack.c.h.b16 %v282
    %v1271 = vunpack.c.l.b16 %v283
    %v1272 = vunpack.c.h.b16 %v283
    %v1273 = vunpack.c.l.b16 %v284
    %v1274 = vunpack.c.l.b16 %v285
    %v1275 = vunpack.c.h.b16 %v285
    %v1276 = vunpack.c.l.b16 %v286
    %v1277 = vunpack.c.h.b16 %v286
    %v1278 = vunpack.c.l.b16 %v287
    %v1279 = vunpack.c.h.b16 %v287
    %v1280 = vunpack.c.l.b16 %v288
    %v1281 = vunpack.c.l.b16 %v289
    %v1282 = vunpack.c.h.b16 %v289
    %v1283 = vunpack.c.l.b16 %v290
    %v1284 = vunpack.c.h.b16 %v290
    %v1285 = vunpack.c.l.b16 %v291
    %v1286 = vunpack.c.h.b16 %v291
    %v1287 = vunpack.c.l.b16 %v292
    %v1288 = vunpack.c.l.b16 %v293
    %v1289 = vunpack.c.h.b16 %v293
    %v1290 = vunpack.c.l.b16 %v294
    %v1291 = vunpack.c.h.b16 %v294
    %v1292 = vunpack.c.l.b16 %v295
    %v1293 = vunpack.c.h.b16 %v295
    %v1294 = vunpack.c.l.b16 %v296
    %v1295 = vunpack.c.l.b16 %v297
    %v1296 = vunpack.c.h.b16 %v297
    %v1297 = vunpack.c.l.b16 %v298
    %v1298 = vunpack.c.h.b16 %v298
    %v1299 = vunpack.c.l.b16 %v299
    %v1300 = vunpack.c.h.b16 %v299
    %v1301 = vunpack.c.l.b16 %v300
    %v1302 = vunpack.c.l.b16 %v301
    %v1303 = vunpack.c.h.b16 %v301
    %v1304 = vunpack.c.l.b16 %v302
    %v1305 = vunpack.c.h.b16 %v302
    %v1306 = vunpack.c.l.b16 %v303
    %v1307 = vunpack.c.h.b16 %v303
    %v1308 = vunpack.c.l.b16 %v304
    %v1309 = vunpack.c.l.b16 %v305
    %v1310 = vunpack.c.h.b16 %v305
    %v1311 = vunpack.c.l.b16 %v306
    %v1312 = vunpack.c.h.b16 %v306
    %v1313 = vunpack.c.l.b16 %v307
    %v1314 = vunpack.c.h.b16 %v307
    %v1315 = vunpack.c.l.b16 %v308
    %v1316 = vunpack.c.l.b16 %v309
    %v1317 = vunpack.c.h.b16 %v309
    %v1318 = vunpack.c.l.b16 %v310
    %v1319 = vunpack.c.h.b16 %v310
    %v1320 = vunpack.c.l.b16 %v311
    %v1321 = vunpack.c.h.b16 %v311
    %v1322 = vunpack.c.l.b16 %v312
    %v1323 = vunpack.c.l.b16 %v313
    %v1324 = vunpack.c.h.b16 %v313
    %v1325 = vunpack.c.l.b16 %v314
    %v1326 = vunpack.c.h.b16 %v314
    %v1327 = vunpack.c.l.b16 %v315
    %v1328 = vunpack.c.h.b16 %v315
    %v1329 = vunpack.c.l.b16 %v316
    %v1330 = vunpack.c.l.b16 %v317
    %v1331 = vunpack.c.h.b16 %v317
    %v1332 = vunpack.c.l.b16 %v318
    %v1333 = vunpack.c.h.b16 %v318
    %v1334 = vunpack.c.l.b16 %v319
    %v1335 = vunpack.c.h.b16 %v319
    %v1336 = vunpack.c.l.b16 %v320
    %v1337 = vunpack.c.l.b16 %v321
    %v1338 = vunpack.c.h.b16 %v321
    %v1339 = vunpack.c.l.b16 %v322
    %v1340 = vunpack.c.h.b16 %v322
    %v1341 = vunpack.c.l.b16 %v323
    %v1342 = vunpack.c.h.b16 %v323
    %v1343 = vunpack.c.l.b16 %v324
    %v1344 = vunpack.c.l.b16 %v325
    %v1345 = vunpack.c.h.b16 %v325
    %v1346 = vunpack.c.l.b16 %v326
    %v1347 = vunpack.c.h.b16 %v326
    %v1348 = vunpack.c.l.b16 %v327
    %v1349 = vunpack.c.h.b16 %v327
    %v1350 = vunpack.c.l.b16 %v328
    %v1351 = vunpack.c.l.b16 %v329
    %v1352 = vunpack.c.h.b16 %v329
    %v1353 = vunpack.c.l.b16 %v330
    %v1354 = vunpack.c.h.b16 %v330
    %v1355 = vunpack.c.l.b16 %v331
    %v1356 = vunpack.c.h.b16 %v331
    %v1357 = vunpack.c.l.b16 %v332
    %v1358 = vunpack.c.l.b16 %v333
    %v1359 = vunpack.c.h.b16 %v333
    %v1360 = vunpack.c.l.b16 %v334
    %v1361 = vunpack.c.h.b16 %v334
    %v1362 = vunpack.c.l.b16 %v335
    %v1363 = vunpack.c.h.b16 %v335
    %v1364 = vunpack.c.l.b16 %v336
    %v1365 = vunpack.c.l.b16 %v337
    %v1366 = vunpack.c.h.b16 %v337
    %v1367 = vunpack.c.l.b16 %v338
    %v1368 = vunpack.c.h.b16 %v338
    %v1369 = vunpack.c.l.b16 %v339
    %v1370 = vunpack.c.h.b16 %v339
    %v1371 = vunpack.c.l.b16 %v340
    %v1372 = vunpack.c.l.b16 %v341
    %v1373 = vunpack.c.h.b16 %v341
    %v1374 = vunpack.c.l.b16 %v342
    %v1375 = vunpack.c.h.b16 %v342
    %v1376 = vunpack.c.l.b16 %v343
    %v1377 = vunpack.c.h.b16 %v343
    %v1378 = vunpack.c.l.b16 %v344
    %v1379 = vunpack.c.l.b16 %v345
    %v1380 = vunpack.c.h.b16 %v345
    %v1381 = vunpack.c.l.b16 %v346
    %v1382 = vunpack.c.h.b16 %v346
    %v1383 = vunpack.c.l.b16 %v347
    %v1384 = vunpack.c.h.b16 %v347
    %v1385 = vunpack.c.l.b16 %v348
    %v1386 = vunpack.c.l.b16 %v349
    %v1387 = vunpack.c.h.b16 %v349
    %v1388 = vunpack.c.l.b16 %v350
    %v1389 = vunpack.c.h.b16 %v350
    %v1390 = vunpack.c.l.b16 %v351
    %v1391 = vunpack.c.h.b16 %v351
    %v1392 = vunpack.c.l.b16 %v352
    %v1393 = vunpack.c.l.b16 %v353
    %v1394 = vunpack.c.h.b16 %v353
    %v1395 = vunpack.c.l.b16 %v354
    %v1396 = vunpack.c.h.b16 %v354
    %v1397 = vunpack.c.l.b16 %v355
    %v1398 = vunpack.c.h.b16 %v355
    %v1399 = vunpack.c.l.b16 %v356
    %v1400 = vunpack.c.l.b16 %v357
    %v1401 = vunpack.c.h.b16 %v357
    %v1402 = vunpack.c.l.b16 %v358
    %v1403 = vunpack.c.h.b16 %v358
    %v1404 = vunpack.c.l.b16 %v359
    %v1405 = vunpack.c.h.b16 %v359
    %v1406 = vunpack.c.l.b16 %v360
    %v1407 = vunpack.c.l.b16 %v361
    %v1408 = vunpack.c.h.b16 %v361
    %v1409 = vunpack.c.l.b16 %v362
    %v1410 = vunpack.c.h.b16 %v362
    %v1411 = vunpack.c.l.b16 %v363
    %v1412 = vunpack.c.h.b16 %v363
    %v1413 = vunpack.c.l.b16 %v364
    %v1414 = vunpack.c.l.b16 %v365
    %v1415 = vunpack.c.h.b16 %v365
    %v1416 = vunpack.c.l.b16 %v366
    %v1417 = vunpack.c.h.b16 %v366
    %v1418 = vunpack.c.l.b16 %v367
    %v1419 = vunpack.c.h.b16 %v367
    %v1420 = vunpack.c.l.b16 %v368
    %v1421 = vunpack.c.l.b16 %v369
    %v1422 = vunpack.c.h.b16 %v369
    %v1423 = vunpack.c.l.b16 %v370
    %v1424 = vunpack.c.h.b16 %v370
    %v1425 = vunpack.c.l.b16 %v371
    %v1426 = vunpack.c.h.b16 %v371
    %v1427 = vunpack.c.l.b16 %v372
    %v1428 = vunpack.c.l.b16 %v373
    %v1429 = vunpack.c.h.b16 %v373
    %v1430 = vunpack.c.l.b16 %v374
    %v1431 = vunpack.c.h.b16 %v374
    %v1432 = vunpack.c.l.b16 %v375
    %v1433 = vunpack.c.h.b16 %v375
    %v1434 = vunpack.c.l.b16 %v376
    %v1435 = vunpack.c.l.b16 %v377
    %v1436 = vunpack.c.h.b16 %v377
    %v1437 = vunpack.c.l.b16 %v378
    %v1438 = vunpack.c.h.b16 %v378
    %v1439 = vunpack.c.l.b16 %v379
    %v1440 = vunpack.c.h.b16 %v379
    %v1441 = vunpack.c.l.b16 %v380
    %v1442 = vunpack.c.l.b16 %v381
    %v1443 = vunpack.c.h.b16 %v381
    %v1444 = vunpack.c.l.b16 %v382
    %v1445 = vunpack.c.h.b16 %v382
    %v1446 = vunpack.c.l.b16 %v383
    %v1447 = vunpack.c.h.b16 %v383
    %v1448 = vunpack.c.l.b16 %v384
    %v1449 = vunpack.c.l.b16 %v385
    %v1450 = vunpack.c.h.b16 %v385
    %v1451 = vunpack.c.l.b16 %v386
    %v1452 = vunpack.c.h.b16 %v386
    %v1453 = vunpack.c.l.b16 %v387
    %v1454 = vunpack.c.h.b16 %v387
    %v1455 = vunpack.c.l.b16 %v388
    %v1456 = vunpack.c.l.b16 %v389
    %v1457 = vunpack.c.h.b16 %v389
    %v1458 = vunpack.c.l.b16 %v390
    %v1459 = vunpack.c.h.b16 %v390
    %v1460 = vunpack.c.l.b16 %v391
    %v1461 = vunpack.c.h.b16 %v391
    %v1462 = vunpack.c.l.b16 %v392
    %v1463 = vunpack.c.l.b16 %v393
    %v1464 = vunpack.c.h.b16 %v393
    %v1465 = vunpack.c.l.b16 %v394
    %v1466 = vunpack.c.h.b16 %v394
    %v1467 = vunpack.c.l.b16 %v395
    %v1468 = vunpack.c.h.b16 %v395
    %v1469 = vunpack.c.l.b16 %v396
    %v1470 = vunpack.c.l.b16 %v397
    %v1471 = vunpack.c.h.b16 %v397
    %v1472 = vunpack.c.l.b16 %v398
    %v1473 = vunpack.c.h.b16 %v398
    %v1474 = vunpack.c.l.b16 %v399
    %v1475 = vunpack.c.h.b16 %v399
    %v1476 = vunpack.c.l.b16 %v400
    %v1477 = vunpack.c.l.b16 %v401
    %v1478 = vunpack.c.h.b16 %v401
    %v1479 = vunpack.c.l.b16 %v402
    %v1480 = vunpack.c.h.b16 %v402
    %v1481 = vunpack.c.l.b16 %v403
    %v1482 = vunpack.c.h.b16 %v403
    %v1483 = vunpack.c.l.b16 %v404
    %v1484 = vunpack.c.l.b16 %v405
    %v1485 = vunpack.c.h.b16 %v405
    %v1486 = vunpack.c.l.b16 %v406
    %v1487 = vunpack.c.h.b16 %v406
    %v1488 = vunpack.c.l.b16 %v407
    %v1489 = vunpack.c.h.b16 %v407
    %v1490 = vunpack.c.l.b16 %v408
    %v1491 = vunpack.c.l.b16 %v409
    %v1492 = vunpack.c.h.b16 %v409
    %v1493 = vunpack.c.l.b16 %v410
    %v1494 = vunpack.c.h.b16 %v410
    %v1495 = vunpack.c.l.b16 %v411
    %v1496 = vunpack.c.h.b16 %v411
    %v1497 = vunpack.c.l.b16 %v412
    %v1498 = vunpack.c.l.b16 %v413
    %v1499 = vunpack.c.h.b16 %v413
    %v1500 = vunpack.c.l.b16 %v414
    %v1501 = vunpack.c.h.b16 %v414
    %v1502 = vunpack.c.l.b16 %v415
    %v1503 = vunpack.c.h.b16 %v415
    %v1504 = vunpack.c.l.b16 %v416
    %v1505 = vpack.c.b16 %v1064, %v1057
    %v1506 = vpack.c.b16 %v1065, %v1058
    %v1507 = vpack.c.b16 %v1066, %v1059
    %v1508 = vpack.c.b16 %v1067, %v1060
    %v1509 = vpack.c.b16 %v1068, %v1061
    %v1510 = vpack.c.b16 %v1069, %v1062
    %v1511 = vpack.c.b16 %v1070, %v1063
    %v1512 = vpack.c.b16 %v1078, %v1071
    %v1513 = vpack.c.b16 %v1079, %v1072
    %v1514 = vpack.c.b16 %v1080, %v1073
    %v1515 = vpack.c.b16 %v1081, %v1074
    %v1516 = vpack.c.b16 %v1082, %v1075
    %v1517 = vpack.c.b16 %v1083, %v1076
    %v1518 = vpack.c.b16 %v1084, %v1077
    %v1519 = vpack.c.b16 %v1092, %v1085
    %v1520 = vpack.c.b16 %v1093, %v1086
    %v1521 = vpack.c.b16 %v1094, %v1087
    %v1522 = vpack.c.b16 %v1095, %v1088
    %v1523 = vpack.c.b16 %v1096, %v1089
    %v1524 = vpack.c.b16 %v1097, %v1090
    %v1525 = vpack.c.b16 %v1098, %v1091
    %v1526 = vpack.c.b16 %v1106, %v1099
    %v1527 = vpack.c.b16 %v1107, %v1100
    %v1528 = vpack.c.b16 %v1108, %v1101
    %v1529 = vpack.c.b16 %v1109, %v1102
    %v1530 = vpack.c.b16 %v1110, %v1103
    %v1531 = vpack.c.b16 %v1111, %v1104
    %v1532 = vpack.c.b16 %v1112, %v1105
    %v1533 = vpack.c.b16 %v1120, %v1113
    %v1534 = vpack.c.b16 %v1121, %v1114
    %v1535 = vpack.c.b16 %v1122, %v1115
    %v1536 = vpack.c.b16 %v1123, %v1116
    %v1537 = vpack.c.b16 %v1124, %v1117
    %v1538 = vpack.c.b16 %v1125, %v1118
    %v1539 = vpack.c.b16 %v1126, %v1119
    %v1540 = vpack.c.b16 %v1134, %v1127
    %v1541 = vpack.c.b16 %v1135, %v1128
    %v1542 = vpack.c.b16 %v1136, %v1129
    %v1543 = vpack.c.b16 %v1137, %v1130
    %v1544 = vpack.c.b16 %v1138, %v1131
    %v1545 = vpack.c.b16 %v1139, %v1132
    %v1546 = vpack.c.b16 %v1140, %v1133
    %v1547 = vpack.c.b16 %v1148, %v1141
    %v1548 = vpack.c.b16 %v1149, %v1142
    %v1549 = vpack.c.b16 %v1150, %v1143
    %v1550 = vpack.c.b16 %v1151, %v1144
    %v1551 = vpack.c.b16 %v1152, %v1145
    %v1552 = vpack.c.b16 %v1153, %v1146
    %v1553 = vpack.c.b16 %v1154, %v1147
    %v1554 = vpack.c.b16 %v1162, %v1155
    %v1555 = vpack.c.b16 %v1163, %v1156
    %v1556 = vpack.c.b16 %v1164, %v1157
    %v1557 = vpack.c.b16 %v1165, %v1158
    %v1558 = vpack.c.b16 %v1166, %v1159
    %v1559 = vpack.c.b16 %v1167, %v1160
    %v1560 = vpack.c.b16 %v1168, %v1161
    %v1561 = vpack.c.b16 %v1176, %v1169
    %v1562 = vpack.c.b16 %v1177, %v1170
    %v1563 = vpack.c.b16 %v1178, %v1171
    %v1564 = vpack.c.b16 %v1179, %v1172
    %v1565 = vpack.c.b16 %v1180, %v1173
    %v1566 = vpack.c.b16 %v1181, %v1174
    %v1567 = vpack.c.b16 %v1182, %v1175
    %v1568 = vpack.c.b16 %v1190, %v1183
    %v1569 = vpack.c.b16 %v1191, %v1184
    %v1570 = vpack.c.b16 %v1192, %v1185
    %v1571 = vpack.c.b16 %v1193, %v1186
    %v1572 = vpack.c.b16 %v1194, %v1187
    %v1573 = vpack.c.b16 %v1195, %v1188
    %v1574 = vpack.c.b16 %v1196, %v1189
    %v1575 = vpack.c.b16 %v1204, %v1197
    %v1576 = vpack.c.b16 %v1205, %v1198
    %v1577 = vpack.c.b16 %v1206, %v1199
    %v1578 = vpack.c.b16 %v1207, %v1200
    %v1579 = vpack.c.b16 %v1208, %v1201
    %v1580 = vpack.c.b16 %v1209, %v1202
    %v1581 = vpack.c.b16 %v1210, %v1203
    %v1582 = vpack.c.b16 %v1218, %v1211
    %v1583 = vpack.c.b16 %v1219, %v1212
    %v1584 = vpack.c.b16 %v1220, %v1213
    %v1585 = vpack.c.b16 %v1221, %v1214
    %v1586 = vpack.c.b16 %v1222, %v1215
    %v1587 = vpack.c.b16 %v1223, %v1216
    %v1588 = vpack.c.b16 %v1224, %v1217
    %v1589 = vpack.c.b16 %v1232, %v1225
    %v1590 = vpack.c.b16 %v1233, %v1226
    %v1591 = vpack.c.b16 %v1234, %v1227
    %v1592 = vpack.c.b16 %v1235, %v1228
    %v1593 = vpack.c.b16 %v1236, %v1229
    %v1594 = vpack.c.b16 %v1237, %v1230
    %v1595 = vpack.c.b16 %v1238, %v1231
    %v1596 = vpack.c.b16 %v1246, %v1239
    %v1597 = vpack.c.b16 %v1247, %v1240
    %v1598 = vpack.c.b16 %v1248, %v1241
    %v1599 = vpack.c.b16 %v1249, %v1242
    %v1600 = vpack.c.b16 %v1250, %v1243
    %v1601 = vpack.c.b16 %v1251, %v1244
    %v1602 = vpack.c.b16 %v1252, %v1245
    %v1603 = vpack.c.b16 %v1260, %v1253
    %v1604 = vpack.c.b16 %v1261, %v1254
    %v1605 = vpack.c.b16 %v1262, %v1255
    %v1606 = vpack.c.b16 %v1263, %v1256
    %v1607 = vpack.c.b16 %v1264, %v1257
    %v1608 = vpack.c.b16 %v1265, %v1258
    %v1609 = vpack.c.b16 %v1266, %v1259
    %v1610 = vpack.c.b16 %v1274, %v1267
    %v1611 = vpack.c.b16 %v1275, %v1268
    %v1612 = vpack.c.b16 %v1276, %v1269
    %v1613 = vpack.c.b16 %v1277, %v1270
    %v1614 = vpack.c.b16 %v1278, %v1271
    %v1615 = vpack.c.b16 %v1279, %v1272
    %v1616 = vpack.c.b16 %v1280, %v1273
    %v1617 = vpack.c.b16 %v1288, %v1281
    %v1618 = vpack.c.b16 %v1289, %v1282
    %v1619 = vpack.c.b16 %v1290, %v1283
    %v1620 = vpack.c.b16 %v1291, %v1284
    %v1621 = vpack.c.b16 %v1292, %v1285
    %v1622 = vpack.c.b16 %v1293, %v1286
    %v1623 = vpack.c.b16 %v1294, %v1287
    %v1624 = vpack.c.b16 %v1302, %v1295
    %v1625 = vpack.c.b16 %v1303, %v1296
    %v1626 = vpack.c.b16 %v1304, %v1297
    %v1627 = vpack.c.b16 %v1305, %v1298
    %v1628 = vpack.c.b16 %v1306, %v1299
    %v1629 = vpack.c.b16 %v1307, %v1300
    %v1630 = vpack.c.b16 %v1308, %v1301
    %v1631 = vpack.c.b16 %v1316, %v1309
    %v1632 = vpack.c.b16 %v1317, %v1310
    %v1633 = vpack.c.b16 %v1318, %v1311
    %v1634 = vpack.c.b16 %v1319, %v1312
    %v1635 = vpack.c.b16 %v1320, %v1313
    %v1636 = vpack.c.b16 %v1321, %v1314
    %v1637 = vpack.c.b16 %v1322, %v1315
    %v1638 = vpack.c.b16 %v1330, %v1323
    %v1639 = vpack.c.b16 %v1331, %v1324
    %v1640 = vpack.c.b16 %v1332, %v1325
    %v1641 = vpack.c.b16 %v1333, %v1326
    %v1642 = vpack.c.b16 %v1334, %v1327
    %v1643 = vpack.c.b16 %v1335, %v1328
    %v1644 = vpack.c.b16 %v1336, %v1329
    %v1645 = vpack.c.b16 %v1344, %v1337
    %v1646 = vpack.c.b16 %v1345, %v1338
    %v1647 = vpack.c.b16 %v1346, %v1339
    %v1648 = vpack.c.b16 %v1347, %v1340
    %v1649 = vpack.c.b16 %v1348, %v1341
    %v1650 = vpack.c.b16 %v1349, %v1342
    %v1651 = vpack.c.b16 %v1350, %v1343
    %v1652 = vpack.c.b16 %v1358, %v1351
    %v1653 = vpack.c.b16 %v1359, %v1352
    %v1654 = vpack.c.b16 %v1360, %v1353
    %v1655 = vpack.c.b16 %v1361, %v1354
    %v1656 = vpack.c.b16 %v1362, %v1355
    %v1657 = vpack.c.b16 %v1363, %v1356
    %v1658 = vpack.c.b16 %v1364, %v1357
    %v1659 = vpack.c.b16 %v1372, %v1365
    %v1660 = vpack.c.b16 %v1373, %v1366
    %v1661 = vpack.c.b16 %v1374, %v1367
    %v1662 = vpack.c.b16 %v1375, %v1368
    %v1663 = vpack.c.b16 %v1376, %v1369
    %v1664 = vpack.c.b16 %v1377, %v1370
    %v1665 = vpack.c.b16 %v1378, %v1371
    %v1666 = vpack.c.b16 %v1386, %v1379
    %v1667 = vpack.c.b16 %v1387, %v1380
    %v1668 = vpack.c.b16 %v1388, %v1381
    %v1669 = vpack.c.b16 %v1389, %v1382
    %v1670 = vpack.c.b16 %v1390, %v1383
    %v1671 = vpack.c.b16 %v1391, %v1384
    %v1672 = vpack.c.b16 %v1392, %v1385
    %v1673 = vpack.c.b16 %v1400, %v1393
    %v1674 = vpack.c.b16 %v1401, %v1394
    %v1675 = vpack.c.b16 %v1402, %v1395
    %v1676 = vpack.c.b16 %v1403, %v1396
    %v1677 = vpack.c.b16 %v1404, %v1397
    %v1678 = vpack.c.b16 %v1405, %v1398
    %v1679 = vpack.c.b16 %v1406, %v1399
    %v1680 = vpack.c.b16 %v1414, %v1407
    %v1681 = vpack.c.b16 %v1415, %v1408
    %v1682 = vpack.c.b16 %v1416, %v1409
    %v1683 = vpack.c.b16 %v1417, %v1410
    %v1684 = vpack.c.b16 %v1418, %v1411
    %v1685 = vpack.c.b16 %v1419, %v1412
    %v1686 = vpack.c.b16 %v1420, %v1413
    %v1687 = vpack.c.b16 %v1428, %v1421
    %v1688 = vpack.c.b16 %v1429, %v1422
    %v1689 = vpack.c.b16 %v1430, %v1423
    %v1690 = vpack.c.b16 %v1431, %v1424
    %v1691 = vpack.c.b16 %v1432, %v1425
    %v1692 = vpack.c.b16 %v1433, %v1426
    %v1693 = vpack.c.b16 %v1434, %v1427
    %v1694 = vpack.c.b16 %v1442, %v1435
    %v1695 = vpack.c.b16 %v1443, %v1436
    %v1696 = vpack.c.b16 %v1444, %v1437
    %v1697 = vpack.c.b16 %v1445, %v1438
    %v1698 = vpack.c.b16 %v1446, %v1439
    %v1699 = vpack.c.b16 %v1447, %v1440
    %v1700 = vpack.c.b16 %v1448, %v1441
    %v1701 = vpack.c.b16 %v1456, %v1449
    %v1702 = vpack.c.b16 %v1457, %v1450
    %v1703 = vpack.c.b16 %v1458, %v1451
    %v1704 = vpack.c.b16 %v1459, %v1452
    %v1705 = vpack.c.b16 %v1460, %v1453
    %v1706 = vpack.c.b16 %v1461, %v1454
    %v1707 = vpack.c.b16 %v1462, %v1455
    %v1708 = vpack.c.b16 %v1470, %v1463
    %v1709 = vpack.c.b16 %v1471, %v1464
    %v1710 = vpack.c.b16 %v1472, %v1465
    %v1711 = vpack.c.b16 %v1473, %v1466
    %v1712 = vpack.c.b16 %v1474, %v1467
    %v1713 = vpack.c.b16 %v1475, %v1468
    %v1714 = vpack.c.b16 %v1476, %v1469
    %v1715 = vpack.c.b16 %v1484, %v1477
    %v1716 = vpack.c.b16 %v1485, %v1478
    %v1717 = vpack.c.b16 %v1486, %v1479
    %v1718 = vpack.c.b16 %v1487, %v1480
    %v1719 = vpack.c.b16 %v1488, %v1481
    %v1720 = vpack.c.b16 %v1489, %v1482
    %v1721 = vpack.c.b16 %v1490, %v1483
    %v1722 = vpack.c.b16 %v1498, %v1491
    %v1723 = vpack.c.b16 %v1499, %v1492
    %v1724 = vpack.c.b16 %v1500, %v1493
    %v1725 = vpack.c.b16 %v1501, %v1494
    %v1726 = vpack.c.b16 %v1502, %v1495
    %v1727 = vpack.c.b16 %v1503, %v1496
    %v1728 = vpack.c.b16 %v1504, %v1497
    %v2065 = vunpack.c.l.b16 %v49
    %v2066 = vunpack.c.l.b16 %v50
    %v2067 = vunpack.c.l.b16 %v51
    %v2068 = vunpack.c.l.b16 %v52
    %v2069 = vunpack.c.l.b16 %v53
    %v2070 = vunpack.c.l.b16 %v54
    %v2071 = vunpack.c.l.b16 %v55
    %v2072 = vunpack.c.l.b16 %v56
    %v2073 = vunpack.c.l.b16 %v57
    %v2074 = vunpack.c.l.b16 %v58
    %v2075 = vunpack.c.l.b16 %v59
    %v2076 = vunpack.c.l.b16 %v60
    %v2077 = vunpack.c.l.b16 %v61
    %v2078 = vunpack.c.l.b16 %v62
    %v2079 = vunpack.c.l.b16 %v63
    %v2080 = vunpack.c.l.b16 %v64
    %v2081 = vunpack.c.l.b16 %v65
    %v2082 = vunpack.c.l.b16 %v66
    %v2083 = vunpack.c.l.b16 %v67
    %v2084 = vunpack.c.l.b16 %v68
    %v2085 = vunpack.c.l.b16 %v69
    %v2086 = vunpack.c.l.b16 %v70
    %v2087 = vunpack.c.l.b16 %v71
    %v2088 = vunpack.c.l.b16 %v72
    %v2089 = vunpack.c.l.b16 %v73
    %v2090 = vunpack.c.l.b16 %v74
    %v2091 = vunpack.c.l.b16 %v75
    %v2092 = vunpack.c.l.b16 %v76
    %v2093 = vunpack.c.l.b16 %v77
    %v2094 = vunpack.c.l.b16 %v78
    %v2095 = vunpack.c.l.b16 %v79
    %v2096 = vunpack.c.l.b16 %v80
    %v2097 = vunpack.c.l.b16 %v81
    %v2098 = vunpack.c.l.b16 %v82
    %v2099 = vunpack.c.l.b16 %v83
    %v2100 = vunpack.c.l.b16 %v84
    %v2101 = vunpack.c.l.b16 %v85
    %v2102 = vunpack.c.l.b16 %v86
    %v2103 = vunpack.c.l.b16 %v87
    %v2104 = vunpack.c.l.b16 %v88
    %v2105 = vunpack.c.l.b16 %v89
    %v2106 = vunpack.c.l.b16 %v90
    %v2107 = vunpack.c.l.b16 %v91
    %v2108 = vunpack.c.l.b16 %v92
    %v2109 = vunpack.c.l.b16 %v93
    %v2110 = vunpack.c.l.b16 %v94
    %v2111 = vunpack.c.l.b16 %v95
    %v2112 = vunpack.c.l.b16 %v96
    %v2113 = vunpack.c.l.b16 %v97
    %v2114 = vunpack.c.l.b16 %v98
    %v2115 = vunpack.c.l.b16 %v99
    %v2116 = vunpack.c.l.b16 %v100
    %v2117 = vunpack.c.l.b16 %v101
    %v2118 = vunpack.c.l.b16 %v102
    %v2119 = vunpack.c.l.b16 %v103
    %v2120 = vunpack.c.l.b16 %v104
    %v2121 = vunpack.c.l.b16 %v105
    %v2122 = vunpack.c.l.b16 %v106
    %v2123 = vunpack.c.l.b16 %v107
    %v2124 = vunpack.c.l.b16 %v108
    %v2125 = vunpack.c.l.b16 %v109
    %v2126 = vunpack.c.l.b16 %v110
    %v2127 = vunpack.c.l.b16 %v111
    %v2128 = vunpack.c.l.b16 %v112
    %v2129 = vunpack.c.l.b16 %v113
    %v2130 = vunpack.c.l.b16 %v114
    %v2131 = vunpack.c.l.b16 %v115
    %v2132 = vunpack.c.l.b16 %v116
    %v2133 = vunpack.c.l.b16 %v117
    %v2134 = vunpack.c.l.b16 %v118
    %v2135 = vunpack.c.l.b16 %v119
    %v2136 = vunpack.c.l.b16 %v120
    %v2137 = vunpack.c.l.b16 %v121
    %v2138 = vunpack.c.l.b16 %v122
    %v2139 = vunpack.c.l.b16 %v123
    %v2140 = vunpack.c.l.b16 %v124
    %v2141 = vunpack.c.l.b16 %v125
    %v2142 = vunpack.c.l.b16 %v126
    %v2143 = vunpack.c.l.b16 %v127
    %v2144 = vunpack.c.l.b16 %v128
    %v2145 = vunpack.c.l.b16 %v129
    %v2146 = vunpack.c.l.b16 %v130
    %v2147 = vunpack.c.l.b16 %v131
    %v2148 = vunpack.c.l.b16 %v132
    %v2149 = vunpack.c.l.b16 %v133
    %v2150 = vunpack.c.l.b16 %v134
    %v2151 = vunpack.c.l.b16 %v135
    %v2152 = vunpack.c.l.b16 %v136
    %v2153 = vunpack.c.l.b16 %v137
    %v2154 = vunpack.c.l.b16 %v138
    %v2155 = vunpack.c.l.b16 %v139
    %v2156 = vunpack.c.l.b16 %v140
    %v2157 = vunpack.c.l.b16 %v141
    %v2158 = vunpack.c.l.b16 %v142
    %v2159 = vunpack.c.l.b16 %v143
    %v2160 = vunpack.c.l.b16 %v144
    %v2161 = vunpack.c.l.b16 %v145
    %v2162 = vunpack.c.l.b16 %v146
    %v2163 = vunpack.c.l.b16 %v147
    %v2164 = vunpack.c.l.b16 %v148
    %v2165 = vunpack.c.l.b16 %v149
    %v2166 = vunpack.c.l.b16 %v150
    %v2167 = vunpack.c.l.b16 %v151
    %v2168 = vunpack.c.l.b16 %v152
    %v2169 = vunpack.c.l.b16 %v153
    %v2170 = vunpack.c.l.b16 %v154
    %v2171 = vunpack.c.l.b16 %v155
    %v2172 = vunpack.c.l.b16 %v156
    %v2173 = vunpack.c.l.b16 %v157
    %v2174 = vunpack.c.l.b16 %v158
    %v2175 = vunpack.c.l.b16 %v159
    %v2176 = vunpack.c.l.b16 %v160
    %v2177 = vpack.c.b16 %v2066, %v2065
    %v2178 = vpack.c.b16 %v2068, %v2067
    %v2179 = vpack.c.b16 %v2070, %v2069
    %v2180 = vpack.c.b16 %v2072, %v2071
    %v2181 = vpack.c.b16 %v2074, %v2073
    %v2182 = vpack.c.b16 %v2076, %v2075
    %v2183 = vpack.c.b16 %v2078, %v2077
    %v2184 = vpack.c.b16 %v2080, %v2079
    %v2185 = vpack.c.b16 %v2082, %v2081
    %v2186 = vpack.c.b16 %v2084, %v2083
    %v2187 = vpack.c.b16 %v2086, %v2085
    %v2188 = vpack.c.b16 %v2088, %v2087
    %v2189 = vpack.c.b16 %v2090, %v2089
    %v2190 = vpack.c.b16 %v2092, %v2091
    %v2191 = vpack.c.b16 %v2094, %v2093
    %v2192 = vpack.c.b16 %v2096, %v2095
    %v2193 = vpack.c.b16 %v2098, %v2097
    %v2194 = vpack.c.b16 %v2100, %v2099
    %v2195 = vpack.c.b16 %v2102, %v2101
    %v2196 = vpack.c.b16 %v2104, %v2103
    %v2197 = vpack.c.b16 %v2106, %v2105
    %v2198 = vpack.c.b16 %v2108, %v2107
    %v2199 = vpack.c.b16 %v2110, %v2109
    %v2200 = vpack.c.b16 %v2112, %v2111
    %v2201 = vpack.c.b16 %v2114, %v2113
    %v2202 = vpack.c.b16 %v2116, %v2115
    %v2203 = vpack.c.b16 %v2118, %v2117
    %v2204 = vpack.c.b16 %v2120, %v2119
    %v2205 = vpack.c.b16 %v2122, %v2121
    %v2206 = vpack.c.b16 %v2124, %v2123
    %v2207 = vpack.c.b16 %v2126, %v2125
    %v2208 = vpack.c.b16 %v2128, %v2127
    %v2209 = vpack.c.b16 %v2130, %v2129
    %v2210 = vpack.c.b16 %v2132, %v2131
    %v2211 = vpack.c.b16 %v2134, %v2133
    %v2212 = vpack.c.b16 %v2136, %v2135
    %v2213 = vpack.c.b16 %v2138, %v2137
    %v2214 = vpack.c.b16 %v2140, %v2139
    %v2215 = vpack.c.b16 %v2142, %v2141
    %v2216 = vpack.c.b16 %v2144, %v2143
    %v2217 = vpack.c.b16 %v2146, %v2145
    %v2218 = vpack.c.b16 %v2148, %v2147
    %v2219 = vpack.c.b16 %v2150, %v2149
    %v2220 = vpack.c.b16 %v2152, %v2151
    %v2221 = vpack.c.b16 %v2154, %v2153
    %v2222 = vpack.c.b16 %v2156, %v2155
    %v2223 = vpack.c.b16 %v2158, %v2157
    %v2224 = vpack.c.b16 %v2160, %v2159
    %v2225 = vpack.c.b16 %v2162, %v2161
    %v2226 = vpack.c.b16 %v2164, %v2163
    %v2227 = vpack.c.b16 %v2166, %v2165
    %v2228 = vpack.c.b16 %v2168, %v2167
    %v2229 = vpack.c.b16 %v2170, %v2169
    %v2230 = vpack.c.b16 %v2172, %v2171
    %v2231 = vpack.c.b16 %v2174, %v2173
    %v2232 = vpack.c.b16 %v2176, %v2175
    %2289 = vmatprep.subr.bf16.mxu0 0
    %2290 = vmatpush1.bf16.msra.mxu0 %v2177
    %2291 = vmatprep.subr.bf16.mxu0 0
    %2292 = vmatpush1.bf16.msra.mxu0 %v2178
    %2293 = vmatprep.subr.bf16.mxu0 0
    %2294 = vmatpush1.bf16.msra.mxu0 %v2179
    %2295 = vmatprep.subr.bf16.mxu0 0
    %2296 = vmatpush1.bf16.msra.mxu0 %v2180
    %2297 = vmatprep.subr.bf16.mxu0 0
    %2298 = vmatpush1.bf16.msra.mxu0 %v2181
    %2299 = vmatprep.subr.bf16.mxu0 0
    %2300 = vmatpush1.bf16.msra.mxu0 %v2182
    %2301 = vmatprep.subr.bf16.mxu0 0
    %2302 = vmatpush1.bf16.msra.mxu0 %v2183
    %2303 = vmatprep.subr.bf16.mxu0 0
    %2304 = vmatpush1.bf16.msra.mxu0 %v2184
    %2305 = vmatprep.subr.bf16.mxu0 0
    %2306 = vmatpush1.bf16.msra.mxu0 %v2185
    %2307 = vmatprep.subr.bf16.mxu0 0
    %2308 = vmatpush1.bf16.msra.mxu0 %v2186
    %2309 = vmatprep.subr.bf16.mxu0 0
    %2310 = vmatpush1.bf16.msra.mxu0 %v2187
    %2311 = vmatprep.subr.bf16.mxu0 0
    %2312 = vmatpush1.bf16.msra.mxu0 %v2188
    %2313 = vmatprep.subr.bf16.mxu0 0
    %2314 = vmatpush1.bf16.msra.mxu0 %v2189
    %2315 = vmatprep.subr.bf16.mxu0 0
    %2316 = vmatpush1.bf16.msra.mxu0 %v2190
    %2317 = vmatprep.subr.bf16.mxu0 0
    %2318 = vmatpush1.bf16.msra.mxu0 %v2191
    %2319 = vmatprep.subr.bf16.mxu0 0
    %2320 = vmatpush1.bf16.msra.mxu0 %v2192
    %2321 = vmatprep.mubr.bf16.mxu0 %v1506
    %2322 = vmatmul.mubr.bf16.gmra.mrb[0].mxu0 %v1505
    %v2323 = vpop.f32.mrb[0].mxu0
    %v2324 = vadd.f32 %v484, %v2323
    %v2325 = vpop.f32.mrb[0].mxu0
    %v2326 = vpop.f32.mrb[0].mxu0
    %v2327 = vadd.f32 %v489, %v2326
    %v2328 = vpop.f32.mrb[0].mxu0
    %2329 = vmatprep.mubr.bf16.mxu0 %v1513
    %2330 = vmatmul.mubr.bf16.gmra.mrb[0].mxu0 %v1512
    %v2331 = vpop.f32.mrb[0].mxu0
    %v2332 = vadd.f32 %v494, %v2331
    %v2333 = vpop.f32.mrb[0].mxu0
    %v2334 = vpop.f32.mrb[0].mxu0
    %v2335 = vadd.f32 %v499, %v2334
    %v2336 = vpop.f32.mrb[0].mxu0
    %2337 = vmatprep.mubr.bf16.mxu0 %v1520
    %2338 = vmatmul.mubr.bf16.gmra.mrb[0].mxu0 %v1519
    %v2339 = vpop.f32.mrb[0].mxu0
    %v2340 = vadd.f32 %v504, %v2339
    %v2341 = vpop.f32.mrb[0].mxu0
    %v2342 = vpop.f32.mrb[0].mxu0
    %v2343 = vadd.f32 %v509, %v2342
    %v2344 = vpop.f32.mrb[0].mxu0
    %2345 = vmatprep.mubr.bf16.mxu0 %v1527
    %2346 = vmatmul.mubr.bf16.gmra.mrb[0].mxu0 %v1526
    %v2347 = vpop.f32.mrb[0].mxu0
    %v2348 = vadd.f32 %v514, %v2347
    %v2349 = vpop.f32.mrb[0].mxu0
    %v2350 = vpop.f32.mrb[0].mxu0
    %v2351 = vadd.f32 %v519, %v2350
    %v2352 = vpop.f32.mrb[0].mxu0
    %2353 = vmatprep.mubr.bf16.mxu0 %v1534
    %2354 = vmatmul.mubr.bf16.gmra.mrb[0].mxu0 %v1533
    %v2355 = vpop.f32.mrb[0].mxu0
    %v2356 = vadd.f32 %v524, %v2355
    %v2357 = vpop.f32.mrb[0].mxu0
    %v2358 = vpop.f32.mrb[0].mxu0
    %v2359 = vadd.f32 %v529, %v2358
    %v2360 = vpop.f32.mrb[0].mxu0
    %2361 = vmatprep.mubr.bf16.mxu0 %v1541
    %2362 = vmatmul.mubr.bf16.gmra.mrb[0].mxu0 %v1540
    %v2363 = vpop.f32.mrb[0].mxu0
    %v2364 = vadd.f32 %v534, %v2363
    %v2365 = vpop.f32.mrb[0].mxu0
    %v2366 = vpop.f32.mrb[0].mxu0
    %v2367 = vadd.f32 %v539, %v2366
    %v2368 = vpop.f32.mrb[0].mxu0
    %2369 = vmatprep.mubr.bf16.mxu0 %v1548
    %2370 = vmatmul.mubr.bf16.gmra.mrb[0].mxu0 %v1547
    %v2371 = vpop.f32.mrb[0].mxu0
    %v2372 = vadd.f32 %v544, %v2371
    %v2373 = vpop.f32.mrb[0].mxu0
    %v2374 = vpop.f32.mrb[0].mxu0
    %v2375 = vadd.f32 %v549, %v2374
    %v2376 = vpop.f32.mrb[0].mxu0
    %2377 = vmatprep.mubr.bf16.mxu0 %v1555
    %2378 = vmatmul.mubr.bf16.gmra.mrb[0].mxu0 %v1554
    %v2379 = vpop.f32.mrb[0].mxu0
    %v2380 = vadd.f32 %v554, %v2379
    %v2381 = vpop.f32.mrb[0].mxu0
    %v2382 = vpop.f32.mrb[0].mxu0
    %v2383 = vadd.f32 %v559, %v2382
    %v2384 = vpop.f32.mrb[0].mxu0
    %2385 = vmatprep.mubr.bf16.mxu0 %v1562
    %2386 = vmatmul.mubr.bf16.gmra.mrb[0].mxu0 %v1561
    %v2387 = vpop.f32.mrb[0].mxu0
    %v2388 = vadd.f32 %v564, %v2387
    %v2389 = vpop.f32.mrb[0].mxu0
    %v2390 = vpop.f32.mrb[0].mxu0
    %v2391 = vadd.f32 %v569, %v2390
    %v2392 = vpop.f32.mrb[0].mxu0
    %2393 = vmatprep.mubr.bf16.mxu0 %v1569
    %2394 = vmatmul.mubr.bf16.gmra.mrb[0].mxu0 %v1568
    %v2395 = vpop.f32.mrb[0].mxu0
    %v2396 = vadd.f32 %v574, %v2395
    %v2397 = vpop.f32.mrb[0].mxu0
    %v2398 = vpop.f32.mrb[0].mxu0
    %v2399 = vadd.f32 %v579, %v2398
    %v2400 = vpop.f32.mrb[0].mxu0
    %2401 = vmatprep.mubr.bf16.mxu0 %v1576
    %2402 = vmatmul.mubr.bf16.gmra.mrb[0].mxu0 %v1575
    %v2403 = vpop.f32.mrb[0].mxu0
    %v2404 = vadd.f32 %v584, %v2403
    %v2405 = vpop.f32.mrb[0].mxu0
    %v2406 = vpop.f32.mrb[0].mxu0
    %v2407 = vadd.f32 %v589, %v2406
    %v2408 = vpop.f32.mrb[0].mxu0
    %2409 = vmatprep.mubr.bf16.mxu0 %v1583
    %2410 = vmatmul.mubr.bf16.gmra.mrb[0].mxu0 %v1582
    %v2411 = vpop.f32.mrb[0].mxu0
    %v2412 = vadd.f32 %v594, %v2411
    %v2413 = vpop.f32.mrb[0].mxu0
    %v2414 = vpop.f32.mrb[0].mxu0
    %v2415 = vadd.f32 %v599, %v2414
    %v2416 = vpop.f32.mrb[0].mxu0
    %2417 = vmatprep.mubr.bf16.mxu0 %v1590
    %2418 = vmatmul.mubr.bf16.gmra.mrb[0].mxu0 %v1589
    %v2419 = vpop.f32.mrb[0].mxu0
    %v2420 = vadd.f32 %v604, %v2419
    %v2421 = vpop.f32.mrb[0].mxu0
    %v2422 = vpop.f32.mrb[0].mxu0
    %v2423 = vadd.f32 %v609, %v2422
    %v2424 = vpop.f32.mrb[0].mxu0
    %2425 = vmatprep.mubr.bf16.mxu0 %v1597
    %2426 = vmatmul.mubr.bf16.gmra.mrb[0].mxu0 %v1596
    %v2427 = vpop.f32.mrb[0].mxu0
    %v2428 = vadd.f32 %v614, %v2427
    %v2429 = vpop.f32.mrb[0].mxu0
    %v2430 = vpop.f32.mrb[0].mxu0
    %v2431 = vadd.f32 %v619, %v2430
    %v2432 = vpop.f32.mrb[0].mxu0
    %2433 = vmatprep.mubr.bf16.mxu0 %v1604
    %2434 = vmatmul.mubr.bf16.gmra.mrb[0].mxu0 %v1603
    %v2435 = vpop.f32.mrb[0].mxu0
    %v2436 = vadd.f32 %v624, %v2435
    %v2437 = vpop.f32.mrb[0].mxu0
    %v2438 = vpop.f32.mrb[0].mxu0
    %v2439 = vadd.f32 %v629, %v2438
    %v2440 = vpop.f32.mrb[0].mxu0
    %2441 = vmatprep.mubr.bf16.mxu0 %v1611
    %2442 = vmatmul.mubr.bf16.gmra.mrb[0].mxu0 %v1610
    %v2443 = vpop.f32.mrb[0].mxu0
    %v2444 = vadd.f32 %v634, %v2443
    %v2445 = vpop.f32.mrb[0].mxu0
    %v2446 = vpop.f32.mrb[0].mxu0
    %v2447 = vadd.f32 %v639, %v2446
    %v2448 = vpop.f32.mrb[0].mxu0
    %2449 = vmatprep.mubr.bf16.mxu0 %v1618
    %2450 = vmatmul.mubr.bf16.gmra.mrb[0].mxu0 %v1617
    %v2451 = vpop.f32.mrb[0].mxu0
    %v2452 = vadd.f32 %v644, %v2451
    %v2453 = vpop.f32.mrb[0].mxu0
    %v2454 = vpop.f32.mrb[0].mxu0
    %v2455 = vadd.f32 %v649, %v2454
    %v2456 = vpop.f32.mrb[0].mxu0
    %2457 = vmatprep.mubr.bf16.mxu0 %v1625
    %2458 = vmatmul.mubr.bf16.gmra.mrb[0].mxu0 %v1624
    %v2459 = vpop.f32.mrb[0].mxu0
    %v2460 = vadd.f32 %v654, %v2459
    %v2461 = vpop.f32.mrb[0].mxu0
    %v2462 = vpop.f32.mrb[0].mxu0
    %v2463 = vadd.f32 %v659, %v2462
    %v2464 = vpop.f32.mrb[0].mxu0
    %2465 = vmatprep.mubr.bf16.mxu0 %v1632
    %2466 = vmatmul.mubr.bf16.gmra.mrb[0].mxu0 %v1631
    %v2467 = vpop.f32.mrb[0].mxu0
    %v2468 = vadd.f32 %v664, %v2467
    %v2469 = vpop.f32.mrb[0].mxu0
    %v2470 = vpop.f32.mrb[0].mxu0
    %v2471 = vadd.f32 %v669, %v2470
    %v2472 = vpop.f32.mrb[0].mxu0
    %2473 = vmatprep.mubr.bf16.mxu0 %v1639
    %2474 = vmatmul.mubr.bf16.gmra.mrb[0].mxu0 %v1638
    %v2475 = vpop.f32.mrb[0].mxu0
    %v2476 = vadd.f32 %v674, %v2475
    %v2477 = vpop.f32.mrb[0].mxu0
    %v2478 = vpop.f32.mrb[0].mxu0
    %v2479 = vadd.f32 %v679, %v2478
    %v2480 = vpop.f32.mrb[0].mxu0
    %2481 = vmatprep.mubr.bf16.mxu0 %v1646
    %2482 = vmatmul.mubr.bf16.gmra.mrb[0].mxu0 %v1645
    %v2483 = vpop.f32.mrb[0].mxu0
    %v2484 = vadd.f32 %v684, %v2483
    %v2485 = vpop.f32.mrb[0].mxu0
    %v2486 = vpop.f32.mrb[0].mxu0
    %v2487 = vadd.f32 %v689, %v2486
    %v2488 = vpop.f32.mrb[0].mxu0
    %2489 = vmatprep.mubr.bf16.mxu0 %v1653
    %2490 = vmatmul.mubr.bf16.gmra.mrb[0].mxu0 %v1652
    %v2491 = vpop.f32.mrb[0].mxu0
    %v2492 = vadd.f32 %v694, %v2491
    %v2493 = vpop.f32.mrb[0].mxu0
    %v2494 = vpop.f32.mrb[0].mxu0
    %v2495 = vadd.f32 %v699, %v2494
    %v2496 = vpop.f32.mrb[0].mxu0
    %2497 = vmatprep.mubr.bf16.mxu0 %v1660
    %2498 = vmatmul.mubr.bf16.gmra.mrb[0].mxu0 %v1659
    %v2499 = vpop.f32.mrb[0].mxu0
    %v2500 = vadd.f32 %v704, %v2499
    %v2501 = vpop.f32.mrb[0].mxu0
    %v2502 = vpop.f32.mrb[0].mxu0
    %v2503 = vadd.f32 %v709, %v2502
    %v2504 = vpop.f32.mrb[0].mxu0
    %2505 = vmatprep.mubr.bf16.mxu0 %v1667
    %2506 = vmatmul.mubr.bf16.gmra.mrb[0].mxu0 %v1666
    %v2507 = vpop.f32.mrb[0].mxu0
    %v2508 = vadd.f32 %v714, %v2507
    %v2509 = vpop.f32.mrb[0].mxu0
    %v2510 = vpop.f32.mrb[0].mxu0
    %v2511 = vadd.f32 %v719, %v2510
    %v2512 = vpop.f32.mrb[0].mxu0
    %2513 = vmatprep.mubr.bf16.mxu0 %v1674
    %2514 = vmatmul.mubr.bf16.gmra.mrb[0].mxu0 %v1673
    %v2515 = vpop.f32.mrb[0].mxu0
    %v2516 = vadd.f32 %v724, %v2515
    %v2517 = vpop.f32.mrb[0].mxu0
    %v2518 = vpop.f32.mrb[0].mxu0
    %v2519 = vadd.f32 %v729, %v2518
    %v2520 = vpop.f32.mrb[0].mxu0
    %2521 = vmatprep.mubr.bf16.mxu0 %v1681
    %2522 = vmatmul.mubr.bf16.gmra.mrb[0].mxu0 %v1680
    %v2523 = vpop.f32.mrb[0].mxu0
    %v2524 = vadd.f32 %v734, %v2523
    %v2525 = vpop.f32.mrb[0].mxu0
    %v2526 = vpop.f32.mrb[0].mxu0
    %v2527 = vadd.f32 %v739, %v2526
    %v2528 = vpop.f32.mrb[0].mxu0
    %2529 = vmatprep.mubr.bf16.mxu0 %v1688
    %2530 = vmatmul.mubr.bf16.gmra.mrb[0].mxu0 %v1687
    %v2531 = vpop.f32.mrb[0].mxu0
    %v2532 = vadd.f32 %v744, %v2531
    %v2533 = vpop.f32.mrb[0].mxu0
    %v2534 = vpop.f32.mrb[0].mxu0
    %v2535 = vadd.f32 %v749, %v2534
    %v2536 = vpop.f32.mrb[0].mxu0
    %2537 = vmatprep.mubr.bf16.mxu0 %v1695
    %2538 = vmatmul.mubr.bf16.gmra.mrb[0].mxu0 %v1694
    %v2539 = vpop.f32.mrb[0].mxu0
    %v2540 = vadd.f32 %v754, %v2539
    %v2541 = vpop.f32.mrb[0].mxu0
    %v2542 = vpop.f32.mrb[0].mxu0
    %v2543 = vadd.f32 %v759, %v2542
    %v2544 = vpop.f32.mrb[0].mxu0
    %2545 = vmatprep.mubr.bf16.mxu0 %v1702
    %2546 = vmatmul.mubr.bf16.gmra.mrb[0].mxu0 %v1701
    %v2547 = vpop.f32.mrb[0].mxu0
    %v2548 = vadd.f32 %v764, %v2547
    %v2549 = vpop.f32.mrb[0].mxu0
    %v2550 = vpop.f32.mrb[0].mxu0
    %v2551 = vadd.f32 %v769, %v2550
    %v2552 = vpop.f32.mrb[0].mxu0
    %2553 = vmatprep.mubr.bf16.mxu0 %v1709
    %2554 = vmatmul.mubr.bf16.gmra.mrb[0].mxu0 %v1708
    %v2555 = vpop.f32.mrb[0].mxu0
    %v2556 = vadd.f32 %v774, %v2555
    %v2557 = vpop.f32.mrb[0].mxu0
    %v2558 = vpop.f32.mrb[0].mxu0
    %v2559 = vadd.f32 %v779, %v2558
    %v2560 = vpop.f32.mrb[0].mxu0
    %2561 = vmatprep.mubr.bf16.mxu0 %v1716
    %2562 = vmatmul.mubr.bf16.gmra.mrb[0].mxu0 %v1715
    %v2563 = vpop.f32.mrb[0].mxu0
    %v2564 = vadd.f32 %v784, %v2563
    %v2565 = vpop.f32.mrb[0].mxu0
    %v2566 = vpop.f32.mrb[0].mxu0
    %v2567 = vadd.f32 %v789, %v2566
    %v2568 = vpop.f32.mrb[0].mxu0
    %2569 = vmatprep.mubr.bf16.mxu0 %v1723
    %2570 = vmatmul.mubr.bf16.gmra.mrb[0].mxu0 %v1722
    %v2571 = vpop.f32.mrb[0].mxu0
    %v2572 = vadd.f32 %v794, %v2571
    %v2573 = vpop.f32.mrb[0].mxu0
    %v2574 = vpop.f32.mrb[0].mxu0
    %v2575 = vadd.f32 %v799, %v2574
    %v2576 = vpop.f32.mrb[0].mxu0
    %2577 = vdwg.mxu0
    %2578 = vmatprep.subr.bf16.mxu0 0
    %2579 = vmatpush1.bf16.msra.mxu0 %v2193
    %2580 = vmatprep.subr.bf16.mxu0 0
    %2581 = vmatpush1.bf16.msra.mxu0 %v2194
    %2582 = vmatprep.subr.bf16.mxu0 0
    %2583 = vmatpush1.bf16.msra.mxu0 %v2195
    %2584 = vmatprep.subr.bf16.mxu0 0
    %2585 = vmatpush1.bf16.msra.mxu0 %v2196
    %2586 = vmatprep.subr.bf16.mxu0 0
    %2587 = vmatpush1.bf16.msra.mxu0 %v2197
    %2588 = vmatprep.subr.bf16.mxu0 0
    %2589 = vmatpush1.bf16.msra.mxu0 %v2198
    %2590 = vmatprep.subr.bf16.mxu0 0
    %2591 = vmatpush1.bf16.msra.mxu0 %v2199
    %2592 = vmatprep.subr.bf16.mxu0 0
    %2593 = vmatpush1.bf16.msra.mxu0 %v2200
    %2594 = vmatprep.subr.bf16.mxu0 0
    %2595 = vmatpush1.bf16.msra.mxu0 %v2201
    %2596 = vmatprep.subr.bf16.mxu0 0
    %2597 = vmatpush1.bf16.msra.mxu0 %v2202
    %2598 = vmatprep.subr.bf16.mxu0 0
    %2599 = vmatpush1.bf16.msra.mxu0 %v2203
    %2600 = vmatprep.subr.bf16.mxu0 0
    %2601 = vmatpush1.bf16.msra.mxu0 %v2204
    %2602 = vmatprep.subr.bf16.mxu0 0
    %2603 = vmatpush1.bf16.msra.mxu0 %v2205
    %2604 = vmatprep.subr.bf16.mxu0 0
    %2605 = vmatpush1.bf16.msra.mxu0 %v2206
    %2606 = vmatprep.subr.bf16.mxu0 0
    %2607 = vmatpush1.bf16.msra.mxu0 %v2207
    %2608 = vmatprep.subr.bf16.mxu0 0
    %2609 = vmatpush1.bf16.msra.mxu0 %v2208
    %2610 = vmatprep.mubr.bf16.mxu0 %v1508
    %2611 = vmatmul.mubr.bf16.gmra.mrb[0].mxu0 %v1507
    %v2612 = vpop.f32.mrb[0].mxu0
    %v2613 = vadd.f32 %v2324, %v2612
    %v2614 = vpop.f32.mrb[0].mxu0
    %v2615 = vpop.f32.mrb[0].mxu0
    %v2616 = vadd.f32 %v2327, %v2615
    %v2617 = vpop.f32.mrb[0].mxu0
    %2618 = vmatprep.mubr.bf16.mxu0 %v1515
    %2619 = vmatmul.mubr.bf16.gmra.mrb[0].mxu0 %v1514
    %v2620 = vpop.f32.mrb[0].mxu0
    %v2621 = vadd.f32 %v2332, %v2620
    %v2622 = vpop.f32.mrb[0].mxu0
    %v2623 = vpop.f32.mrb[0].mxu0
    %v2624 = vadd.f32 %v2335, %v2623
    %v2625 = vpop.f32.mrb[0].mxu0
    %2626 = vmatprep.mubr.bf16.mxu0 %v1522
    %2627 = vmatmul.mubr.bf16.gmra.mrb[0].mxu0 %v1521
    %v2628 = vpop.f32.mrb[0].mxu0
    %v2629 = vadd.f32 %v2340, %v2628
    %v2630 = vpop.f32.mrb[0].mxu0
    %v2631 = vpop.f32.mrb[0].mxu0
    %v2632 = vadd.f32 %v2343, %v2631
    %v2633 = vpop.f32.mrb[0].mxu0
    %2634 = vmatprep.mubr.bf16.mxu0 %v1529
    %2635 = vmatmul.mubr.bf16.gmra.mrb[0].mxu0 %v1528
    %v2636 = vpop.f32.mrb[0].mxu0
    %v2637 = vadd.f32 %v2348, %v2636
    %v2638 = vpop.f32.mrb[0].mxu0
    %v2639 = vpop.f32.mrb[0].mxu0
    %v2640 = vadd.f32 %v2351, %v2639
    %v2641 = vpop.f32.mrb[0].mxu0
    %2642 = vmatprep.mubr.bf16.mxu0 %v1536
    %2643 = vmatmul.mubr.bf16.gmra.mrb[0].mxu0 %v1535
    %v2644 = vpop.f32.mrb[0].mxu0
    %v2645 = vadd.f32 %v2356, %v2644
    %v2646 = vpop.f32.mrb[0].mxu0
    %v2647 = vpop.f32.mrb[0].mxu0
    %v2648 = vadd.f32 %v2359, %v2647
    %v2649 = vpop.f32.mrb[0].mxu0
    %2650 = vmatprep.mubr.bf16.mxu0 %v1543
    %2651 = vmatmul.mubr.bf16.gmra.mrb[0].mxu0 %v1542
    %v2652 = vpop.f32.mrb[0].mxu0
    %v2653 = vadd.f32 %v2364, %v2652
    %v2654 = vpop.f32.mrb[0].mxu0
    %v2655 = vpop.f32.mrb[0].mxu0
    %v2656 = vadd.f32 %v2367, %v2655
    %v2657 = vpop.f32.mrb[0].mxu0
    %2658 = vmatprep.mubr.bf16.mxu0 %v1550
    %2659 = vmatmul.mubr.bf16.gmra.mrb[0].mxu0 %v1549
    %v2660 = vpop.f32.mrb[0].mxu0
    %v2661 = vadd.f32 %v2372, %v2660
    %v2662 = vpop.f32.mrb[0].mxu0
    %v2663 = vpop.f32.mrb[0].mxu0
    %v2664 = vadd.f32 %v2375, %v2663
    %v2665 = vpop.f32.mrb[0].mxu0
    %2666 = vmatprep.mubr.bf16.mxu0 %v1557
    %2667 = vmatmul.mubr.bf16.gmra.mrb[0].mxu0 %v1556
    %v2668 = vpop.f32.mrb[0].mxu0
    %v2669 = vadd.f32 %v2380, %v2668
    %v2670 = vpop.f32.mrb[0].mxu0
    %v2671 = vpop.f32.mrb[0].mxu0
    %v2672 = vadd.f32 %v2383, %v2671
    %v2673 = vpop.f32.mrb[0].mxu0
    %2674 = vmatprep.mubr.bf16.mxu0 %v1564
    %2675 = vmatmul.mubr.bf16.gmra.mrb[0].mxu0 %v1563
    %v2676 = vpop.f32.mrb[0].mxu0
    %v2677 = vadd.f32 %v2388, %v2676
    %v2678 = vpop.f32.mrb[0].mxu0
    %v2679 = vpop.f32.mrb[0].mxu0
    %v2680 = vadd.f32 %v2391, %v2679
    %v2681 = vpop.f32.mrb[0].mxu0
    %2682 = vmatprep.mubr.bf16.mxu0 %v1571
    %2683 = vmatmul.mubr.bf16.gmra.mrb[0].mxu0 %v1570
    %v2684 = vpop.f32.mrb[0].mxu0
    %v2685 = vadd.f32 %v2396, %v2684
    %v2686 = vpop.f32.mrb[0].mxu0
    %v2687 = vpop.f32.mrb[0].mxu0
    %v2688 = vadd.f32 %v2399, %v2687
    %v2689 = vpop.f32.mrb[0].mxu0
    %2690 = vmatprep.mubr.bf16.mxu0 %v1578
    %2691 = vmatmul.mubr.bf16.gmra.mrb[0].mxu0 %v1577
    %v2692 = vpop.f32.mrb[0].mxu0
    %v2693 = vadd.f32 %v2404, %v2692
    %v2694 = vpop.f32.mrb[0].mxu0
    %v2695 = vpop.f32.mrb[0].mxu0
    %v2696 = vadd.f32 %v2407, %v2695
    %v2697 = vpop.f32.mrb[0].mxu0
    %2698 = vmatprep.mubr.bf16.mxu0 %v1585
    %2699 = vmatmul.mubr.bf16.gmra.mrb[0].mxu0 %v1584
    %v2700 = vpop.f32.mrb[0].mxu0
    %v2701 = vadd.f32 %v2412, %v2700
    %v2702 = vpop.f32.mrb[0].mxu0
    %v2703 = vpop.f32.mrb[0].mxu0
    %v2704 = vadd.f32 %v2415, %v2703
    %v2705 = vpop.f32.mrb[0].mxu0
    %2706 = vmatprep.mubr.bf16.mxu0 %v1592
    %2707 = vmatmul.mubr.bf16.gmra.mrb[0].mxu0 %v1591
    %v2708 = vpop.f32.mrb[0].mxu0
    %v2709 = vadd.f32 %v2420, %v2708
    %v2710 = vpop.f32.mrb[0].mxu0
    %v2711 = vpop.f32.mrb[0].mxu0
    %v2712 = vadd.f32 %v2423, %v2711
    %v2713 = vpop.f32.mrb[0].mxu0
    %2714 = vmatprep.mubr.bf16.mxu0 %v1599
    %2715 = vmatmul.mubr.bf16.gmra.mrb[0].mxu0 %v1598
    %v2716 = vpop.f32.mrb[0].mxu0
    %v2717 = vadd.f32 %v2428, %v2716
    %v2718 = vpop.f32.mrb[0].mxu0
    %v2719 = vpop.f32.mrb[0].mxu0
    %v2720 = vadd.f32 %v2431, %v2719
    %v2721 = vpop.f32.mrb[0].mxu0
    %2722 = vmatprep.mubr.bf16.mxu0 %v1606
    %2723 = vmatmul.mubr.bf16.gmra.mrb[0].mxu0 %v1605
    %v2724 = vpop.f32.mrb[0].mxu0
    %v2725 = vadd.f32 %v2436, %v2724
    %v2726 = vpop.f32.mrb[0].mxu0
    %v2727 = vpop.f32.mrb[0].mxu0
    %v2728 = vadd.f32 %v2439, %v2727
    %v2729 = vpop.f32.mrb[0].mxu0
    %2730 = vmatprep.mubr.bf16.mxu0 %v1613
    %2731 = vmatmul.mubr.bf16.gmra.mrb[0].mxu0 %v1612
    %v2732 = vpop.f32.mrb[0].mxu0
    %v2733 = vadd.f32 %v2444, %v2732
    %v2734 = vpop.f32.mrb[0].mxu0
    %v2735 = vpop.f32.mrb[0].mxu0
    %v2736 = vadd.f32 %v2447, %v2735
    %v2737 = vpop.f32.mrb[0].mxu0
    %2738 = vmatprep.mubr.bf16.mxu0 %v1620
    %2739 = vmatmul.mubr.bf16.gmra.mrb[0].mxu0 %v1619
    %v2740 = vpop.f32.mrb[0].mxu0
    %v2741 = vadd.f32 %v2452, %v2740
    %v2742 = vpop.f32.mrb[0].mxu0
    %v2743 = vpop.f32.mrb[0].mxu0
    %v2744 = vadd.f32 %v2455, %v2743
    %v2745 = vpop.f32.mrb[0].mxu0
    %2746 = vmatprep.mubr.bf16.mxu0 %v1627
    %2747 = vmatmul.mubr.bf16.gmra.mrb[0].mxu0 %v1626
    %v2748 = vpop.f32.mrb[0].mxu0
    %v2749 = vadd.f32 %v2460, %v2748
    %v2750 = vpop.f32.mrb[0].mxu0
    %v2751 = vpop.f32.mrb[0].mxu0
    %v2752 = vadd.f32 %v2463, %v2751
    %v2753 = vpop.f32.mrb[0].mxu0
    %2754 = vmatprep.mubr.bf16.mxu0 %v1634
    %2755 = vmatmul.mubr.bf16.gmra.mrb[0].mxu0 %v1633
    %v2756 = vpop.f32.mrb[0].mxu0
    %v2757 = vadd.f32 %v2468, %v2756
    %v2758 = vpop.f32.mrb[0].mxu0
    %v2759 = vpop.f32.mrb[0].mxu0
    %v2760 = vadd.f32 %v2471, %v2759
    %v2761 = vpop.f32.mrb[0].mxu0
    %2762 = vmatprep.mubr.bf16.mxu0 %v1641
    %2763 = vmatmul.mubr.bf16.gmra.mrb[0].mxu0 %v1640
    %v2764 = vpop.f32.mrb[0].mxu0
    %v2765 = vadd.f32 %v2476, %v2764
    %v2766 = vpop.f32.mrb[0].mxu0
    %v2767 = vpop.f32.mrb[0].mxu0
    %v2768 = vadd.f32 %v2479, %v2767
    %v2769 = vpop.f32.mrb[0].mxu0
    %2770 = vmatprep.mubr.bf16.mxu0 %v1648
    %2771 = vmatmul.mubr.bf16.gmra.mrb[0].mxu0 %v1647
    %v2772 = vpop.f32.mrb[0].mxu0
    %v2773 = vadd.f32 %v2484, %v2772
    %v2774 = vpop.f32.mrb[0].mxu0
    %v2775 = vpop.f32.mrb[0].mxu0
    %v2776 = vadd.f32 %v2487, %v2775
    %v2777 = vpop.f32.mrb[0].mxu0
    %2778 = vmatprep.mubr.bf16.mxu0 %v1655
    %2779 = vmatmul.mubr.bf16.gmra.mrb[0].mxu0 %v1654
    %v2780 = vpop.f32.mrb[0].mxu0
    %v2781 = vadd.f32 %v2492, %v2780
    %v2782 = vpop.f32.mrb[0].mxu0
    %v2783 = vpop.f32.mrb[0].mxu0
    %v2784 = vadd.f32 %v2495, %v2783
    %v2785 = vpop.f32.mrb[0].mxu0
    %2786 = vmatprep.mubr.bf16.mxu0 %v1662
    %2787 = vmatmul.mubr.bf16.gmra.mrb[0].mxu0 %v1661
    %v2788 = vpop.f32.mrb[0].mxu0
    %v2789 = vadd.f32 %v2500, %v2788
    %v2790 = vpop.f32.mrb[0].mxu0
    %v2791 = vpop.f32.mrb[0].mxu0
    %v2792 = vadd.f32 %v2503, %v2791
    %v2793 = vpop.f32.mrb[0].mxu0
    %2794 = vmatprep.mubr.bf16.mxu0 %v1669
    %2795 = vmatmul.mubr.bf16.gmra.mrb[0].mxu0 %v1668
    %v2796 = vpop.f32.mrb[0].mxu0
    %v2797 = vadd.f32 %v2508, %v2796
    %v2798 = vpop.f32.mrb[0].mxu0
    %v2799 = vpop.f32.mrb[0].mxu0
    %v2800 = vadd.f32 %v2511, %v2799
    %v2801 = vpop.f32.mrb[0].mxu0
    %2802 = vmatprep.mubr.bf16.mxu0 %v1676
    %2803 = vmatmul.mubr.bf16.gmra.mrb[0].mxu0 %v1675
    %v2804 = vpop.f32.mrb[0].mxu0
    %v2805 = vadd.f32 %v2516, %v2804
    %v2806 = vpop.f32.mrb[0].mxu0
    %v2807 = vpop.f32.mrb[0].mxu0
    %v2808 = vadd.f32 %v2519, %v2807
    %v2809 = vpop.f32.mrb[0].mxu0
    %2810 = vmatprep.mubr.bf16.mxu0 %v1683
    %2811 = vmatmul.mubr.bf16.gmra.mrb[0].mxu0 %v1682
    %v2812 = vpop.f32.mrb[0].mxu0
    %v2813 = vadd.f32 %v2524, %v2812
    %v2814 = vpop.f32.mrb[0].mxu0
    %v2815 = vpop.f32.mrb[0].mxu0
    %v2816 = vadd.f32 %v2527, %v2815
    %v2817 = vpop.f32.mrb[0].mxu0
    %2818 = vmatprep.mubr.bf16.mxu0 %v1690
    %2819 = vmatmul.mubr.bf16.gmra.mrb[0].mxu0 %v1689
    %v2820 = vpop.f32.mrb[0].mxu0
    %v2821 = vadd.f32 %v2532, %v2820
    %v2822 = vpop.f32.mrb[0].mxu0
    %v2823 = vpop.f32.mrb[0].mxu0
    %v2824 = vadd.f32 %v2535, %v2823
    %v2825 = vpop.f32.mrb[0].mxu0
    %2826 = vmatprep.mubr.bf16.mxu0 %v1697
    %2827 = vmatmul.mubr.bf16.gmra.mrb[0].mxu0 %v1696
    %v2828 = vpop.f32.mrb[0].mxu0
    %v2829 = vadd.f32 %v2540, %v2828
    %v2830 = vpop.f32.mrb[0].mxu0
    %v2831 = vpop.f32.mrb[0].mxu0
    %v2832 = vadd.f32 %v2543, %v2831
    %v2833 = vpop.f32.mrb[0].mxu0
    %2834 = vmatprep.mubr.bf16.mxu0 %v1704
    %2835 = vmatmul.mubr.bf16.gmra.mrb[0].mxu0 %v1703
    %v2836 = vpop.f32.mrb[0].mxu0
    %v2837 = vadd.f32 %v2548, %v2836
    %v2838 = vpop.f32.mrb[0].mxu0
    %v2839 = vpop.f32.mrb[0].mxu0
    %v2840 = vadd.f32 %v2551, %v2839
    %v2841 = vpop.f32.mrb[0].mxu0
    %2842 = vmatprep.mubr.bf16.mxu0 %v1711
    %2843 = vmatmul.mubr.bf16.gmra.mrb[0].mxu0 %v1710
    %v2844 = vpop.f32.mrb[0].mxu0
    %v2845 = vadd.f32 %v2556, %v2844
    %v2846 = vpop.f32.mrb[0].mxu0
    %v2847 = vpop.f32.mrb[0].mxu0
    %v2848 = vadd.f32 %v2559, %v2847
    %v2849 = vpop.f32.mrb[0].mxu0
    %2850 = vmatprep.mubr.bf16.mxu0 %v1718
    %2851 = vmatmul.mubr.bf16.gmra.mrb[0].mxu0 %v1717
    %v2852 = vpop.f32.mrb[0].mxu0
    %v2853 = vadd.f32 %v2564, %v2852
    %v2854 = vpop.f32.mrb[0].mxu0
    %v2855 = vpop.f32.mrb[0].mxu0
    %v2856 = vadd.f32 %v2567, %v2855
    %v2857 = vpop.f32.mrb[0].mxu0
    %2858 = vmatprep.mubr.bf16.mxu0 %v1725
    %2859 = vmatmul.mubr.bf16.gmra.mrb[0].mxu0 %v1724
    %v2860 = vpop.f32.mrb[0].mxu0
    %v2861 = vadd.f32 %v2572, %v2860
    %v2862 = vpop.f32.mrb[0].mxu0
    %v2863 = vpop.f32.mrb[0].mxu0
    %v2864 = vadd.f32 %v2575, %v2863
    %v2865 = vpop.f32.mrb[0].mxu0
    %2866 = vdwg.mxu0
    %2867 = vmatprep.subr.bf16.mxu0 0
    %2868 = vmatpush1.bf16.msra.mxu0 %v2209
    %2869 = vmatprep.subr.bf16.mxu0 0
    %2870 = vmatpush1.bf16.msra.mxu0 %v2210
    %2871 = vmatprep.subr.bf16.mxu0 0
    %2872 = vmatpush1.bf16.msra.mxu0 %v2211
    %2873 = vmatprep.subr.bf16.mxu0 0
    %2874 = vmatpush1.bf16.msra.mxu0 %v2212
    %2875 = vmatprep.subr.bf16.mxu0 0
    %2876 = vmatpush1.bf16.msra.mxu0 %v2213
    %2877 = vmatprep.subr.bf16.mxu0 0
    %2878 = vmatpush1.bf16.msra.mxu0 %v2214
    %2879 = vmatprep.subr.bf16.mxu0 0
    %2880 = vmatpush1.bf16.msra.mxu0 %v2215
    %2881 = vmatprep.subr.bf16.mxu0 0
    %2882 = vmatpush1.bf16.msra.mxu0 %v2216
    %2883 = vmatprep.subr.bf16.mxu0 0
    %2884 = vmatpush1.bf16.msra.mxu0 %v2217
    %2885 = vmatprep.subr.bf16.mxu0 0
    %2886 = vmatpush1.bf16.msra.mxu0 %v2218
    %2887 = vmatprep.subr.bf16.mxu0 0
    %2888 = vmatpush1.bf16.msra.mxu0 %v2219
    %2889 = vmatprep.subr.bf16.mxu0 0
    %2890 = vmatpush1.bf16.msra.mxu0 %v2220
    %2891 = vmatprep.subr.bf16.mxu0 0
    %2892 = vmatpush1.bf16.msra.mxu0 %v2221
    %2893 = vmatprep.subr.bf16.mxu0 0
    %2894 = vmatpush1.bf16.msra.mxu0 %v2222
    %2895 = vmatprep.subr.bf16.mxu0 0
    %2896 = vmatpush1.bf16.msra.mxu0 %v2223
    %2897 = vmatprep.subr.bf16.mxu0 0
    %2898 = vmatpush1.bf16.msra.mxu0 %v2224
    %2899 = vmatprep.mubr.bf16.mxu0 %v1510
    %2900 = vmatmul.mubr.bf16.gmra.mrb[0].mxu0 %v1509
    %v2901 = vpop.f32.mrb[0].mxu0
    %v2902 = vadd.f32 %v2613, %v2901
    %v2903 = vpop.f32.mrb[0].mxu0
    %v2904 = vpop.f32.mrb[0].mxu0
    %v2905 = vadd.f32 %v2616, %v2904
    %v2906 = vpop.f32.mrb[0].mxu0
    %2907 = vmatprep.mubr.bf16.mxu0 %v1517
    %2908 = vmatmul.mubr.bf16.gmra.mrb[0].mxu0 %v1516
    %v2909 = vpop.f32.mrb[0].mxu0
    %v2910 = vadd.f32 %v2621, %v2909
    %v2911 = vpop.f32.mrb[0].mxu0
    %v2912 = vpop.f32.mrb[0].mxu0
    %v2913 = vadd.f32 %v2624, %v2912
    %v2914 = vpop.f32.mrb[0].mxu0
    %2915 = vmatprep.mubr.bf16.mxu0 %v1524
    %2916 = vmatmul.mubr.bf16.gmra.mrb[0].mxu0 %v1523
    %v2917 = vpop.f32.mrb[0].mxu0
    %v2918 = vadd.f32 %v2629, %v2917
    %v2919 = vpop.f32.mrb[0].mxu0
    %v2920 = vpop.f32.mrb[0].mxu0
    %v2921 = vadd.f32 %v2632, %v2920
    %v2922 = vpop.f32.mrb[0].mxu0
    %2923 = vmatprep.mubr.bf16.mxu0 %v1531
    %2924 = vmatmul.mubr.bf16.gmra.mrb[0].mxu0 %v1530
    %v2925 = vpop.f32.mrb[0].mxu0
    %v2926 = vadd.f32 %v2637, %v2925
    %v2927 = vpop.f32.mrb[0].mxu0
    %v2928 = vpop.f32.mrb[0].mxu0
    %v2929 = vadd.f32 %v2640, %v2928
    %v2930 = vpop.f32.mrb[0].mxu0
    %2931 = vmatprep.mubr.bf16.mxu0 %v1538
    %2932 = vmatmul.mubr.bf16.gmra.mrb[0].mxu0 %v1537
    %v2933 = vpop.f32.mrb[0].mxu0
    %v2934 = vadd.f32 %v2645, %v2933
    %v2935 = vpop.f32.mrb[0].mxu0
    %v2936 = vpop.f32.mrb[0].mxu0
    %v2937 = vadd.f32 %v2648, %v2936
    %v2938 = vpop.f32.mrb[0].mxu0
    %2939 = vmatprep.mubr.bf16.mxu0 %v1545
    %2940 = vmatmul.mubr.bf16.gmra.mrb[0].mxu0 %v1544
    %v2941 = vpop.f32.mrb[0].mxu0
    %v2942 = vadd.f32 %v2653, %v2941
    %v2943 = vpop.f32.mrb[0].mxu0
    %v2944 = vpop.f32.mrb[0].mxu0
    %v2945 = vadd.f32 %v2656, %v2944
    %v2946 = vpop.f32.mrb[0].mxu0
    %2947 = vmatprep.mubr.bf16.mxu0 %v1552
    %2948 = vmatmul.mubr.bf16.gmra.mrb[0].mxu0 %v1551
    %v2949 = vpop.f32.mrb[0].mxu0
    %v2950 = vadd.f32 %v2661, %v2949
    %v2951 = vpop.f32.mrb[0].mxu0
    %v2952 = vpop.f32.mrb[0].mxu0
    %v2953 = vadd.f32 %v2664, %v2952
    %v2954 = vpop.f32.mrb[0].mxu0
    %2955 = vmatprep.mubr.bf16.mxu0 %v1559
    %2956 = vmatmul.mubr.bf16.gmra.mrb[0].mxu0 %v1558
    %v2957 = vpop.f32.mrb[0].mxu0
    %v2958 = vadd.f32 %v2669, %v2957
    %v2959 = vpop.f32.mrb[0].mxu0
    %v2960 = vpop.f32.mrb[0].mxu0
    %v2961 = vadd.f32 %v2672, %v2960
    %v2962 = vpop.f32.mrb[0].mxu0
    %2963 = vmatprep.mubr.bf16.mxu0 %v1566
    %2964 = vmatmul.mubr.bf16.gmra.mrb[0].mxu0 %v1565
    %v2965 = vpop.f32.mrb[0].mxu0
    %v2966 = vadd.f32 %v2677, %v2965
    %v2967 = vpop.f32.mrb[0].mxu0
    %v2968 = vpop.f32.mrb[0].mxu0
    %v2969 = vadd.f32 %v2680, %v2968
    %v2970 = vpop.f32.mrb[0].mxu0
    %2971 = vmatprep.mubr.bf16.mxu0 %v1573
    %2972 = vmatmul.mubr.bf16.gmra.mrb[0].mxu0 %v1572
    %v2973 = vpop.f32.mrb[0].mxu0
    %v2974 = vadd.f32 %v2685, %v2973
    %v2975 = vpop.f32.mrb[0].mxu0
    %v2976 = vpop.f32.mrb[0].mxu0
    %v2977 = vadd.f32 %v2688, %v2976
    %v2978 = vpop.f32.mrb[0].mxu0
    %2979 = vmatprep.mubr.bf16.mxu0 %v1580
    %2980 = vmatmul.mubr.bf16.gmra.mrb[0].mxu0 %v1579
    %v2981 = vpop.f32.mrb[0].mxu0
    %v2982 = vadd.f32 %v2693, %v2981
    %v2983 = vpop.f32.mrb[0].mxu0
    %v2984 = vpop.f32.mrb[0].mxu0
    %v2985 = vadd.f32 %v2696, %v2984
    %v2986 = vpop.f32.mrb[0].mxu0
    %2987 = vmatprep.mubr.bf16.mxu0 %v1587
    %2988 = vmatmul.mubr.bf16.gmra.mrb[0].mxu0 %v1586
    %v2989 = vpop.f32.mrb[0].mxu0
    %v2990 = vadd.f32 %v2701, %v2989
    %v2991 = vpop.f32.mrb[0].mxu0
    %v2992 = vpop.f32.mrb[0].mxu0
    %v2993 = vadd.f32 %v2704, %v2992
    %v2994 = vpop.f32.mrb[0].mxu0
    %2995 = vmatprep.mubr.bf16.mxu0 %v1594
    %2996 = vmatmul.mubr.bf16.gmra.mrb[0].mxu0 %v1593
    %v2997 = vpop.f32.mrb[0].mxu0
    %v2998 = vadd.f32 %v2709, %v2997
    %v2999 = vpop.f32.mrb[0].mxu0
    %v3000 = vpop.f32.mrb[0].mxu0
    %v3001 = vadd.f32 %v2712, %v3000
    %v3002 = vpop.f32.mrb[0].mxu0
    %3003 = vmatprep.mubr.bf16.mxu0 %v1601
    %3004 = vmatmul.mubr.bf16.gmra.mrb[0].mxu0 %v1600
    %v3005 = vpop.f32.mrb[0].mxu0
    %v3006 = vadd.f32 %v2717, %v3005
    %v3007 = vpop.f32.mrb[0].mxu0
    %v3008 = vpop.f32.mrb[0].mxu0
    %v3009 = vadd.f32 %v2720, %v3008
    %v3010 = vpop.f32.mrb[0].mxu0
    %3011 = vmatprep.mubr.bf16.mxu0 %v1608
    %3012 = vmatmul.mubr.bf16.gmra.mrb[0].mxu0 %v1607
    %v3013 = vpop.f32.mrb[0].mxu0
    %v3014 = vadd.f32 %v2725, %v3013
    %v3015 = vpop.f32.mrb[0].mxu0
    %v3016 = vpop.f32.mrb[0].mxu0
    %v3017 = vadd.f32 %v2728, %v3016
    %v3018 = vpop.f32.mrb[0].mxu0
    %3019 = vmatprep.mubr.bf16.mxu0 %v1615
    %3020 = vmatmul.mubr.bf16.gmra.mrb[0].mxu0 %v1614
    %v3021 = vpop.f32.mrb[0].mxu0
    %v3022 = vadd.f32 %v2733, %v3021
    %v3023 = vpop.f32.mrb[0].mxu0
    %v3024 = vpop.f32.mrb[0].mxu0
    %v3025 = vadd.f32 %v2736, %v3024
    %v3026 = vpop.f32.mrb[0].mxu0
    %3027 = vmatprep.mubr.bf16.mxu0 %v1622
    %3028 = vmatmul.mubr.bf16.gmra.mrb[0].mxu0 %v1621
    %v3029 = vpop.f32.mrb[0].mxu0
    %v3030 = vadd.f32 %v2741, %v3029
    %v3031 = vpop.f32.mrb[0].mxu0
    %v3032 = vpop.f32.mrb[0].mxu0
    %v3033 = vadd.f32 %v2744, %v3032
    %v3034 = vpop.f32.mrb[0].mxu0
    %3035 = vmatprep.mubr.bf16.mxu0 %v1629
    %3036 = vmatmul.mubr.bf16.gmra.mrb[0].mxu0 %v1628
    %v3037 = vpop.f32.mrb[0].mxu0
    %v3038 = vadd.f32 %v2749, %v3037
    %v3039 = vpop.f32.mrb[0].mxu0
    %v3040 = vpop.f32.mrb[0].mxu0
    %v3041 = vadd.f32 %v2752, %v3040
    %v3042 = vpop.f32.mrb[0].mxu0
    %3043 = vmatprep.mubr.bf16.mxu0 %v1636
    %3044 = vmatmul.mubr.bf16.gmra.mrb[0].mxu0 %v1635
    %v3045 = vpop.f32.mrb[0].mxu0
    %v3046 = vadd.f32 %v2757, %v3045
    %v3047 = vpop.f32.mrb[0].mxu0
    %v3048 = vpop.f32.mrb[0].mxu0
    %v3049 = vadd.f32 %v2760, %v3048
    %v3050 = vpop.f32.mrb[0].mxu0
    %3051 = vmatprep.mubr.bf16.mxu0 %v1643
    %3052 = vmatmul.mubr.bf16.gmra.mrb[0].mxu0 %v1642
    %v3053 = vpop.f32.mrb[0].mxu0
    %v3054 = vadd.f32 %v2765, %v3053
    %v3055 = vpop.f32.mrb[0].mxu0
    %v3056 = vpop.f32.mrb[0].mxu0
    %v3057 = vadd.f32 %v2768, %v3056
    %v3058 = vpop.f32.mrb[0].mxu0
    %3059 = vmatprep.mubr.bf16.mxu0 %v1650
    %3060 = vmatmul.mubr.bf16.gmra.mrb[0].mxu0 %v1649
    %v3061 = vpop.f32.mrb[0].mxu0
    %v3062 = vadd.f32 %v2773, %v3061
    %v3063 = vpop.f32.mrb[0].mxu0
    %v3064 = vpop.f32.mrb[0].mxu0
    %v3065 = vadd.f32 %v2776, %v3064
    %v3066 = vpop.f32.mrb[0].mxu0
    %3067 = vmatprep.mubr.bf16.mxu0 %v1657
    %3068 = vmatmul.mubr.bf16.gmra.mrb[0].mxu0 %v1656
    %v3069 = vpop.f32.mrb[0].mxu0
    %v3070 = vadd.f32 %v2781, %v3069
    %v3071 = vpop.f32.mrb[0].mxu0
    %v3072 = vpop.f32.mrb[0].mxu0
    %v3073 = vadd.f32 %v2784, %v3072
    %v3074 = vpop.f32.mrb[0].mxu0
    %3075 = vmatprep.mubr.bf16.mxu0 %v1664
    %3076 = vmatmul.mubr.bf16.gmra.mrb[0].mxu0 %v1663
    %v3077 = vpop.f32.mrb[0].mxu0
    %v3078 = vadd.f32 %v2789, %v3077
    %v3079 = vpop.f32.mrb[0].mxu0
    %v3080 = vpop.f32.mrb[0].mxu0
    %v3081 = vadd.f32 %v2792, %v3080
    %v3082 = vpop.f32.mrb[0].mxu0
    %3083 = vmatprep.mubr.bf16.mxu0 %v1671
    %3084 = vmatmul.mubr.bf16.gmra.mrb[0].mxu0 %v1670
    %v3085 = vpop.f32.mrb[0].mxu0
    %v3086 = vadd.f32 %v2797, %v3085
    %v3087 = vpop.f32.mrb[0].mxu0
    %v3088 = vpop.f32.mrb[0].mxu0
    %v3089 = vadd.f32 %v2800, %v3088
    %v3090 = vpop.f32.mrb[0].mxu0
    %3091 = vmatprep.mubr.bf16.mxu0 %v1678
    %3092 = vmatmul.mubr.bf16.gmra.mrb[0].mxu0 %v1677
    %v3093 = vpop.f32.mrb[0].mxu0
    %v3094 = vadd.f32 %v2805, %v3093
    %v3095 = vpop.f32.mrb[0].mxu0
    %v3096 = vpop.f32.mrb[0].mxu0
    %v3097 = vadd.f32 %v2808, %v3096
    %v3098 = vpop.f32.mrb[0].mxu0
    %3099 = vmatprep.mubr.bf16.mxu0 %v1685
    %3100 = vmatmul.mubr.bf16.gmra.mrb[0].mxu0 %v1684
    %v3101 = vpop.f32.mrb[0].mxu0
    %v3102 = vadd.f32 %v2813, %v3101
    %v3103 = vpop.f32.mrb[0].mxu0
    %v3104 = vpop.f32.mrb[0].mxu0
    %v3105 = vadd.f32 %v2816, %v3104
    %v3106 = vpop.f32.mrb[0].mxu0
    %3107 = vmatprep.mubr.bf16.mxu0 %v1692
    %3108 = vmatmul.mubr.bf16.gmra.mrb[0].mxu0 %v1691
    %v3109 = vpop.f32.mrb[0].mxu0
    %v3110 = vadd.f32 %v2821, %v3109
    %v3111 = vpop.f32.mrb[0].mxu0
    %v3112 = vpop.f32.mrb[0].mxu0
    %v3113 = vadd.f32 %v2824, %v3112
    %v3114 = vpop.f32.mrb[0].mxu0
    %3115 = vmatprep.mubr.bf16.mxu0 %v1699
    %3116 = vmatmul.mubr.bf16.gmra.mrb[0].mxu0 %v1698
    %v3117 = vpop.f32.mrb[0].mxu0
    %v3118 = vadd.f32 %v2829, %v3117
    %v3119 = vpop.f32.mrb[0].mxu0
    %v3120 = vpop.f32.mrb[0].mxu0
    %v3121 = vadd.f32 %v2832, %v3120
    %v3122 = vpop.f32.mrb[0].mxu0
    %3123 = vmatprep.mubr.bf16.mxu0 %v1706
    %3124 = vmatmul.mubr.bf16.gmra.mrb[0].mxu0 %v1705
    %v3125 = vpop.f32.mrb[0].mxu0
    %v3126 = vadd.f32 %v2837, %v3125
    %v3127 = vpop.f32.mrb[0].mxu0
    %v3128 = vpop.f32.mrb[0].mxu0
    %v3129 = vadd.f32 %v2840, %v3128
    %v3130 = vpop.f32.mrb[0].mxu0
    %3131 = vmatprep.mubr.bf16.mxu0 %v1713
    %3132 = vmatmul.mubr.bf16.gmra.mrb[0].mxu0 %v1712
    %v3133 = vpop.f32.mrb[0].mxu0
    %v3134 = vadd.f32 %v2845, %v3133
    %v3135 = vpop.f32.mrb[0].mxu0
    %v3136 = vpop.f32.mrb[0].mxu0
    %v3137 = vadd.f32 %v2848, %v3136
    %v3138 = vpop.f32.mrb[0].mxu0
    %3139 = vmatprep.mubr.bf16.mxu0 %v1720
    %3140 = vmatmul.mubr.bf16.gmra.mrb[0].mxu0 %v1719
    %v3141 = vpop.f32.mrb[0].mxu0
    %v3142 = vadd.f32 %v2853, %v3141
    %v3143 = vpop.f32.mrb[0].mxu0
    %v3144 = vpop.f32.mrb[0].mxu0
    %v3145 = vadd.f32 %v2856, %v3144
    %v3146 = vpop.f32.mrb[0].mxu0
    %3147 = vmatprep.mubr.bf16.mxu0 %v1727
    %3148 = vmatmul.mubr.bf16.gmra.mrb[0].mxu0 %v1726
    %v3149 = vpop.f32.mrb[0].mxu0
    %v3150 = vadd.f32 %v2861, %v3149
    %v3151 = vpop.f32.mrb[0].mxu0
    %v3152 = vpop.f32.mrb[0].mxu0
    %v3153 = vadd.f32 %v2864, %v3152
    %v3154 = vpop.f32.mrb[0].mxu0
    %3155 = vdwg.mxu0
    %3156 = vmatprep.subr.bf16.mxu0 0
    %3157 = vmatpush1.bf16.msra.mxu0 %v2225
    %3158 = vmatprep.subr.bf16.mxu0 0
    %3159 = vmatpush1.bf16.msra.mxu0 %v2226
    %3160 = vmatprep.subr.bf16.mxu0 0
    %3161 = vmatpush1.bf16.msra.mxu0 %v2227
    %3162 = vmatprep.subr.bf16.mxu0 0
    %3163 = vmatpush1.bf16.msra.mxu0 %v2228
    %3164 = vmatprep.subr.bf16.mxu0 0
    %3165 = vmatpush1.bf16.msra.mxu0 %v2229
    %3166 = vmatprep.subr.bf16.mxu0 0
    %3167 = vmatpush1.bf16.msra.mxu0 %v2230
    %3168 = vmatprep.subr.bf16.mxu0 0
    %3169 = vmatpush1.bf16.msra.mxu0 %v2231
    %3170 = vmatprep.subr.bf16.mxu0 0
    %3171 = vmatpush1.bf16.msra.mxu0 %v2232
    %3172 = vmatprep.subr.bf16.mxu0 0
    %3173 = vmatpush1.bf16.msra.mxu0 0
    %3174 = vmatprep.subr.bf16.mxu0 0
    %3175 = vmatpush1.bf16.msra.mxu0 0
    %3176 = vmatprep.subr.bf16.mxu0 0
    %3177 = vmatpush1.bf16.msra.mxu0 0
    %3178 = vmatprep.subr.bf16.mxu0 0
    %3179 = vmatpush1.bf16.msra.mxu0 0
    %3180 = vmatprep.subr.bf16.mxu0 0
    %3181 = vmatpush1.bf16.msra.mxu0 0
    %3182 = vmatprep.subr.bf16.mxu0 0
    %3183 = vmatpush1.bf16.msra.mxu0 0
    %3184 = vmatprep.subr.bf16.mxu0 0
    %3185 = vmatpush1.bf16.msra.mxu0 0
    %3186 = vmatprep.subr.bf16.mxu0 0
    %3187 = vmatpush1.bf16.msra.mxu0 0
    %3188 = vmatprep.mubr.bf16.mxu0 0
    %3189 = vmatmul.mubr.bf16.gmra.mrb[0].mxu0 %v1511
    %v3190 = vpop.f32.mrb[0].mxu0
    %v3191 = vadd.f32 %v2902, %v3190
    %v3192 = vpop.f32.mrb[0].mxu0
    %v3193 = vpop.f32.mrb[0].mxu0
    %v3194 = vadd.f32 %v2905, %v3193
    %v3195 = vpop.f32.mrb[0].mxu0
    %3196 = vmatprep.mubr.bf16.mxu0 0
    %3197 = vmatmul.mubr.bf16.gmra.mrb[0].mxu0 %v1518
    %v3198 = vpop.f32.mrb[0].mxu0
    %v3199 = vadd.f32 %v2910, %v3198
    %v3200 = vpop.f32.mrb[0].mxu0
    %v3201 = vpop.f32.mrb[0].mxu0
    %v3202 = vadd.f32 %v2913, %v3201
    %v3203 = vpop.f32.mrb[0].mxu0
    %3204 = vmatprep.mubr.bf16.mxu0 0
    %3205 = vmatmul.mubr.bf16.gmra.mrb[0].mxu0 %v1525
    %v3206 = vpop.f32.mrb[0].mxu0
    %v3207 = vadd.f32 %v2918, %v3206
    %v3208 = vpop.f32.mrb[0].mxu0
    %v3209 = vpop.f32.mrb[0].mxu0
    %v3210 = vadd.f32 %v2921, %v3209
    %v3211 = vpop.f32.mrb[0].mxu0
    %3212 = vmatprep.mubr.bf16.mxu0 0
    %3213 = vmatmul.mubr.bf16.gmra.mrb[0].mxu0 %v1532
    %v3214 = vpop.f32.mrb[0].mxu0
    %v3215 = vadd.f32 %v2926, %v3214
    %v3216 = vpop.f32.mrb[0].mxu0
    %v3217 = vpop.f32.mrb[0].mxu0
    %v3218 = vadd.f32 %v2929, %v3217
    %v3219 = vpop.f32.mrb[0].mxu0
    %3220 = vmatprep.mubr.bf16.mxu0 0
    %3221 = vmatmul.mubr.bf16.gmra.mrb[0].mxu0 %v1539
    %v3222 = vpop.f32.mrb[0].mxu0
    %v3223 = vadd.f32 %v2934, %v3222
    %v3224 = vpop.f32.mrb[0].mxu0
    %v3225 = vpop.f32.mrb[0].mxu0
    %v3226 = vadd.f32 %v2937, %v3225
    %v3227 = vpop.f32.mrb[0].mxu0
    %3228 = vmatprep.mubr.bf16.mxu0 0
    %3229 = vmatmul.mubr.bf16.gmra.mrb[0].mxu0 %v1546
    %v3230 = vpop.f32.mrb[0].mxu0
    %v3231 = vadd.f32 %v2942, %v3230
    %v3232 = vpop.f32.mrb[0].mxu0
    %v3233 = vpop.f32.mrb[0].mxu0
    %v3234 = vadd.f32 %v2945, %v3233
    %v3235 = vpop.f32.mrb[0].mxu0
    %3236 = vmatprep.mubr.bf16.mxu0 0
    %3237 = vmatmul.mubr.bf16.gmra.mrb[0].mxu0 %v1553
    %v3238 = vpop.f32.mrb[0].mxu0
    %v3239 = vadd.f32 %v2950, %v3238
    %v3240 = vpop.f32.mrb[0].mxu0
    %v3241 = vpop.f32.mrb[0].mxu0
    %v3242 = vadd.f32 %v2953, %v3241
    %v3243 = vpop.f32.mrb[0].mxu0
    %3244 = vmatprep.mubr.bf16.mxu0 0
    %3245 = vmatmul.mubr.bf16.gmra.mrb[0].mxu0 %v1560
    %v3246 = vpop.f32.mrb[0].mxu0
    %v3247 = vadd.f32 %v2958, %v3246
    %v3248 = vpop.f32.mrb[0].mxu0
    %v3249 = vpop.f32.mrb[0].mxu0
    %v3250 = vadd.f32 %v2961, %v3249
    %v3251 = vpop.f32.mrb[0].mxu0
    %3252 = vmatprep.mubr.bf16.mxu0 0
    %3253 = vmatmul.mubr.bf16.gmra.mrb[0].mxu0 %v1567
    %v3254 = vpop.f32.mrb[0].mxu0
    %v3255 = vadd.f32 %v2966, %v3254
    %v3256 = vpop.f32.mrb[0].mxu0
    %v3257 = vpop.f32.mrb[0].mxu0
    %v3258 = vadd.f32 %v2969, %v3257
    %v3259 = vpop.f32.mrb[0].mxu0
    %3260 = vmatprep.mubr.bf16.mxu0 0
    %3261 = vmatmul.mubr.bf16.gmra.mrb[0].mxu0 %v1574
    %v3262 = vpop.f32.mrb[0].mxu0
    %v3263 = vadd.f32 %v2974, %v3262
    %v3264 = vpop.f32.mrb[0].mxu0
    %v3265 = vpop.f32.mrb[0].mxu0
    %v3266 = vadd.f32 %v2977, %v3265
    %v3267 = vpop.f32.mrb[0].mxu0
    %3268 = vmatprep.mubr.bf16.mxu0 0
    %3269 = vmatmul.mubr.bf16.gmra.mrb[0].mxu0 %v1581
    %v3270 = vpop.f32.mrb[0].mxu0
    %v3271 = vadd.f32 %v2982, %v3270
    %v3272 = vpop.f32.mrb[0].mxu0
    %v3273 = vpop.f32.mrb[0].mxu0
    %v3274 = vadd.f32 %v2985, %v3273
    %v3275 = vpop.f32.mrb[0].mxu0
    %3276 = vmatprep.mubr.bf16.mxu0 0
    %3277 = vmatmul.mubr.bf16.gmra.mrb[0].mxu0 %v1588
    %v3278 = vpop.f32.mrb[0].mxu0
    %v3279 = vadd.f32 %v2990, %v3278
    %v3280 = vpop.f32.mrb[0].mxu0
    %v3281 = vpop.f32.mrb[0].mxu0
    %v3282 = vadd.f32 %v2993, %v3281
    %v3283 = vpop.f32.mrb[0].mxu0
    %3284 = vmatprep.mubr.bf16.mxu0 0
    %3285 = vmatmul.mubr.bf16.gmra.mrb[0].mxu0 %v1595
    %v3286 = vpop.f32.mrb[0].mxu0
    %v3287 = vadd.f32 %v2998, %v3286
    %v3288 = vpop.f32.mrb[0].mxu0
    %v3289 = vpop.f32.mrb[0].mxu0
    %v3290 = vadd.f32 %v3001, %v3289
    %v3291 = vpop.f32.mrb[0].mxu0
    %3292 = vmatprep.mubr.bf16.mxu0 0
    %3293 = vmatmul.mubr.bf16.gmra.mrb[0].mxu0 %v1602
    %v3294 = vpop.f32.mrb[0].mxu0
    %v3295 = vadd.f32 %v3006, %v3294
    %v3296 = vpop.f32.mrb[0].mxu0
    %v3297 = vpop.f32.mrb[0].mxu0
    %v3298 = vadd.f32 %v3009, %v3297
    %v3299 = vpop.f32.mrb[0].mxu0
    %3300 = vmatprep.mubr.bf16.mxu0 0
    %3301 = vmatmul.mubr.bf16.gmra.mrb[0].mxu0 %v1609
    %v3302 = vpop.f32.mrb[0].mxu0
    %v3303 = vadd.f32 %v3014, %v3302
    %v3304 = vpop.f32.mrb[0].mxu0
    %v3305 = vpop.f32.mrb[0].mxu0
    %v3306 = vadd.f32 %v3017, %v3305
    %v3307 = vpop.f32.mrb[0].mxu0
    %3308 = vmatprep.mubr.bf16.mxu0 0
    %3309 = vmatmul.mubr.bf16.gmra.mrb[0].mxu0 %v1616
    %v3310 = vpop.f32.mrb[0].mxu0
    %v3311 = vadd.f32 %v3022, %v3310
    %v3312 = vpop.f32.mrb[0].mxu0
    %v3313 = vpop.f32.mrb[0].mxu0
    %v3314 = vadd.f32 %v3025, %v3313
    %v3315 = vpop.f32.mrb[0].mxu0
    %3316 = vmatprep.mubr.bf16.mxu0 0
    %3317 = vmatmul.mubr.bf16.gmra.mrb[0].mxu0 %v1623
    %v3318 = vpop.f32.mrb[0].mxu0
    %v3319 = vadd.f32 %v3030, %v3318
    %v3320 = vpop.f32.mrb[0].mxu0
    %v3321 = vpop.f32.mrb[0].mxu0
    %v3322 = vadd.f32 %v3033, %v3321
    %v3323 = vpop.f32.mrb[0].mxu0
    %3324 = vmatprep.mubr.bf16.mxu0 0
    %3325 = vmatmul.mubr.bf16.gmra.mrb[0].mxu0 %v1630
    %v3326 = vpop.f32.mrb[0].mxu0
    %v3327 = vadd.f32 %v3038, %v3326
    %v3328 = vpop.f32.mrb[0].mxu0
    %v3329 = vpop.f32.mrb[0].mxu0
    %v3330 = vadd.f32 %v3041, %v3329
    %v3331 = vpop.f32.mrb[0].mxu0
    %3332 = vmatprep.mubr.bf16.mxu0 0
    %3333 = vmatmul.mubr.bf16.gmra.mrb[0].mxu0 %v1637
    %v3334 = vpop.f32.mrb[0].mxu0
    %v3335 = vadd.f32 %v3046, %v3334
    %v3336 = vpop.f32.mrb[0].mxu0
    %v3337 = vpop.f32.mrb[0].mxu0
    %v3338 = vadd.f32 %v3049, %v3337
    %v3339 = vpop.f32.mrb[0].mxu0
    %3340 = vmatprep.mubr.bf16.mxu0 0
    %3341 = vmatmul.mubr.bf16.gmra.mrb[0].mxu0 %v1644
    %v3342 = vpop.f32.mrb[0].mxu0
    %v3343 = vadd.f32 %v3054, %v3342
    %v3344 = vpop.f32.mrb[0].mxu0
    %v3345 = vpop.f32.mrb[0].mxu0
    %v3346 = vadd.f32 %v3057, %v3345
    %v3347 = vpop.f32.mrb[0].mxu0
    %3348 = vmatprep.mubr.bf16.mxu0 0
    %3349 = vmatmul.mubr.bf16.gmra.mrb[0].mxu0 %v1651
    %v3350 = vpop.f32.mrb[0].mxu0
    %v3351 = vadd.f32 %v3062, %v3350
    %v3352 = vpop.f32.mrb[0].mxu0
    %v3353 = vpop.f32.mrb[0].mxu0
    %v3354 = vadd.f32 %v3065, %v3353
    %v3355 = vpop.f32.mrb[0].mxu0
    %3356 = vmatprep.mubr.bf16.mxu0 0
    %3357 = vmatmul.mubr.bf16.gmra.mrb[0].mxu0 %v1658
    %v3358 = vpop.f32.mrb[0].mxu0
    %v3359 = vadd.f32 %v3070, %v3358
    %v3360 = vpop.f32.mrb[0].mxu0
    %v3361 = vpop.f32.mrb[0].mxu0
    %v3362 = vadd.f32 %v3073, %v3361
    %v3363 = vpop.f32.mrb[0].mxu0
    %3364 = vmatprep.mubr.bf16.mxu0 0
    %3365 = vmatmul.mubr.bf16.gmra.mrb[0].mxu0 %v1665
    %v3366 = vpop.f32.mrb[0].mxu0
    %v3367 = vadd.f32 %v3078, %v3366
    %v3368 = vpop.f32.mrb[0].mxu0
    %v3369 = vpop.f32.mrb[0].mxu0
    %v3370 = vadd.f32 %v3081, %v3369
    %v3371 = vpop.f32.mrb[0].mxu0
    %3372 = vmatprep.mubr.bf16.mxu0 0
    %3373 = vmatmul.mubr.bf16.gmra.mrb[0].mxu0 %v1672
    %v3374 = vpop.f32.mrb[0].mxu0
    %v3375 = vadd.f32 %v3086, %v3374
    %v3376 = vpop.f32.mrb[0].mxu0
    %v3377 = vpop.f32.mrb[0].mxu0
    %v3378 = vadd.f32 %v3089, %v3377
    %v3379 = vpop.f32.mrb[0].mxu0
    %3380 = vmatprep.mubr.bf16.mxu0 0
    %3381 = vmatmul.mubr.bf16.gmra.mrb[0].mxu0 %v1679
    %v3382 = vpop.f32.mrb[0].mxu0
    %v3383 = vadd.f32 %v3094, %v3382
    %v3384 = vpop.f32.mrb[0].mxu0
    %v3385 = vpop.f32.mrb[0].mxu0
    %v3386 = vadd.f32 %v3097, %v3385
    %v3387 = vpop.f32.mrb[0].mxu0
    %3388 = vmatprep.mubr.bf16.mxu0 0
    %3389 = vmatmul.mubr.bf16.gmra.mrb[0].mxu0 %v1686
    %v3390 = vpop.f32.mrb[0].mxu0
    %v3391 = vadd.f32 %v3102, %v3390
    %v3392 = vpop.f32.mrb[0].mxu0
    %v3393 = vpop.f32.mrb[0].mxu0
    %v3394 = vadd.f32 %v3105, %v3393
    %v3395 = vpop.f32.mrb[0].mxu0
    %3396 = vmatprep.mubr.bf16.mxu0 0
    %3397 = vmatmul.mubr.bf16.gmra.mrb[0].mxu0 %v1693
    %v3398 = vpop.f32.mrb[0].mxu0
    %v3399 = vadd.f32 %v3110, %v3398
    %v3400 = vpop.f32.mrb[0].mxu0
    %v3401 = vpop.f32.mrb[0].mxu0
    %v3402 = vadd.f32 %v3113, %v3401
    %v3403 = vpop.f32.mrb[0].mxu0
    %3404 = vmatprep.mubr.bf16.mxu0 0
    %3405 = vmatmul.mubr.bf16.gmra.mrb[0].mxu0 %v1700
    %v3406 = vpop.f32.mrb[0].mxu0
    %v3407 = vadd.f32 %v3118, %v3406
    %v3408 = vpop.f32.mrb[0].mxu0
    %v3409 = vpop.f32.mrb[0].mxu0
    %v3410 = vadd.f32 %v3121, %v3409
    %v3411 = vpop.f32.mrb[0].mxu0
    %3412 = vmatprep.mubr.bf16.mxu0 0
    %3413 = vmatmul.mubr.bf16.gmra.mrb[0].mxu0 %v1707
    %v3414 = vpop.f32.mrb[0].mxu0
    %v3415 = vadd.f32 %v3126, %v3414
    %v3416 = vpop.f32.mrb[0].mxu0
    %v3417 = vpop.f32.mrb[0].mxu0
    %v3418 = vadd.f32 %v3129, %v3417
    %v3419 = vpop.f32.mrb[0].mxu0
    %3420 = vmatprep.mubr.bf16.mxu0 0
    %3421 = vmatmul.mubr.bf16.gmra.mrb[0].mxu0 %v1714
    %v3422 = vpop.f32.mrb[0].mxu0
    %v3423 = vadd.f32 %v3134, %v3422
    %v3424 = vpop.f32.mrb[0].mxu0
    %v3425 = vpop.f32.mrb[0].mxu0
    %v3426 = vadd.f32 %v3137, %v3425
    %v3427 = vpop.f32.mrb[0].mxu0
    %3428 = vmatprep.mubr.bf16.mxu0 0
    %3429 = vmatmul.mubr.bf16.gmra.mrb[0].mxu0 %v1721
    %v3430 = vpop.f32.mrb[0].mxu0
    %v3431 = vadd.f32 %v3142, %v3430
    %v3432 = vpop.f32.mrb[0].mxu0
    %v3433 = vpop.f32.mrb[0].mxu0
    %v3434 = vadd.f32 %v3145, %v3433
    %v3435 = vpop.f32.mrb[0].mxu0
    %3436 = vmatprep.mubr.bf16.mxu0 0
    %3437 = vmatmul.mubr.bf16.gmra.mrb[0].mxu0 %v1728
    %v3438 = vpop.f32.mrb[0].mxu0
    %v3439 = vadd.f32 %v3150, %v3438
    %v3440 = vpop.f32.mrb[0].mxu0
    %v3441 = vpop.f32.mrb[0].mxu0
    %v3442 = vadd.f32 %v3153, %v3441
    %v3443 = vpop.f32.mrb[0].mxu0
    %3444 = vdwg.mxu0
    %v3445 = vmax.f32 %v3191, 0.0
    %v3446 = vmax.f32 %v3194, 0.0
    %v3447 = vmax.f32 %v3199, 0.0
    %v3448 = vmax.f32 %v3202, 0.0
    %v3449 = vmax.f32 %v3207, 0.0
    %v3450 = vmax.f32 %v3210, 0.0
    %v3451 = vmax.f32 %v3215, 0.0
    %v3452 = vmax.f32 %v3218, 0.0
    %v3453 = vmax.f32 %v3223, 0.0
    %v3454 = vmax.f32 %v3226, 0.0
    %v3455 = vmax.f32 %v3231, 0.0
    %v3456 = vmax.f32 %v3234, 0.0
    %v3457 = vmax.f32 %v3239, 0.0
    %v3458 = vmax.f32 %v3242, 0.0
    %v3459 = vmax.f32 %v3247, 0.0
    %v3460 = vmax.f32 %v3250, 0.0
    %v3461 = vmax.f32 %v3255, 0.0
    %v3462 = vmax.f32 %v3258, 0.0
    %v3463 = vmax.f32 %v3263, 0.0
    %v3464 = vmax.f32 %v3266, 0.0
    %v3465 = vmax.f32 %v3271, 0.0
    %v3466 = vmax.f32 %v3274, 0.0
    %v3467 = vmax.f32 %v3279, 0.0
    %v3468 = vmax.f32 %v3282, 0.0
    %v3469 = vmax.f32 %v3287, 0.0
    %v3470 = vmax.f32 %v3290, 0.0
    %v3471 = vmax.f32 %v3295, 0.0
    %v3472 = vmax.f32 %v3298, 0.0
    %v3473 = vmax.f32 %v3303, 0.0
    %v3474 = vmax.f32 %v3306, 0.0
    %v3475 = vmax.f32 %v3311, 0.0
    %v3476 = vmax.f32 %v3314, 0.0
    %v3477 = vmax.f32 %v3319, 0.0
    %v3478 = vmax.f32 %v3322, 0.0
    %v3479 = vmax.f32 %v3327, 0.0
    %v3480 = vmax.f32 %v3330, 0.0
    %v3481 = vmax.f32 %v3335, 0.0
    %v3482 = vmax.f32 %v3338, 0.0
    %v3483 = vmax.f32 %v3343, 0.0
    %v3484 = vmax.f32 %v3346, 0.0
    %v3485 = vmax.f32 %v3351, 0.0
    %v3486 = vmax.f32 %v3354, 0.0
    %v3487 = vmax.f32 %v3359, 0.0
    %v3488 = vmax.f32 %v3362, 0.0
    %v3489 = vmax.f32 %v3367, 0.0
    %v3490 = vmax.f32 %v3370, 0.0
    %v3491 = vmax.f32 %v3375, 0.0
    %v3492 = vmax.f32 %v3378, 0.0
    %v3493 = vmax.f32 %v3383, 0.0
    %v3494 = vmax.f32 %v3386, 0.0
    %v3495 = vmax.f32 %v3391, 0.0
    %v3496 = vmax.f32 %v3394, 0.0
    %v3497 = vmax.f32 %v3399, 0.0
    %v3498 = vmax.f32 %v3402, 0.0
    %v3499 = vmax.f32 %v3407, 0.0
    %v3500 = vmax.f32 %v3410, 0.0
    %v3501 = vmax.f32 %v3415, 0.0
    %v3502 = vmax.f32 %v3418, 0.0
    %v3503 = vmax.f32 %v3423, 0.0
    %v3504 = vmax.f32 %v3426, 0.0
    %v3505 = vmax.f32 %v3431, 0.0
    %v3506 = vmax.f32 %v3434, 0.0
    %v3507 = vmax.f32 %v3439, 0.0
    %v3508 = vmax.f32 %v3442, 0.0
    %v3509 = vpack.c.bf16 %v3446, %v3445
    %v3510 = vpack.c.bf16 %v3448, %v3447
    %v3511 = vpack.c.bf16 %v3450, %v3449
    %v3512 = vpack.c.bf16 %v3452, %v3451
    %v3513 = vpack.c.bf16 %v3454, %v3453
    %v3514 = vpack.c.bf16 %v3456, %v3455
    %v3515 = vpack.c.bf16 %v3458, %v3457
    %v3516 = vpack.c.bf16 %v3460, %v3459
    %v3517 = vpack.c.bf16 %v3462, %v3461
    %v3518 = vpack.c.bf16 %v3464, %v3463
    %v3519 = vpack.c.bf16 %v3466, %v3465
    %v3520 = vpack.c.bf16 %v3468, %v3467
    %v3521 = vpack.c.bf16 %v3470, %v3469
    %v3522 = vpack.c.bf16 %v3472, %v3471
    %v3523 = vpack.c.bf16 %v3474, %v3473
    %v3524 = vpack.c.bf16 %v3476, %v3475
    %v3525 = vpack.c.bf16 %v3478, %v3477
    %v3526 = vpack.c.bf16 %v3480, %v3479
    %v3527 = vpack.c.bf16 %v3482, %v3481
    %v3528 = vpack.c.bf16 %v3484, %v3483
    %v3529 = vpack.c.bf16 %v3486, %v3485
    %v3530 = vpack.c.bf16 %v3488, %v3487
    %v3531 = vpack.c.bf16 %v3490, %v3489
    %v3532 = vpack.c.bf16 %v3492, %v3491
    %v3533 = vpack.c.bf16 %v3494, %v3493
    %v3534 = vpack.c.bf16 %v3496, %v3495
    %v3535 = vpack.c.bf16 %v3498, %v3497
    %v3536 = vpack.c.bf16 %v3500, %v3499
    %v3537 = vpack.c.bf16 %v3502, %v3501
    %v3538 = vpack.c.bf16 %v3504, %v3503
    %v3539 = vpack.c.bf16 %v3506, %v3505
    %v3540 = vpack.c.bf16 %v3508, %v3507
    %v3541 = vld [vmem:[#allocation3] sm:$0xff]
    %v3542 = vld [vmem:[#allocation3 + $0x8] sm:$0xff]
    %v3543 = vld [vmem:[#allocation3 + $0x10] sm:$0xff]
    %v3544 = vld [vmem:[#allocation3 + $0x18] sm:$0xff]
    %v3545 = vld [vmem:[#allocation3 + $0x20] sm:$0xff]
    %v3546 = vld [vmem:[#allocation3 + $0x28] sm:$0xff]
    %v3547 = vld [vmem:[#allocation3 + $0x30] sm:$0xff]
    %v3548 = vld [vmem:[#allocation3 + $0x38] sm:$0xff]
    %v3549 = vld [vmem:[#allocation3 + $0x40] sm:$0xff]
    %v3550 = vld [vmem:[#allocation3 + $0x48] sm:$0xff]
    %v3551 = vld [vmem:[#allocation3 + $0x50] sm:$0xff]
    %v3552 = vld [vmem:[#allocation3 + $0x58] sm:$0xff]
    %v3553 = vld [vmem:[#allocation3 + $0x60] sm:$0xff]
    %v3554 = vld [vmem:[#allocation3 + $0x68] sm:$0xff]
    %v3555 = vld [vmem:[#allocation3 + $0x70] sm:$0xff]
    %v3556 = vld [vmem:[#allocation3 + $0x78] sm:$0xff]
    %v3557 = vld [vmem:[#allocation3 + $0x80] sm:$0xff]
    %v3558 = vld [vmem:[#allocation3 + $0x88] sm:$0xff]
    %v3559 = vld [vmem:[#allocation3 + $0x90] sm:$0xff]
    %v3560 = vld [vmem:[#allocation3 + $0x98] sm:$0xff]
    %v3561 = vld [vmem:[#allocation3 + $0xa0] sm:$0xff]
    %v3562 = vld [vmem:[#allocation3 + $0xa8] sm:$0xff]
    %v3563 = vld [vmem:[#allocation3 + $0xb0] sm:$0xff]
    %v3564 = vld [vmem:[#allocation3 + $0xb8] sm:$0xff]
    %v3565 = vld [vmem:[#allocation3 + $0xc0] sm:$0xff]
    %v3566 = vld [vmem:[#allocation3 + $0xc8] sm:$0xff]
    %v3567 = vld [vmem:[#allocation3 + $0xd0] sm:$0xff]
    %v3568 = vld [vmem:[#allocation3 + $0xd8] sm:$0xff]
    %v3569 = vld [vmem:[#allocation3 + $0xe0] sm:$0xff]
    %v3570 = vld [vmem:[#allocation3 + $0xe8] sm:$0xff]
    %v3571 = vld [vmem:[#allocation3 + $0xf0] sm:$0xff]
    %v3572 = vld [vmem:[#allocation3 + $0xf8] sm:$0xff]
    %v3573 = vld [vmem:[#allocation3 + $0x100] sm:$0xff]
    %v3574 = vld [vmem:[#allocation3 + $0x108] sm:$0xff]
    %v3575 = vld [vmem:[#allocation3 + $0x110] sm:$0xff]
    %v3576 = vld [vmem:[#allocation3 + $0x118] sm:$0xff]
    %v3577 = vld [vmem:[#allocation3 + $0x120] sm:$0xff]
    %v3578 = vld [vmem:[#allocation3 + $0x128] sm:$0xff]
    %v3579 = vld [vmem:[#allocation3 + $0x130] sm:$0xff]
    %v3580 = vld [vmem:[#allocation3 + $0x138] sm:$0xff]
    %v3581 = vld [vmem:[#allocation3 + $0x140] sm:$0xff]
    %v3582 = vld [vmem:[#allocation3 + $0x148] sm:$0xff]
    %v3583 = vld [vmem:[#allocation3 + $0x150] sm:$0xff]
    %v3584 = vld [vmem:[#allocation3 + $0x158] sm:$0xff]
    %v3585 = vld [vmem:[#allocation3 + $0x160] sm:$0xff]
    %v3586 = vld [vmem:[#allocation3 + $0x168] sm:$0xff]
    %v3587 = vld [vmem:[#allocation3 + $0x170] sm:$0xff]
    %v3588 = vld [vmem:[#allocation3 + $0x178] sm:$0xff]
    %v3589 = vld [vmem:[#allocation3 + $0x180] sm:$0xff]
    %v3590 = vld [vmem:[#allocation3 + $0x188] sm:$0xff]
    %v3591 = vld [vmem:[#allocation3 + $0x190] sm:$0xff]
    %v3592 = vld [vmem:[#allocation3 + $0x198] sm:$0xff]
    %v3593 = vld [vmem:[#allocation3 + $0x1a0] sm:$0xff]
    %v3594 = vld [vmem:[#allocation3 + $0x1a8] sm:$0xff]
    %v3595 = vld [vmem:[#allocation3 + $0x1b0] sm:$0xff]
    %v3596 = vld [vmem:[#allocation3 + $0x1b8] sm:$0xff]
    %v3597 = vld [vmem:[#allocation3 + $0x1c0] sm:$0xff]
    %v3598 = vld [vmem:[#allocation3 + $0x1c8] sm:$0xff]
    %v3599 = vld [vmem:[#allocation3 + $0x1d0] sm:$0xff]
    %v3600 = vld [vmem:[#allocation3 + $0x1d8] sm:$0xff]
    %v3601 = vld [vmem:[#allocation3 + $0x1e0] sm:$0xff]
    %v3602 = vld [vmem:[#allocation3 + $0x1e8] sm:$0xff]
    %v3603 = vld [vmem:[#allocation3 + $0x1f0] sm:$0xff]
    %v3604 = vld [vmem:[#allocation3 + $0x1f8] sm:$0xff]
    %v3605 = vld [vmem:[%s4] sm:$0xff]
    %v3606 = vld [vmem:[%s4 + $0x8] sm:$0xff]
    %v3607 = vld [vmem:[%s4 + $0x10] sm:$0xff]
    %v3608 = vld [vmem:[%s4 + $0x18] sm:$0xff]
    %v3609 = vld [vmem:[%s4 + $0x20] sm:$0xff]
    %v3610 = vld [vmem:[%s4 + $0x28] sm:$0xff]
    %v3611 = vld [vmem:[%s4 + $0x30] sm:$0xff]
    %v3612 = vld [vmem:[%s4 + $0x38] sm:$0xff]
    %v3613 = vld [vmem:[%s4 + $0x40] sm:$0xff]
    %v3614 = vld [vmem:[%s4 + $0x48] sm:$0xff]
    %v3615 = vld [vmem:[%s4 + $0x50] sm:$0xff]
    %v3616 = vld [vmem:[%s4 + $0x58] sm:$0xff]
    %v3617 = vld [vmem:[%s4 + $0x60] sm:$0xff]
    %v3618 = vld [vmem:[%s4 + $0x68] sm:$0xff]
    %v3619 = vld [vmem:[%s4 + $0x70] sm:$0xff]
    %v3620 = vld [vmem:[%s4 + $0x78] sm:$0xff]
    %v3621 = vld [vmem:[%s4 + $0x80] sm:$0xff]
    %v3622 = vld [vmem:[%s4 + $0x88] sm:$0xff]
    %v3623 = vld [vmem:[%s4 + $0x90] sm:$0xff]
    %v3624 = vld [vmem:[%s4 + $0x98] sm:$0xff]
    %v3625 = vld [vmem:[%s4 + $0xa0] sm:$0xff]
    %v3626 = vld [vmem:[%s4 + $0xa8] sm:$0xff]
    %v3627 = vld [vmem:[%s4 + $0xb0] sm:$0xff]
    %v3628 = vld [vmem:[%s4 + $0xb8] sm:$0xff]
    %v3629 = vld [vmem:[%s4 + $0xc0] sm:$0xff]
    %v3630 = vld [vmem:[%s4 + $0xc8] sm:$0xff]
    %v3631 = vld [vmem:[%s4 + $0xd0] sm:$0xff]
    %v3632 = vld [vmem:[%s4 + $0xd8] sm:$0xff]
    %v3633 = vld [vmem:[%s4 + $0xe0] sm:$0xff]
    %v3634 = vld [vmem:[%s4 + $0xe8] sm:$0xff]
    %v3635 = vld [vmem:[%s4 + $0xf0] sm:$0xff]
    %v3636 = vld [vmem:[%s4 + $0xf8] sm:$0xff]
    %3638 = vset.pattern.permute.xlu0 0
    %3639 = vperm.xlu0 %3638, %v3605
    %v3640 = vpop.permute.xlu0 %3639
    %3643 = vset.pattern.permute.xlu0 0
    %3644 = vperm.xlu0 %3643, %v3606
    %v3645 = vpop.permute.xlu0 %3644
    %3648 = vset.pattern.permute.xlu0 0
    %3649 = vperm.xlu0 %3648, %v3607
    %v3650 = vpop.permute.xlu0 %3649
    %3653 = vset.pattern.permute.xlu0 0
    %3654 = vperm.xlu0 %3653, %v3608
    %v3655 = vpop.permute.xlu0 %3654
    %3658 = vset.pattern.permute.xlu0 0
    %3659 = vperm.xlu0 %3658, %v3609
    %v3660 = vpop.permute.xlu0 %3659
    %3663 = vset.pattern.permute.xlu0 0
    %3664 = vperm.xlu0 %3663, %v3610
    %v3665 = vpop.permute.xlu0 %3664
    %3668 = vset.pattern.permute.xlu0 0
    %3669 = vperm.xlu0 %3668, %v3611
    %v3670 = vpop.permute.xlu0 %3669
    %3673 = vset.pattern.permute.xlu0 0
    %3674 = vperm.xlu0 %3673, %v3612
    %v3675 = vpop.permute.xlu0 %3674
    %3678 = vset.pattern.permute.xlu0 0
    %3679 = vperm.xlu0 %3678, %v3613
    %v3680 = vpop.permute.xlu0 %3679
    %3683 = vset.pattern.permute.xlu0 0
    %3684 = vperm.xlu0 %3683, %v3614
    %v3685 = vpop.permute.xlu0 %3684
    %3688 = vset.pattern.permute.xlu0 0
    %3689 = vperm.xlu0 %3688, %v3615
    %v3690 = vpop.permute.xlu0 %3689
    %3693 = vset.pattern.permute.xlu0 0
    %3694 = vperm.xlu0 %3693, %v3616
    %v3695 = vpop.permute.xlu0 %3694
    %3698 = vset.pattern.permute.xlu0 0
    %3699 = vperm.xlu0 %3698, %v3617
    %v3700 = vpop.permute.xlu0 %3699
    %3703 = vset.pattern.permute.xlu0 0
    %3704 = vperm.xlu0 %3703, %v3618
    %v3705 = vpop.permute.xlu0 %3704
    %3708 = vset.pattern.permute.xlu0 0
    %3709 = vperm.xlu0 %3708, %v3619
    %v3710 = vpop.permute.xlu0 %3709
    %3713 = vset.pattern.permute.xlu0 0
    %3714 = vperm.xlu0 %3713, %v3620
    %v3715 = vpop.permute.xlu0 %3714
    %3718 = vset.pattern.permute.xlu0 0
    %3719 = vperm.xlu0 %3718, %v3621
    %v3720 = vpop.permute.xlu0 %3719
    %3723 = vset.pattern.permute.xlu0 0
    %3724 = vperm.xlu0 %3723, %v3622
    %v3725 = vpop.permute.xlu0 %3724
    %3728 = vset.pattern.permute.xlu0 0
    %3729 = vperm.xlu0 %3728, %v3623
    %v3730 = vpop.permute.xlu0 %3729
    %3733 = vset.pattern.permute.xlu0 0
    %3734 = vperm.xlu0 %3733, %v3624
    %v3735 = vpop.permute.xlu0 %3734
    %3738 = vset.pattern.permute.xlu0 0
    %3739 = vperm.xlu0 %3738, %v3625
    %v3740 = vpop.permute.xlu0 %3739
    %3743 = vset.pattern.permute.xlu0 0
    %3744 = vperm.xlu0 %3743, %v3626
    %v3745 = vpop.permute.xlu0 %3744
    %3748 = vset.pattern.permute.xlu0 0
    %3749 = vperm.xlu0 %3748, %v3627
    %v3750 = vpop.permute.xlu0 %3749
    %3753 = vset.pattern.permute.xlu0 0
    %3754 = vperm.xlu0 %3753, %v3628
    %v3755 = vpop.permute.xlu0 %3754
    %3758 = vset.pattern.permute.xlu0 0
    %3759 = vperm.xlu0 %3758, %v3629
    %v3760 = vpop.permute.xlu0 %3759
    %3763 = vset.pattern.permute.xlu0 0
    %3764 = vperm.xlu0 %3763, %v3630
    %v3765 = vpop.permute.xlu0 %3764
    %3768 = vset.pattern.permute.xlu0 0
    %3769 = vperm.xlu0 %3768, %v3631
    %v3770 = vpop.permute.xlu0 %3769
    %3773 = vset.pattern.permute.xlu0 0
    %3774 = vperm.xlu0 %3773, %v3632
    %v3775 = vpop.permute.xlu0 %3774
    %3778 = vset.pattern.permute.xlu0 0
    %3779 = vperm.xlu0 %3778, %v3633
    %v3780 = vpop.permute.xlu0 %3779
    %3783 = vset.pattern.permute.xlu0 0
    %3784 = vperm.xlu0 %3783, %v3634
    %v3785 = vpop.permute.xlu0 %3784
    %3788 = vset.pattern.permute.xlu0 0
    %3789 = vperm.xlu0 %3788, %v3635
    %v3790 = vpop.permute.xlu0 %3789
    %3793 = vset.pattern.permute.xlu0 0
    %3794 = vperm.xlu0 %3793, %v3636
    %v3795 = vpop.permute.xlu0 %3794
    %v3861 = vunpack.c.l.b16 %v3541
    %v3862 = vunpack.c.h.b16 %v3541
    %v3863 = vunpack.c.l.b16 %v3542
    %v3864 = vunpack.c.h.b16 %v3542
    %v3865 = vunpack.c.l.b16 %v3543
    %v3866 = vunpack.c.h.b16 %v3543
    %v3867 = vunpack.c.l.b16 %v3544
    %v3868 = vunpack.c.h.b16 %v3544
    %v3869 = vunpack.c.l.b16 %v3545
    %v3870 = vunpack.c.h.b16 %v3545
    %v3871 = vunpack.c.l.b16 %v3546
    %v3872 = vunpack.c.h.b16 %v3546
    %v3873 = vunpack.c.l.b16 %v3547
    %v3874 = vunpack.c.h.b16 %v3547
    %v3875 = vunpack.c.l.b16 %v3548
    %v3876 = vunpack.c.h.b16 %v3548
    %v3877 = vunpack.c.l.b16 %v3549
    %v3878 = vunpack.c.h.b16 %v3549
    %v3879 = vunpack.c.l.b16 %v3550
    %v3880 = vunpack.c.h.b16 %v3550
    %v3881 = vunpack.c.l.b16 %v3551
    %v3882 = vunpack.c.h.b16 %v3551
    %v3883 = vunpack.c.l.b16 %v3552
    %v3884 = vunpack.c.h.b16 %v3552
    %v3885 = vunpack.c.l.b16 %v3553
    %v3886 = vunpack.c.h.b16 %v3553
    %v3887 = vunpack.c.l.b16 %v3554
    %v3888 = vunpack.c.h.b16 %v3554
    %v3889 = vunpack.c.l.b16 %v3555
    %v3890 = vunpack.c.h.b16 %v3555
    %v3891 = vunpack.c.l.b16 %v3556
    %v3892 = vunpack.c.h.b16 %v3556
    %v3893 = vunpack.c.l.b16 %v3557
    %v3894 = vunpack.c.h.b16 %v3557
    %v3895 = vunpack.c.l.b16 %v3558
    %v3896 = vunpack.c.h.b16 %v3558
    %v3897 = vunpack.c.l.b16 %v3559
    %v3898 = vunpack.c.h.b16 %v3559
    %v3899 = vunpack.c.l.b16 %v3560
    %v3900 = vunpack.c.h.b16 %v3560
    %v3901 = vunpack.c.l.b16 %v3561
    %v3902 = vunpack.c.h.b16 %v3561
    %v3903 = vunpack.c.l.b16 %v3562
    %v3904 = vunpack.c.h.b16 %v3562
    %v3905 = vunpack.c.l.b16 %v3563
    %v3906 = vunpack.c.h.b16 %v3563
    %v3907 = vunpack.c.l.b16 %v3564
    %v3908 = vunpack.c.h.b16 %v3564
    %v3909 = vunpack.c.l.b16 %v3565
    %v3910 = vunpack.c.h.b16 %v3565
    %v3911 = vunpack.c.l.b16 %v3566
    %v3912 = vunpack.c.h.b16 %v3566
    %v3913 = vunpack.c.l.b16 %v3567
    %v3914 = vunpack.c.h.b16 %v3567
    %v3915 = vunpack.c.l.b16 %v3568
    %v3916 = vunpack.c.h.b16 %v3568
    %v3917 = vunpack.c.l.b16 %v3569
    %v3918 = vunpack.c.h.b16 %v3569
    %v3919 = vunpack.c.l.b16 %v3570
    %v3920 = vunpack.c.h.b16 %v3570
    %v3921 = vunpack.c.l.b16 %v3571
    %v3922 = vunpack.c.h.b16 %v3571
    %v3923 = vunpack.c.l.b16 %v3572
    %v3924 = vunpack.c.h.b16 %v3572
    %v3925 = vunpack.c.l.b16 %v3573
    %v3926 = vunpack.c.h.b16 %v3573
    %v3927 = vunpack.c.l.b16 %v3574
    %v3928 = vunpack.c.h.b16 %v3574
    %v3929 = vunpack.c.l.b16 %v3575
    %v3930 = vunpack.c.h.b16 %v3575
    %v3931 = vunpack.c.l.b16 %v3576
    %v3932 = vunpack.c.h.b16 %v3576
    %v3933 = vunpack.c.l.b16 %v3577
    %v3934 = vunpack.c.h.b16 %v3577
    %v3935 = vunpack.c.l.b16 %v3578
    %v3936 = vunpack.c.h.b16 %v3578
    %v3937 = vunpack.c.l.b16 %v3579
    %v3938 = vunpack.c.h.b16 %v3579
    %v3939 = vunpack.c.l.b16 %v3580
    %v3940 = vunpack.c.h.b16 %v3580
    %v3941 = vunpack.c.l.b16 %v3581
    %v3942 = vunpack.c.h.b16 %v3581
    %v3943 = vunpack.c.l.b16 %v3582
    %v3944 = vunpack.c.h.b16 %v3582
    %v3945 = vunpack.c.l.b16 %v3583
    %v3946 = vunpack.c.h.b16 %v3583
    %v3947 = vunpack.c.l.b16 %v3584
    %v3948 = vunpack.c.h.b16 %v3584
    %v3949 = vunpack.c.l.b16 %v3585
    %v3950 = vunpack.c.h.b16 %v3585
    %v3951 = vunpack.c.l.b16 %v3586
    %v3952 = vunpack.c.h.b16 %v3586
    %v3953 = vunpack.c.l.b16 %v3587
    %v3954 = vunpack.c.h.b16 %v3587
    %v3955 = vunpack.c.l.b16 %v3588
    %v3956 = vunpack.c.h.b16 %v3588
    %v3957 = vunpack.c.l.b16 %v3589
    %v3958 = vunpack.c.h.b16 %v3589
    %v3959 = vunpack.c.l.b16 %v3590
    %v3960 = vunpack.c.h.b16 %v3590
    %v3961 = vunpack.c.l.b16 %v3591
    %v3962 = vunpack.c.h.b16 %v3591
    %v3963 = vunpack.c.l.b16 %v3592
    %v3964 = vunpack.c.h.b16 %v3592
    %v3965 = vunpack.c.l.b16 %v3593
    %v3966 = vunpack.c.h.b16 %v3593
    %v3967 = vunpack.c.l.b16 %v3594
    %v3968 = vunpack.c.h.b16 %v3594
    %v3969 = vunpack.c.l.b16 %v3595
    %v3970 = vunpack.c.h.b16 %v3595
    %v3971 = vunpack.c.l.b16 %v3596
    %v3972 = vunpack.c.h.b16 %v3596
    %v3973 = vunpack.c.l.b16 %v3597
    %v3974 = vunpack.c.h.b16 %v3597
    %v3975 = vunpack.c.l.b16 %v3598
    %v3976 = vunpack.c.h.b16 %v3598
    %v3977 = vunpack.c.l.b16 %v3599
    %v3978 = vunpack.c.h.b16 %v3599
    %v3979 = vunpack.c.l.b16 %v3600
    %v3980 = vunpack.c.h.b16 %v3600
    %v3981 = vunpack.c.l.b16 %v3601
    %v3982 = vunpack.c.h.b16 %v3601
    %v3983 = vunpack.c.l.b16 %v3602
    %v3984 = vunpack.c.h.b16 %v3602
    %v3985 = vunpack.c.l.b16 %v3603
    %v3986 = vunpack.c.h.b16 %v3603
    %v3987 = vunpack.c.l.b16 %v3604
    %v3988 = vunpack.c.h.b16 %v3604
    %v3989 = vpack.c.b16 %v3865, %v3861
    %v3990 = vpack.c.b16 %v3866, %v3862
    %v3991 = vpack.c.b16 %v3867, %v3863
    %v3992 = vpack.c.b16 %v3868, %v3864
    %v3993 = vpack.c.b16 %v3873, %v3869
    %v3994 = vpack.c.b16 %v3874, %v3870
    %v3995 = vpack.c.b16 %v3875, %v3871
    %v3996 = vpack.c.b16 %v3876, %v3872
    %v3997 = vpack.c.b16 %v3881, %v3877
    %v3998 = vpack.c.b16 %v3882, %v3878
    %v3999 = vpack.c.b16 %v3883, %v3879
    %v4000 = vpack.c.b16 %v3884, %v3880
    %v4001 = vpack.c.b16 %v3889, %v3885
    %v4002 = vpack.c.b16 %v3890, %v3886
    %v4003 = vpack.c.b16 %v3891, %v3887
    %v4004 = vpack.c.b16 %v3892, %v3888
    %v4005 = vpack.c.b16 %v3897, %v3893
    %v4006 = vpack.c.b16 %v3898, %v3894
    %v4007 = vpack.c.b16 %v3899, %v3895
    %v4008 = vpack.c.b16 %v3900, %v3896
    %v4009 = vpack.c.b16 %v3905, %v3901
    %v4010 = vpack.c.b16 %v3906, %v3902
    %v4011 = vpack.c.b16 %v3907, %v3903
    %v4012 = vpack.c.b16 %v3908, %v3904
    %v4013 = vpack.c.b16 %v3913, %v3909
    %v4014 = vpack.c.b16 %v3914, %v3910
    %v4015 = vpack.c.b16 %v3915, %v3911
    %v4016 = vpack.c.b16 %v3916, %v3912
    %v4017 = vpack.c.b16 %v3921, %v3917
    %v4018 = vpack.c.b16 %v3922, %v3918
    %v4019 = vpack.c.b16 %v3923, %v3919
    %v4020 = vpack.c.b16 %v3924, %v3920
    %v4021 = vpack.c.b16 %v3929, %v3925
    %v4022 = vpack.c.b16 %v3930, %v3926
    %v4023 = vpack.c.b16 %v3931, %v3927
    %v4024 = vpack.c.b16 %v3932, %v3928
    %v4025 = vpack.c.b16 %v3937, %v3933
    %v4026 = vpack.c.b16 %v3938, %v3934
    %v4027 = vpack.c.b16 %v3939, %v3935
    %v4028 = vpack.c.b16 %v3940, %v3936
    %v4029 = vpack.c.b16 %v3945, %v3941
    %v4030 = vpack.c.b16 %v3946, %v3942
    %v4031 = vpack.c.b16 %v3947, %v3943
    %v4032 = vpack.c.b16 %v3948, %v3944
    %v4033 = vpack.c.b16 %v3953, %v3949
    %v4034 = vpack.c.b16 %v3954, %v3950
    %v4035 = vpack.c.b16 %v3955, %v3951
    %v4036 = vpack.c.b16 %v3956, %v3952
    %v4037 = vpack.c.b16 %v3961, %v3957
    %v4038 = vpack.c.b16 %v3962, %v3958
    %v4039 = vpack.c.b16 %v3963, %v3959
    %v4040 = vpack.c.b16 %v3964, %v3960
    %v4041 = vpack.c.b16 %v3969, %v3965
    %v4042 = vpack.c.b16 %v3970, %v3966
    %v4043 = vpack.c.b16 %v3971, %v3967
    %v4044 = vpack.c.b16 %v3972, %v3968
    %v4045 = vpack.c.b16 %v3977, %v3973
    %v4046 = vpack.c.b16 %v3978, %v3974
    %v4047 = vpack.c.b16 %v3979, %v3975
    %v4048 = vpack.c.b16 %v3980, %v3976
    %v4049 = vpack.c.b16 %v3985, %v3981
    %v4050 = vpack.c.b16 %v3986, %v3982
    %v4051 = vpack.c.b16 %v3987, %v3983
    %v4052 = vpack.c.b16 %v3988, %v3984
    %4117 = vmatprep.subr.bf16.mxu0 0
    %4118 = vmatpush1.bf16.msra.mxu0 %v3509
    %4119 = vmatprep.subr.bf16.mxu0 0
    %4120 = vmatpush1.bf16.msra.mxu0 %v3510
    %4121 = vmatprep.subr.bf16.mxu0 0
    %4122 = vmatpush1.bf16.msra.mxu0 %v3511
    %4123 = vmatprep.subr.bf16.mxu0 0
    %4124 = vmatpush1.bf16.msra.mxu0 %v3512
    %4125 = vmatprep.subr.bf16.mxu0 0
    %4126 = vmatpush1.bf16.msra.mxu0 %v3513
    %4127 = vmatprep.subr.bf16.mxu0 0
    %4128 = vmatpush1.bf16.msra.mxu0 %v3514
    %4129 = vmatprep.subr.bf16.mxu0 0
    %4130 = vmatpush1.bf16.msra.mxu0 %v3515
    %4131 = vmatprep.subr.bf16.mxu0 0
    %4132 = vmatpush1.bf16.msra.mxu0 %v3516
    %4133 = vmatprep.subr.bf16.mxu0 0
    %4134 = vmatpush1.bf16.msra.mxu0 %v3517
    %4135 = vmatprep.subr.bf16.mxu0 0
    %4136 = vmatpush1.bf16.msra.mxu0 %v3518
    %4137 = vmatprep.subr.bf16.mxu0 0
    %4138 = vmatpush1.bf16.msra.mxu0 %v3519
    %4139 = vmatprep.subr.bf16.mxu0 0
    %4140 = vmatpush1.bf16.msra.mxu0 %v3520
    %4141 = vmatprep.subr.bf16.mxu0 0
    %4142 = vmatpush1.bf16.msra.mxu0 %v3521
    %4143 = vmatprep.subr.bf16.mxu0 0
    %4144 = vmatpush1.bf16.msra.mxu0 %v3522
    %4145 = vmatprep.subr.bf16.mxu0 0
    %4146 = vmatpush1.bf16.msra.mxu0 %v3523
    %4147 = vmatprep.subr.bf16.mxu0 0
    %4148 = vmatpush1.bf16.msra.mxu0 %v3524
    %4149 = vmatprep.mubr.bf16.mxu0 %v3990
    %4150 = vmatmul.mubr.bf16.gmra.mrb[0].mxu0 %v3989
    %v4151 = vpop.f32.mrb[0].mxu0
    %v4152 = vadd.f32 %v3640, %v4151
    %v4153 = vpop.f32.mrb[0].mxu0
    %v4154 = vpop.f32.mrb[0].mxu0
    %v4155 = vadd.f32 %v3645, %v4154
    %v4156 = vpop.f32.mrb[0].mxu0
    %4157 = vmatprep.mubr.bf16.mxu0 %v3994
    %4158 = vmatmul.mubr.bf16.gmra.mrb[0].mxu0 %v3993
    %v4159 = vpop.f32.mrb[0].mxu0
    %v4160 = vadd.f32 %v3650, %v4159
    %v4161 = vpop.f32.mrb[0].mxu0
    %v4162 = vpop.f32.mrb[0].mxu0
    %v4163 = vadd.f32 %v3655, %v4162
    %v4164 = vpop.f32.mrb[0].mxu0
    %4165 = vmatprep.mubr.bf16.mxu0 %v3998
    %4166 = vmatmul.mubr.bf16.gmra.mrb[0].mxu0 %v3997
    %v4167 = vpop.f32.mrb[0].mxu0
    %v4168 = vadd.f32 %v3660, %v4167
    %v4169 = vpop.f32.mrb[0].mxu0
    %v4170 = vpop.f32.mrb[0].mxu0
    %v4171 = vadd.f32 %v3665, %v4170
    %v4172 = vpop.f32.mrb[0].mxu0
    %4173 = vmatprep.mubr.bf16.mxu0 %v4002
    %4174 = vmatmul.mubr.bf16.gmra.mrb[0].mxu0 %v4001
    %v4175 = vpop.f32.mrb[0].mxu0
    %v4176 = vadd.f32 %v3670, %v4175
    %v4177 = vpop.f32.mrb[0].mxu0
    %v4178 = vpop.f32.mrb[0].mxu0
    %v4179 = vadd.f32 %v3675, %v4178
    %v4180 = vpop.f32.mrb[0].mxu0
    %4181 = vmatprep.mubr.bf16.mxu0 %v4006
    %4182 = vmatmul.mubr.bf16.gmra.mrb[0].mxu0 %v4005
    %v4183 = vpop.f32.mrb[0].mxu0
    %v4184 = vadd.f32 %v3680, %v4183
    %v4185 = vpop.f32.mrb[0].mxu0
    %v4186 = vpop.f32.mrb[0].mxu0
    %v4187 = vadd.f32 %v3685, %v4186
    %v4188 = vpop.f32.mrb[0].mxu0
    %4189 = vmatprep.mubr.bf16.mxu0 %v4010
    %4190 = vmatmul.mubr.bf16.gmra.mrb[0].mxu0 %v4009
    %v4191 = vpop.f32.mrb[0].mxu0
    %v4192 = vadd.f32 %v3690, %v4191
    %v4193 = vpop.f32.mrb[0].mxu0
    %v4194 = vpop.f32.mrb[0].mxu0
    %v4195 = vadd.f32 %v3695, %v4194
    %v4196 = vpop.f32.mrb[0].mxu0
    %4197 = vmatprep.mubr.bf16.mxu0 %v4014
    %4198 = vmatmul.mubr.bf16.gmra.mrb[0].mxu0 %v4013
    %v4199 = vpop.f32.mrb[0].mxu0
    %v4200 = vadd.f32 %v3700, %v4199
    %v4201 = vpop.f32.mrb[0].mxu0
    %v4202 = vpop.f32.mrb[0].mxu0
    %v4203 = vadd.f32 %v3705, %v4202
    %v4204 = vpop.f32.mrb[0].mxu0
    %4205 = vmatprep.mubr.bf16.mxu0 %v4018
    %4206 = vmatmul.mubr.bf16.gmra.mrb[0].mxu0 %v4017
    %v4207 = vpop.f32.mrb[0].mxu0
    %v4208 = vadd.f32 %v3710, %v4207
    %v4209 = vpop.f32.mrb[0].mxu0
    %v4210 = vpop.f32.mrb[0].mxu0
    %v4211 = vadd.f32 %v3715, %v4210
    %v4212 = vpop.f32.mrb[0].mxu0
    %4213 = vmatprep.mubr.bf16.mxu0 %v4022
    %4214 = vmatmul.mubr.bf16.gmra.mrb[0].mxu0 %v4021
    %v4215 = vpop.f32.mrb[0].mxu0
    %v4216 = vadd.f32 %v3720, %v4215
    %v4217 = vpop.f32.mrb[0].mxu0
    %v4218 = vpop.f32.mrb[0].mxu0
    %v4219 = vadd.f32 %v3725, %v4218
    %v4220 = vpop.f32.mrb[0].mxu0
    %4221 = vmatprep.mubr.bf16.mxu0 %v4026
    %4222 = vmatmul.mubr.bf16.gmra.mrb[0].mxu0 %v4025
    %v4223 = vpop.f32.mrb[0].mxu0
    %v4224 = vadd.f32 %v3730, %v4223
    %v4225 = vpop.f32.mrb[0].mxu0
    %v4226 = vpop.f32.mrb[0].mxu0
    %v4227 = vadd.f32 %v3735, %v4226
    %v4228 = vpop.f32.mrb[0].mxu0
    %4229 = vmatprep.mubr.bf16.mxu0 %v4030
    %4230 = vmatmul.mubr.bf16.gmra.mrb[0].mxu0 %v4029
    %v4231 = vpop.f32.mrb[0].mxu0
    %v4232 = vadd.f32 %v3740, %v4231
    %v4233 = vpop.f32.mrb[0].mxu0
    %v4234 = vpop.f32.mrb[0].mxu0
    %v4235 = vadd.f32 %v3745, %v4234
    %v4236 = vpop.f32.mrb[0].mxu0
    %4237 = vmatprep.mubr.bf16.mxu0 %v4034
    %4238 = vmatmul.mubr.bf16.gmra.mrb[0].mxu0 %v4033
    %v4239 = vpop.f32.mrb[0].mxu0
    %v4240 = vadd.f32 %v3750, %v4239
    %v4241 = vpop.f32.mrb[0].mxu0
    %v4242 = vpop.f32.mrb[0].mxu0
    %v4243 = vadd.f32 %v3755, %v4242
    %v4244 = vpop.f32.mrb[0].mxu0
    %4245 = vmatprep.mubr.bf16.mxu0 %v4038
    %4246 = vmatmul.mubr.bf16.gmra.mrb[0].mxu0 %v4037
    %v4247 = vpop.f32.mrb[0].mxu0
    %v4248 = vadd.f32 %v3760, %v4247
    %v4249 = vpop.f32.mrb[0].mxu0
    %v4250 = vpop.f32.mrb[0].mxu0
    %v4251 = vadd.f32 %v3765, %v4250
    %v4252 = vpop.f32.mrb[0].mxu0
    %4253 = vmatprep.mubr.bf16.mxu0 %v4042
    %4254 = vmatmul.mubr.bf16.gmra.mrb[0].mxu0 %v4041
    %v4255 = vpop.f32.mrb[0].mxu0
    %v4256 = vadd.f32 %v3770, %v4255
    %v4257 = vpop.f32.mrb[0].mxu0
    %v4258 = vpop.f32.mrb[0].mxu0
    %v4259 = vadd.f32 %v3775, %v4258
    %v4260 = vpop.f32.mrb[0].mxu0
    %4261 = vmatprep.mubr.bf16.mxu0 %v4046
    %4262 = vmatmul.mubr.bf16.gmra.mrb[0].mxu0 %v4045
    %v4263 = vpop.f32.mrb[0].mxu0
    %v4264 = vadd.f32 %v3780, %v4263
    %v4265 = vpop.f32.mrb[0].mxu0
    %v4266 = vpop.f32.mrb[0].mxu0
    %v4267 = vadd.f32 %v3785, %v4266
    %v4268 = vpop.f32.mrb[0].mxu0
    %4269 = vmatprep.mubr.bf16.mxu0 %v4050
    %4270 = vmatmul.mubr.bf16.gmra.mrb[0].mxu0 %v4049
    %v4271 = vpop.f32.mrb[0].mxu0
    %v4272 = vadd.f32 %v3790, %v4271
    %v4273 = vpop.f32.mrb[0].mxu0
    %v4274 = vpop.f32.mrb[0].mxu0
    %v4275 = vadd.f32 %v3795, %v4274
    %v4276 = vpop.f32.mrb[0].mxu0
    %4277 = vdwg.mxu0
    %4278 = vmatprep.subr.bf16.mxu0 0
    %4279 = vmatpush1.bf16.msra.mxu0 %v3525
    %4280 = vmatprep.subr.bf16.mxu0 0
    %4281 = vmatpush1.bf16.msra.mxu0 %v3526
    %4282 = vmatprep.subr.bf16.mxu0 0
    %4283 = vmatpush1.bf16.msra.mxu0 %v3527
    %4284 = vmatprep.subr.bf16.mxu0 0
    %4285 = vmatpush1.bf16.msra.mxu0 %v3528
    %4286 = vmatprep.subr.bf16.mxu0 0
    %4287 = vmatpush1.bf16.msra.mxu0 %v3529
    %4288 = vmatprep.subr.bf16.mxu0 0
    %4289 = vmatpush1.bf16.msra.mxu0 %v3530
    %4290 = vmatprep.subr.bf16.mxu0 0
    %4291 = vmatpush1.bf16.msra.mxu0 %v3531
    %4292 = vmatprep.subr.bf16.mxu0 0
    %4293 = vmatpush1.bf16.msra.mxu0 %v3532
    %4294 = vmatprep.subr.bf16.mxu0 0
    %4295 = vmatpush1.bf16.msra.mxu0 %v3533
    %4296 = vmatprep.subr.bf16.mxu0 0
    %4297 = vmatpush1.bf16.msra.mxu0 %v3534
    %4298 = vmatprep.subr.bf16.mxu0 0
    %4299 = vmatpush1.bf16.msra.mxu0 %v3535
    %4300 = vmatprep.subr.bf16.mxu0 0
    %4301 = vmatpush1.bf16.msra.mxu0 %v3536
    %4302 = vmatprep.subr.bf16.mxu0 0
    %4303 = vmatpush1.bf16.msra.mxu0 %v3537
    %4304 = vmatprep.subr.bf16.mxu0 0
    %4305 = vmatpush1.bf16.msra.mxu0 %v3538
    %4306 = vmatprep.subr.bf16.mxu0 0
    %4307 = vmatpush1.bf16.msra.mxu0 %v3539
    %4308 = vmatprep.subr.bf16.mxu0 0
    %4309 = vmatpush1.bf16.msra.mxu0 %v3540
    %4310 = vmatprep.mubr.bf16.mxu0 %v3992
    %4311 = vmatmul.mubr.bf16.gmra.mrb[0].mxu0 %v3991
    %v4312 = vpop.f32.mrb[0].mxu0
    %v4313 = vadd.f32 %v4152, %v4312
    %v4314 = vpop.f32.mrb[0].mxu0
    %v4315 = vpop.f32.mrb[0].mxu0
    %v4316 = vadd.f32 %v4155, %v4315
    %v4317 = vpop.f32.mrb[0].mxu0
    %4318 = vmatprep.mubr.bf16.mxu0 %v3996
    %4319 = vmatmul.mubr.bf16.gmra.mrb[0].mxu0 %v3995
    %v4320 = vpop.f32.mrb[0].mxu0
    %v4321 = vadd.f32 %v4160, %v4320
    %v4322 = vpop.f32.mrb[0].mxu0
    %v4323 = vpop.f32.mrb[0].mxu0
    %v4324 = vadd.f32 %v4163, %v4323
    %v4325 = vpop.f32.mrb[0].mxu0
    %4326 = vmatprep.mubr.bf16.mxu0 %v4000
    %4327 = vmatmul.mubr.bf16.gmra.mrb[0].mxu0 %v3999
    %v4328 = vpop.f32.mrb[0].mxu0
    %v4329 = vadd.f32 %v4168, %v4328
    %v4330 = vpop.f32.mrb[0].mxu0
    %v4331 = vpop.f32.mrb[0].mxu0
    %v4332 = vadd.f32 %v4171, %v4331
    %v4333 = vpop.f32.mrb[0].mxu0
    %4334 = vmatprep.mubr.bf16.mxu0 %v4004
    %4335 = vmatmul.mubr.bf16.gmra.mrb[0].mxu0 %v4003
    %v4336 = vpop.f32.mrb[0].mxu0
    %v4337 = vadd.f32 %v4176, %v4336
    %v4338 = vpop.f32.mrb[0].mxu0
    %v4339 = vpop.f32.mrb[0].mxu0
    %v4340 = vadd.f32 %v4179, %v4339
    %v4341 = vpop.f32.mrb[0].mxu0
    %4342 = vmatprep.mubr.bf16.mxu0 %v4008
    %4343 = vmatmul.mubr.bf16.gmra.mrb[0].mxu0 %v4007
    %v4344 = vpop.f32.mrb[0].mxu0
    %v4345 = vadd.f32 %v4184, %v4344
    %v4346 = vpop.f32.mrb[0].mxu0
    %v4347 = vpop.f32.mrb[0].mxu0
    %v4348 = vadd.f32 %v4187, %v4347
    %v4349 = vpop.f32.mrb[0].mxu0
    %4350 = vmatprep.mubr.bf16.mxu0 %v4012
    %4351 = vmatmul.mubr.bf16.gmra.mrb[0].mxu0 %v4011
    %v4352 = vpop.f32.mrb[0].mxu0
    %v4353 = vadd.f32 %v4192, %v4352
    %v4354 = vpop.f32.mrb[0].mxu0
    %v4355 = vpop.f32.mrb[0].mxu0
    %v4356 = vadd.f32 %v4195, %v4355
    %v4357 = vpop.f32.mrb[0].mxu0
    %4358 = vmatprep.mubr.bf16.mxu0 %v4016
    %4359 = vmatmul.mubr.bf16.gmra.mrb[0].mxu0 %v4015
    %v4360 = vpop.f32.mrb[0].mxu0
    %v4361 = vadd.f32 %v4200, %v4360
    %v4362 = vpop.f32.mrb[0].mxu0
    %v4363 = vpop.f32.mrb[0].mxu0
    %v4364 = vadd.f32 %v4203, %v4363
    %v4365 = vpop.f32.mrb[0].mxu0
    %4366 = vmatprep.mubr.bf16.mxu0 %v4020
    %4367 = vmatmul.mubr.bf16.gmra.mrb[0].mxu0 %v4019
    %v4368 = vpop.f32.mrb[0].mxu0
    %v4369 = vadd.f32 %v4208, %v4368
    %v4370 = vpop.f32.mrb[0].mxu0
    %v4371 = vpop.f32.mrb[0].mxu0
    %v4372 = vadd.f32 %v4211, %v4371
    %v4373 = vpop.f32.mrb[0].mxu0
    %4374 = vmatprep.mubr.bf16.mxu0 %v4024
    %4375 = vmatmul.mubr.bf16.gmra.mrb[0].mxu0 %v4023
    %v4376 = vpop.f32.mrb[0].mxu0
    %v4377 = vadd.f32 %v4216, %v4376
    %v4378 = vpop.f32.mrb[0].mxu0
    %v4379 = vpop.f32.mrb[0].mxu0
    %v4380 = vadd.f32 %v4219, %v4379
    %v4381 = vpop.f32.mrb[0].mxu0
    %4382 = vmatprep.mubr.bf16.mxu0 %v4028
    %4383 = vmatmul.mubr.bf16.gmra.mrb[0].mxu0 %v4027
    %v4384 = vpop.f32.mrb[0].mxu0
    %v4385 = vadd.f32 %v4224, %v4384
    %v4386 = vpop.f32.mrb[0].mxu0
    %v4387 = vpop.f32.mrb[0].mxu0
    %v4388 = vadd.f32 %v4227, %v4387
    %v4389 = vpop.f32.mrb[0].mxu0
    %4390 = vmatprep.mubr.bf16.mxu0 %v4032
    %4391 = vmatmul.mubr.bf16.gmra.mrb[0].mxu0 %v4031
    %v4392 = vpop.f32.mrb[0].mxu0
    %v4393 = vadd.f32 %v4232, %v4392
    %v4394 = vpop.f32.mrb[0].mxu0
    %v4395 = vpop.f32.mrb[0].mxu0
    %v4396 = vadd.f32 %v4235, %v4395
    %v4397 = vpop.f32.mrb[0].mxu0
    %4398 = vmatprep.mubr.bf16.mxu0 %v4036
    %4399 = vmatmul.mubr.bf16.gmra.mrb[0].mxu0 %v4035
    %v4400 = vpop.f32.mrb[0].mxu0
    %v4401 = vadd.f32 %v4240, %v4400
    %v4402 = vpop.f32.mrb[0].mxu0
    %v4403 = vpop.f32.mrb[0].mxu0
    %v4404 = vadd.f32 %v4243, %v4403
    %v4405 = vpop.f32.mrb[0].mxu0
    %4406 = vmatprep.mubr.bf16.mxu0 %v4040
    %4407 = vmatmul.mubr.bf16.gmra.mrb[0].mxu0 %v4039
    %v4408 = vpop.f32.mrb[0].mxu0
    %v4409 = vadd.f32 %v4248, %v4408
    %v4410 = vpop.f32.mrb[0].mxu0
    %v4411 = vpop.f32.mrb[0].mxu0
    %v4412 = vadd.f32 %v4251, %v4411
    %v4413 = vpop.f32.mrb[0].mxu0
    %4414 = vmatprep.mubr.bf16.mxu0 %v4044
    %4415 = vmatmul.mubr.bf16.gmra.mrb[0].mxu0 %v4043
    %v4416 = vpop.f32.mrb[0].mxu0
    %v4417 = vadd.f32 %v4256, %v4416
    %v4418 = vpop.f32.mrb[0].mxu0
    %v4419 = vpop.f32.mrb[0].mxu0
    %v4420 = vadd.f32 %v4259, %v4419
    %v4421 = vpop.f32.mrb[0].mxu0
    %4422 = vmatprep.mubr.bf16.mxu0 %v4048
    %4423 = vmatmul.mubr.bf16.gmra.mrb[0].mxu0 %v4047
    %v4424 = vpop.f32.mrb[0].mxu0
    %v4425 = vadd.f32 %v4264, %v4424
    %v4426 = vpop.f32.mrb[0].mxu0
    %v4427 = vpop.f32.mrb[0].mxu0
    %v4428 = vadd.f32 %v4267, %v4427
    %v4429 = vpop.f32.mrb[0].mxu0
    %4430 = vmatprep.mubr.bf16.mxu0 %v4052
    %4431 = vmatmul.mubr.bf16.gmra.mrb[0].mxu0 %v4051
    %v4432 = vpop.f32.mrb[0].mxu0
    %v4433 = vadd.f32 %v4272, %v4432
    %v4434 = vpop.f32.mrb[0].mxu0
    %v4435 = vpop.f32.mrb[0].mxu0
    %v4436 = vadd.f32 %v4275, %v4435
    %v4437 = vpop.f32.mrb[0].mxu0
    %4438 = vdwg.mxu0
    %v4439 = vmax.f32 %v4313, 0.0
    %v4440 = vmax.f32 %v4316, 0.0
    %v4441 = vmax.f32 %v4321, 0.0
    %v4442 = vmax.f32 %v4324, 0.0
    %v4443 = vmax.f32 %v4329, 0.0
    %v4444 = vmax.f32 %v4332, 0.0
    %v4445 = vmax.f32 %v4337, 0.0
    %v4446 = vmax.f32 %v4340, 0.0
    %v4447 = vmax.f32 %v4345, 0.0
    %v4448 = vmax.f32 %v4348, 0.0
    %v4449 = vmax.f32 %v4353, 0.0
    %v4450 = vmax.f32 %v4356, 0.0
    %v4451 = vmax.f32 %v4361, 0.0
    %v4452 = vmax.f32 %v4364, 0.0
    %v4453 = vmax.f32 %v4369, 0.0
    %v4454 = vmax.f32 %v4372, 0.0
    %v4455 = vmax.f32 %v4377, 0.0
    %v4456 = vmax.f32 %v4380, 0.0
    %v4457 = vmax.f32 %v4385, 0.0
    %v4458 = vmax.f32 %v4388, 0.0
    %v4459 = vmax.f32 %v4393, 0.0
    %v4460 = vmax.f32 %v4396, 0.0
    %v4461 = vmax.f32 %v4401, 0.0
    %v4462 = vmax.f32 %v4404, 0.0
    %v4463 = vmax.f32 %v4409, 0.0
    %v4464 = vmax.f32 %v4412, 0.0
    %v4465 = vmax.f32 %v4417, 0.0
    %v4466 = vmax.f32 %v4420, 0.0
    %v4467 = vmax.f32 %v4425, 0.0
    %v4468 = vmax.f32 %v4428, 0.0
    %v4469 = vmax.f32 %v4433, 0.0
    %v4470 = vmax.f32 %v4436, 0.0
    %v4471 = vpack.c.bf16 %v4440, %v4439
    %v4472 = vpack.c.bf16 %v4442, %v4441
    %v4473 = vpack.c.bf16 %v4444, %v4443
    %v4474 = vpack.c.bf16 %v4446, %v4445
    %v4475 = vpack.c.bf16 %v4448, %v4447
    %v4476 = vpack.c.bf16 %v4450, %v4449
    %v4477 = vpack.c.bf16 %v4452, %v4451
    %v4478 = vpack.c.bf16 %v4454, %v4453
    %v4479 = vpack.c.bf16 %v4456, %v4455
    %v4480 = vpack.c.bf16 %v4458, %v4457
    %v4481 = vpack.c.bf16 %v4460, %v4459
    %v4482 = vpack.c.bf16 %v4462, %v4461
    %v4483 = vpack.c.bf16 %v4464, %v4463
    %v4484 = vpack.c.bf16 %v4466, %v4465
    %v4485 = vpack.c.bf16 %v4468, %v4467
    %v4486 = vpack.c.bf16 %v4470, %v4469
    %v4487 = vld [vmem:[%s5] sm:$0xff]
    %v4488 = vld [vmem:[%s5 + $0x8] sm:$0xff]
    %v4489 = vld [vmem:[%s5 + $0x10] sm:$0xff]
    %v4490 = vld [vmem:[%s5 + $0x18] sm:$0xff]
    %v4491 = vld [vmem:[%s5 + $0x20] sm:$0xff]
    %v4492 = vld [vmem:[%s5 + $0x28] sm:$0xff]
    %v4493 = vld [vmem:[%s5 + $0x30] sm:$0xff]
    %v4494 = vld [vmem:[%s5 + $0x38] sm:$0xff]
    %v4495 = vld [vmem:[%s5 + $0x40] sm:$0xff]
    %v4496 = vld [vmem:[%s5 + $0x48] sm:$0xff]
    %v4497 = vld [vmem:[%s5 + $0x50] sm:$0xff]
    %v4498 = vld [vmem:[%s5 + $0x58] sm:$0xff]
    %v4499 = vld [vmem:[%s5 + $0x60] sm:$0xff]
    %v4500 = vld [vmem:[%s5 + $0x68] sm:$0xff]
    %v4501 = vld [vmem:[%s5 + $0x70] sm:$0xff]
    %v4502 = vld [vmem:[%s5 + $0x78] sm:$0xff]
    %v4503 = vld [vmem:[%s6] sm:$0xff]
    %v4504 = vld [vmem:[%s6 + $0x8] sm:$0xff]
    %v4505 = vld [vmem:[%s6 + $0x10] sm:$0xff]
    %v4506 = vld [vmem:[%s6 + $0x18] sm:$0xff]
    %v4507 = vld [vmem:[%s6 + $0x20] sm:$0xff]
    %v4508 = vld [vmem:[%s6 + $0x28] sm:$0xff]
    %v4509 = vld [vmem:[%s6 + $0x30] sm:$0xff]
    %v4510 = vld [vmem:[%s6 + $0x38] sm:$0xff]
    %v4511 = vld [vmem:[%s6 + $0x40] sm:$0xff]
    %v4512 = vld [vmem:[%s6 + $0x48] sm:$0xff]
    %v4513 = vld [vmem:[%s6 + $0x50] sm:$0xff]
    %v4514 = vld [vmem:[%s6 + $0x58] sm:$0xff]
    %v4515 = vld [vmem:[%s6 + $0x60] sm:$0xff]
    %v4516 = vld [vmem:[%s6 + $0x68] sm:$0xff]
    %v4517 = vld [vmem:[%s6 + $0x70] sm:$0xff]
    %v4518 = vld [vmem:[%s6 + $0x78] sm:$0xff]
    %4520 = vset.pattern.permute.xlu0 0
    %4521 = vperm.xlu0 %4520, %v4503
    %v4522 = vpop.permute.xlu0 %4521
    %4525 = vset.pattern.permute.xlu0 0
    %4526 = vperm.xlu0 %4525, %v4504
    %v4527 = vpop.permute.xlu0 %4526
    %4530 = vset.pattern.permute.xlu0 0
    %4531 = vperm.xlu0 %4530, %v4505
    %v4532 = vpop.permute.xlu0 %4531
    %4535 = vset.pattern.permute.xlu0 0
    %4536 = vperm.xlu0 %4535, %v4506
    %v4537 = vpop.permute.xlu0 %4536
    %4540 = vset.pattern.permute.xlu0 0
    %4541 = vperm.xlu0 %4540, %v4507
    %v4542 = vpop.permute.xlu0 %4541
    %4545 = vset.pattern.permute.xlu0 0
    %4546 = vperm.xlu0 %4545, %v4508
    %v4547 = vpop.permute.xlu0 %4546
    %4550 = vset.pattern.permute.xlu0 0
    %4551 = vperm.xlu0 %4550, %v4509
    %v4552 = vpop.permute.xlu0 %4551
    %4555 = vset.pattern.permute.xlu0 0
    %4556 = vperm.xlu0 %4555, %v4510
    %v4557 = vpop.permute.xlu0 %4556
    %4560 = vset.pattern.permute.xlu0 0
    %4561 = vperm.xlu0 %4560, %v4511
    %v4562 = vpop.permute.xlu0 %4561
    %4565 = vset.pattern.permute.xlu0 0
    %4566 = vperm.xlu0 %4565, %v4512
    %v4567 = vpop.permute.xlu0 %4566
    %4570 = vset.pattern.permute.xlu0 0
    %4571 = vperm.xlu0 %4570, %v4513
    %v4572 = vpop.permute.xlu0 %4571
    %4575 = vset.pattern.permute.xlu0 0
    %4576 = vperm.xlu0 %4575, %v4514
    %v4577 = vpop.permute.xlu0 %4576
    %4580 = vset.pattern.permute.xlu0 0
    %4581 = vperm.xlu0 %4580, %v4515
    %v4582 = vpop.permute.xlu0 %4581
    %4585 = vset.pattern.permute.xlu0 0
    %4586 = vperm.xlu0 %4585, %v4516
    %v4587 = vpop.permute.xlu0 %4586
    %4590 = vset.pattern.permute.xlu0 0
    %4591 = vperm.xlu0 %4590, %v4517
    %v4592 = vpop.permute.xlu0 %4591
    %4595 = vset.pattern.permute.xlu0 0
    %4596 = vperm.xlu0 %4595, %v4518
    %v4597 = vpop.permute.xlu0 %4596
    %v4615 = vunpack.c.l.b16 %v4487
    %v4616 = vunpack.c.h.b16 %v4487
    %v4617 = vunpack.c.l.b16 %v4488
    %v4618 = vunpack.c.h.b16 %v4488
    %v4619 = vunpack.c.l.b16 %v4489
    %v4620 = vunpack.c.h.b16 %v4489
    %v4621 = vunpack.c.l.b16 %v4490
    %v4622 = vunpack.c.h.b16 %v4490
    %v4623 = vunpack.c.l.b16 %v4491
    %v4624 = vunpack.c.h.b16 %v4491
    %v4625 = vunpack.c.l.b16 %v4492
    %v4626 = vunpack.c.h.b16 %v4492
    %v4627 = vunpack.c.l.b16 %v4493
    %v4628 = vunpack.c.h.b16 %v4493
    %v4629 = vunpack.c.l.b16 %v4494
    %v4630 = vunpack.c.h.b16 %v4494
    %v4631 = vunpack.c.l.b16 %v4495
    %v4632 = vunpack.c.h.b16 %v4495
    %v4633 = vunpack.c.l.b16 %v4496
    %v4634 = vunpack.c.h.b16 %v4496
    %v4635 = vunpack.c.l.b16 %v4497
    %v4636 = vunpack.c.h.b16 %v4497
    %v4637 = vunpack.c.l.b16 %v4498
    %v4638 = vunpack.c.h.b16 %v4498
    %v4639 = vunpack.c.l.b16 %v4499
    %v4640 = vunpack.c.h.b16 %v4499
    %v4641 = vunpack.c.l.b16 %v4500
    %v4642 = vunpack.c.h.b16 %v4500
    %v4643 = vunpack.c.l.b16 %v4501
    %v4644 = vunpack.c.h.b16 %v4501
    %v4645 = vunpack.c.l.b16 %v4502
    %v4646 = vunpack.c.h.b16 %v4502
    %v4647 = vpack.c.b16 %v4617, %v4615
    %v4648 = vpack.c.b16 %v4618, %v4616
    %v4649 = vpack.c.b16 %v4621, %v4619
    %v4650 = vpack.c.b16 %v4622, %v4620
    %v4651 = vpack.c.b16 %v4625, %v4623
    %v4652 = vpack.c.b16 %v4626, %v4624
    %v4653 = vpack.c.b16 %v4629, %v4627
    %v4654 = vpack.c.b16 %v4630, %v4628
    %v4655 = vpack.c.b16 %v4633, %v4631
    %v4656 = vpack.c.b16 %v4634, %v4632
    %v4657 = vpack.c.b16 %v4637, %v4635
    %v4658 = vpack.c.b16 %v4638, %v4636
    %v4659 = vpack.c.b16 %v4641, %v4639
    %v4660 = vpack.c.b16 %v4642, %v4640
    %v4661 = vpack.c.b16 %v4645, %v4643
    %v4662 = vpack.c.b16 %v4646, %v4644
    %4679 = vmatprep.subr.bf16.mxu0 0
    %4680 = vmatpush1.bf16.msra.mxu0 %v4471
    %4681 = vmatprep.subr.bf16.mxu0 0
    %4682 = vmatpush1.bf16.msra.mxu0 %v4472
    %4683 = vmatprep.subr.bf16.mxu0 0
    %4684 = vmatpush1.bf16.msra.mxu0 %v4473
    %4685 = vmatprep.subr.bf16.mxu0 0
    %4686 = vmatpush1.bf16.msra.mxu0 %v4474
    %4687 = vmatprep.subr.bf16.mxu0 0
    %4688 = vmatpush1.bf16.msra.mxu0 %v4475
    %4689 = vmatprep.subr.bf16.mxu0 0
    %4690 = vmatpush1.bf16.msra.mxu0 %v4476
    %4691 = vmatprep.subr.bf16.mxu0 0
    %4692 = vmatpush1.bf16.msra.mxu0 %v4477
    %4693 = vmatprep.subr.bf16.mxu0 0
    %4694 = vmatpush1.bf16.msra.mxu0 %v4478
    %4695 = vmatprep.subr.bf16.mxu0 0
    %4696 = vmatpush1.bf16.msra.mxu0 %v4479
    %4697 = vmatprep.subr.bf16.mxu0 0
    %4698 = vmatpush1.bf16.msra.mxu0 %v4480
    %4699 = vmatprep.subr.bf16.mxu0 0
    %4700 = vmatpush1.bf16.msra.mxu0 %v4481
    %4701 = vmatprep.subr.bf16.mxu0 0
    %4702 = vmatpush1.bf16.msra.mxu0 %v4482
    %4703 = vmatprep.subr.bf16.mxu0 0
    %4704 = vmatpush1.bf16.msra.mxu0 %v4483
    %4705 = vmatprep.subr.bf16.mxu0 0
    %4706 = vmatpush1.bf16.msra.mxu0 %v4484
    %4707 = vmatprep.subr.bf16.mxu0 0
    %4708 = vmatpush1.bf16.msra.mxu0 %v4485
    %4709 = vmatprep.subr.bf16.mxu0 0
    %4710 = vmatpush1.bf16.msra.mxu0 %v4486
    %4711 = vmatprep.mubr.bf16.mxu0 %v4648
    %4712 = vmatmul.mubr.bf16.gmra.mrb[0].mxu0 %v4647
    %v4713 = vpop.f32.mrb[0].mxu0
    %v4714 = vadd.f32 %v4522, %v4713
    %v4715 = vpop.f32.mrb[0].mxu0
    %v4716 = vpop.f32.mrb[0].mxu0
    %v4717 = vadd.f32 %v4527, %v4716
    %v4718 = vpop.f32.mrb[0].mxu0
    %4719 = vmatprep.mubr.bf16.mxu0 %v4650
    %4720 = vmatmul.mubr.bf16.gmra.mrb[0].mxu0 %v4649
    %v4721 = vpop.f32.mrb[0].mxu0
    %v4722 = vadd.f32 %v4532, %v4721
    %v4723 = vpop.f32.mrb[0].mxu0
    %v4724 = vpop.f32.mrb[0].mxu0
    %v4725 = vadd.f32 %v4537, %v4724
    %v4726 = vpop.f32.mrb[0].mxu0
    %4727 = vmatprep.mubr.bf16.mxu0 %v4652
    %4728 = vmatmul.mubr.bf16.gmra.mrb[0].mxu0 %v4651
    %v4729 = vpop.f32.mrb[0].mxu0
    %v4730 = vadd.f32 %v4542, %v4729
    %v4731 = vpop.f32.mrb[0].mxu0
    %v4732 = vpop.f32.mrb[0].mxu0
    %v4733 = vadd.f32 %v4547, %v4732
    %v4734 = vpop.f32.mrb[0].mxu0
    %4735 = vmatprep.mubr.bf16.mxu0 %v4654
    %4736 = vmatmul.mubr.bf16.gmra.mrb[0].mxu0 %v4653
    %v4737 = vpop.f32.mrb[0].mxu0
    %v4738 = vadd.f32 %v4552, %v4737
    %v4739 = vpop.f32.mrb[0].mxu0
    %v4740 = vpop.f32.mrb[0].mxu0
    %v4741 = vadd.f32 %v4557, %v4740
    %v4742 = vpop.f32.mrb[0].mxu0
    %4743 = vmatprep.mubr.bf16.mxu0 %v4656
    %4744 = vmatmul.mubr.bf16.gmra.mrb[0].mxu0 %v4655
    %v4745 = vpop.f32.mrb[0].mxu0
    %v4746 = vadd.f32 %v4562, %v4745
    %v4747 = vpop.f32.mrb[0].mxu0
    %v4748 = vpop.f32.mrb[0].mxu0
    %v4749 = vadd.f32 %v4567, %v4748
    %v4750 = vpop.f32.mrb[0].mxu0
    %4751 = vmatprep.mubr.bf16.mxu0 %v4658
    %4752 = vmatmul.mubr.bf16.gmra.mrb[0].mxu0 %v4657
    %v4753 = vpop.f32.mrb[0].mxu0
    %v4754 = vadd.f32 %v4572, %v4753
    %v4755 = vpop.f32.mrb[0].mxu0
    %v4756 = vpop.f32.mrb[0].mxu0
    %v4757 = vadd.f32 %v4577, %v4756
    %v4758 = vpop.f32.mrb[0].mxu0
    %4759 = vmatprep.mubr.bf16.mxu0 %v4660
    %4760 = vmatmul.mubr.bf16.gmra.mrb[0].mxu0 %v4659
    %v4761 = vpop.f32.mrb[0].mxu0
    %v4762 = vadd.f32 %v4582, %v4761
    %v4763 = vpop.f32.mrb[0].mxu0
    %v4764 = vpop.f32.mrb[0].mxu0
    %v4765 = vadd.f32 %v4587, %v4764
    %v4766 = vpop.f32.mrb[0].mxu0
    %4767 = vmatprep.mubr.bf16.mxu0 %v4662
    %4768 = vmatmul.mubr.bf16.gmra.mrb[0].mxu0 %v4661
    %v4769 = vpop.f32.mrb[0].mxu0
    %v4770 = vadd.f32 %v4592, %v4769
    %v4771 = vpop.f32.mrb[0].mxu0
    %v4772 = vpop.f32.mrb[0].mxu0
    %v4773 = vadd.f32 %v4597, %v4772
    %v4774 = vpop.f32.mrb[0].mxu0
    %4775 = vdwg.mxu0
    %v4776 = vmax.f32 %v4714, 0.0
    %v4777 = vmax.f32 %v4717, 0.0
    %v4778 = vmax.f32 %v4722, 0.0
    %v4779 = vmax.f32 %v4725, 0.0
    %v4780 = vmax.f32 %v4730, 0.0
    %v4781 = vmax.f32 %v4733, 0.0
    %v4782 = vmax.f32 %v4738, 0.0
    %v4783 = vmax.f32 %v4741, 0.0
    %v4784 = vmax.f32 %v4746, 0.0
    %v4785 = vmax.f32 %v4749, 0.0
    %v4786 = vmax.f32 %v4754, 0.0
    %v4787 = vmax.f32 %v4757, 0.0
    %v4788 = vmax.f32 %v4762, 0.0
    %v4789 = vmax.f32 %v4765, 0.0
    %v4790 = vmax.f32 %v4770, 0.0
    %v4791 = vmax.f32 %v4773, 0.0
    %v4792 = vpack.c.bf16 %v4777, %v4776
    %v4793 = vpack.c.bf16 %v4779, %v4778
    %v4794 = vpack.c.bf16 %v4781, %v4780
    %v4795 = vpack.c.bf16 %v4783, %v4782
    %v4796 = vpack.c.bf16 %v4785, %v4784
    %v4797 = vpack.c.bf16 %v4787, %v4786
    %v4798 = vpack.c.bf16 %v4789, %v4788
    %v4799 = vpack.c.bf16 %v4791, %v4790
    %v4800 = vld [vmem:[%s7] sm:$0xf]
    %4801 = vmatprep.subr.bf16.mxu0 0
    %4802 = vmatpush1.bf16.msra.mxu0 %v4792
    %4803 = vmatprep.subr.bf16.mxu0 0
    %4804 = vmatpush1.bf16.msra.mxu0 %v4793
    %4805 = vmatprep.subr.bf16.mxu0 0
    %4806 = vmatpush1.bf16.msra.mxu0 %v4794
    %4807 = vmatprep.subr.bf16.mxu0 0
    %4808 = vmatpush1.bf16.msra.mxu0 %v4795
    %4809 = vmatprep.subr.bf16.mxu0 0
    %4810 = vmatpush1.bf16.msra.mxu0 %v4796
    %4811 = vmatprep.subr.bf16.mxu0 0
    %4812 = vmatpush1.bf16.msra.mxu0 %v4797
    %4813 = vmatprep.subr.bf16.mxu0 0
    %4814 = vmatpush1.bf16.msra.mxu0 %v4798
    %4815 = vmatprep.subr.bf16.mxu0 0
    %4816 = vmatpush1.bf16.msra.mxu0 %v4799
    %4817 = vmatprep.subr.bf16.mxu0 0
    %4818 = vmatpush1.bf16.msra.mxu0 0
    %4819 = vmatprep.subr.bf16.mxu0 0
    %4820 = vmatpush1.bf16.msra.mxu0 0
    %4821 = vmatprep.subr.bf16.mxu0 0
    %4822 = vmatpush1.bf16.msra.mxu0 0
    %4823 = vmatprep.subr.bf16.mxu0 0
    %4824 = vmatpush1.bf16.msra.mxu0 0
    %4825 = vmatprep.subr.bf16.mxu0 0
    %4826 = vmatpush1.bf16.msra.mxu0 0
    %4827 = vmatprep.subr.bf16.mxu0 0
    %4828 = vmatpush1.bf16.msra.mxu0 0
    %4829 = vmatprep.subr.bf16.mxu0 0
    %4830 = vmatpush1.bf16.msra.mxu0 0
    %4831 = vmatprep.subr.bf16.mxu0 0
    %4832 = vmatpush1.bf16.msra.mxu0 0
    %4833 = vmatprep.mubr.bf16.mxu0 0
    %4834 = vmatmul.mubr.bf16.gmra.mrb[0].mxu0 %v4800
    %v4835 = vpop.f32.mrb[0].mxu0
    %v4836 = vadd.f32 0.0, %v4835
    %v4837 = vpop.f32.mrb[0].mxu0
    %v4838 = vpop.f32.mrb[0].mxu0
    %v4839 = vpop.f32.mrb[0].mxu0
    %4840 = vdwg.mxu0
    %v4841 = vld [vmem:[#allocation2] sm:$0x1]
    %4843 = vset.pattern.permute.xlu0 0
    %4844 = vperm.xlu0 %4843, %v4841
    %v4845 = vpop.permute.xlu0 %4844
    %v4847 = vlaneseq
    %v4848 = vshrl.u32 %v4847, 7
    %v4849 = vsub.s32 0, %v4848
    %v4850 = vrot.slane %v4845, %v4849
    %v4851 = vadd.f32 %v4836, %v4850
    %v4852 = vsub.f32 0.0, %v4851
    %v4853 = vmul.f32 %v4852, 1.442695
    %v4854 = vpow.pop %v4853
    %v4855 = vadd.f32 %v4854, 1.0
    %v4856 = vrcp.pop %v4855
    %4857 = vst [vmem:[%s9] sm:$0x1] %v4856
    // Predicated region
    $region42: #{discriminator_forward.1} parent=1 // pred_check
      _
    $region43: #{discriminator_forward.1} parent=1 // pred_check_branch
      %4859 = sbr.rel (0) target = $region45
    $region44: #{discriminator_forward.1} parent=1 // pred_region
      _
    $region45: #{discriminator_forward.1} parent=1 // pred_fallthru
      _
    // Predicated region
    $region46: #{discriminator_forward.1} parent=1 // pred_check
      _
    $region47: #{discriminator_forward.1} parent=1 // pred_check_branch
      %4861 = sbr.rel (0) target = $region49
    $region48: #{discriminator_forward.1} parent=1 // pred_region
      _
    $region49: #{discriminator_forward.1} parent=1 // pred_fallthru
      _
    %4862 = vsyncpa [#allocation4], 1

</llo_original>
